<compile_context>
chip_gen: v7x
topology: tpu7x:2x2x1
jax: 0.10.0
libtpu: 0.0.40
codegen_flags: <defaults>
</compile_context>

<pallas_src>
import jax
import jax.numpy as jnp
from jax.experimental import pallas as pl
from jax.experimental.pallas import tpu as pltpu

INPUT_SIZE = 1000
LAYER_SIZES = [400, 800]
OUTPUT_SIZE = 500

# 128-aligned (lane-dense) padded dims
IN_P = 1024     # 1000 -> 1024
H1_P = 512      # 400  -> 512
H2_P = 896      # 800  -> 896
OUT_P = 512     # 500  -> 512

TM_MAX = 256    # batch tile (kept modest so tiles fit v7x's 64 MiB VMEM)


def _round_up(n, m):
    return ((n + m - 1) // m) * m


def _pad2d(a, rows, cols):
    r, c = a.shape
    return jnp.pad(a, ((0, rows - r), (0, cols - c)))


def mlp_kernel(x_ref, w1_ref, b1_ref, w2_ref, b2_ref, w3_ref, b3_ref, o_ref):
    # layer 1: x @ W1 + b1, ReLU
    h = jnp.dot(x_ref[...], w1_ref[...], preferred_element_type=jnp.float32) + b1_ref[...]
    h = jnp.maximum(h, 0.0)
    # layer 2: h @ W2 + b2, ReLU
    h = jnp.dot(h, w2_ref[...], preferred_element_type=jnp.float32) + b2_ref[...]
    h = jnp.maximum(h, 0.0)
    # output layer: h @ W3 + b3 (no activation)
    o_ref[...] = (jnp.dot(h, w3_ref[...], preferred_element_type=jnp.float32)
                  + b3_ref[...]).astype(o_ref.dtype)


def mlp_forward(x, params):
    """x: (B, INPUT_SIZE) f32; params: list of (W, b) with W (in, out), b (1, out)."""
    (w1, b1), (w2, b2), (w3, b3) = params
    B = x.shape[0]

    # --- host-side padding to lane-dense (multiple-of-128) feature dims ---
    x_p = _pad2d(x, B, IN_P)
    w1_p, b1_p = _pad2d(w1, IN_P, H1_P), _pad2d(b1, 1, H1_P)
    w2_p, b2_p = _pad2d(w2, H1_P, H2_P), _pad2d(b2, 1, H2_P)
    w3_p, b3_p = _pad2d(w3, H2_P, OUT_P), _pad2d(b3, 1, OUT_P)

    # --- batch tiling: pad B up so it divides evenly into TM-sized tiles ---
    tm = min(TM_MAX, _round_up(B, 8))
    b_pad = _round_up(B, tm)
    if b_pad != B:
        x_p = jnp.pad(x_p, ((0, b_pad - B), (0, 0)))
    grid = (b_pad // tm,)

    def const_spec(shape):
        # weights / biases: same block at every grid step -> stay VMEM-resident
        return pl.BlockSpec(shape, lambda i: tuple(0 for _ in shape))

    out_p = pl.pallas_call(
        mlp_kernel,
        out_shape=jax.ShapeDtypeStruct((b_pad, OUT_P), jnp.float32),
        grid=grid,
        in_specs=[
            pl.BlockSpec((tm, IN_P), lambda i: (i, 0)),
            const_spec(w1_p.shape), const_spec(b1_p.shape),
            const_spec(w2_p.shape), const_spec(b2_p.shape),
            const_spec(w3_p.shape), const_spec(b3_p.shape),
        ],
        out_specs=pl.BlockSpec((tm, OUT_P), lambda i: (i, 0)),
        compiler_params=pltpu.CompilerParams(
            dimension_semantics=("parallel",),
            vmem_limit_bytes=32 << 20,
        ),
    )(x_p, w1_p, b1_p, w2_p, b2_p, w3_p, b3_p)

    # slice padded batch rows and padded output columns back off
    return out_p[:B, :OUTPUT_SIZE]


def init_params(key):
    """Deterministic init mimicking nn.Linear default (uniform(-1/sqrt(in), 1/sqrt(in)))."""
    sizes = [INPUT_SIZE] + LAYER_SIZES + [OUTPUT_SIZE]
    params = []
    for fan_in, fan_out in zip(sizes[:-1], sizes[1:]):
        key, kw, kb = jax.random.split(key, 3)
        bound = 1.0 / (fan_in ** 0.5)
        w = jax.random.uniform(kw, (fan_in, fan_out), jnp.float32, -bound, bound)
        b = jax.random.uniform(kb, (1, fan_out), jnp.float32, -bound, bound)
        params.append((w, b))
    return params


def mlp_reference(x, params):
    (w1, b1), (w2, b2), (w3, b3) = params
    h = jnp.maximum(x @ w1 + b1, 0.0)
    h = jnp.maximum(h @ w2 + b2, 0.0)
    return h @ w3 + b3


if __name__ == "__main__":
    key = jax.random.PRNGKey(0)
    key, kx = jax.random.split(key)
    batch = 2
    x = jax.random.normal(kx, (batch, INPUT_SIZE), jnp.float32)

    params = init_params(key)

    out = mlp_forward(x, params)
    out = jax.block_until_ready(out)

    ref = mlp_reference(x, params)
    assert out.shape == (batch, OUTPUT_SIZE)
    assert jnp.allclose(out, ref, atol=1e-3, rtol=1e-3), "mismatch vs reference"

    print("KERNEL_OK")
</pallas_src>

<mosaic_0001>
module attributes {stable_mosaic.version = 11 : i64} {
  func.func @mlp_kernel(%arg0: i32, %arg1: memref<8x1024xf32, #tpu.memory_space<vmem>>, %arg2: memref<1024x512xf32, #tpu.memory_space<vmem>>, %arg3: memref<1x512xf32, #tpu.memory_space<vmem>>, %arg4: memref<512x896xf32, #tpu.memory_space<vmem>>, %arg5: memref<1x896xf32, #tpu.memory_space<vmem>>, %arg6: memref<896x512xf32, #tpu.memory_space<vmem>>, %arg7: memref<1x512xf32, #tpu.memory_space<vmem>>, %arg8: memref<8x512xf32, #tpu.memory_space<vmem>>) attributes {dimension_semantics = [#tpu.dimension_semantics<parallel>], iteration_bounds = array<i64: 1>, scalar_prefetch = 0 : i64, scratch_operands = 0 : i64, tpu.core_type = #tpu.core_type<tc>, window_params = [{transform_indices = @transform_0, window_bounds = array<i64: 8, 1024>}, {pipeline_mode = #tpu.pipeline_mode<synchronous>, transform_indices = @transform_1, window_bounds = array<i64: 1024, 512>}, {pipeline_mode = #tpu.pipeline_mode<synchronous>, transform_indices = @transform_2, window_bounds = array<i64: 1, 512>}, {pipeline_mode = #tpu.pipeline_mode<synchronous>, transform_indices = @transform_3, window_bounds = array<i64: 512, 896>}, {pipeline_mode = #tpu.pipeline_mode<synchronous>, transform_indices = @transform_4, window_bounds = array<i64: 1, 896>}, {pipeline_mode = #tpu.pipeline_mode<synchronous>, transform_indices = @transform_5, window_bounds = array<i64: 896, 512>}, {pipeline_mode = #tpu.pipeline_mode<synchronous>, transform_indices = @transform_6, window_bounds = array<i64: 1, 512>}, {transform_indices = @transform_7, window_bounds = array<i64: 8, 512>}]} {
    %c0 = arith.constant 0 : index
    %c0_0 = arith.constant 0 : index
    %0 = vector.load %arg1[%c0, %c0_0] : memref<8x1024xf32, #tpu.memory_space<vmem>>, vector<8x1024xf32>
    %c0_1 = arith.constant 0 : index
    %c0_2 = arith.constant 0 : index
    %1 = vector.load %arg2[%c0_1, %c0_2] : memref<1024x512xf32, #tpu.memory_space<vmem>>, vector<1024x512xf32>
    %cst = arith.constant dense<0.000000e+00> : vector<8x512xf32>
    %2 = tpu.matmul %0, %1, %cst {dimension_numbers = #tpu.dot_dimension_numbers<[1], [0], [0], [1], [0, 0, 1, 1], [], []>} : vector<8x1024xf32>, vector<1024x512xf32>, vector<8x512xf32> -> vector<8x512xf32>
    %c0_3 = arith.constant 0 : index
    %c0_4 = arith.constant 0 : index
    %3 = vector.load %arg3[%c0_3, %c0_4] : memref<1x512xf32, #tpu.memory_space<vmem>>, vector<1x512xf32>
    %4 = vector.broadcast %3 : vector<1x512xf32> to vector<8x512xf32>
    %5 = arith.addf %2, %4 : vector<8x512xf32>
    %cst_5 = arith.constant 0.000000e+00 : f32
    %6 = vector.broadcast %cst_5 : f32 to vector<8x512xf32>
    %7 = arith.maximumf %5, %6 : vector<8x512xf32>
    %c0_6 = arith.constant 0 : index
    %c0_7 = arith.constant 0 : index
    %8 = vector.load %arg4[%c0_6, %c0_7] : memref<512x896xf32, #tpu.memory_space<vmem>>, vector<512x896xf32>
    %cst_8 = arith.constant dense<0.000000e+00> : vector<8x896xf32>
    %9 = tpu.matmul %7, %8, %cst_8 {dimension_numbers = #tpu.dot_dimension_numbers<[1], [0], [0], [1], [0, 0, 1, 1], [], []>} : vector<8x512xf32>, vector<512x896xf32>, vector<8x896xf32> -> vector<8x896xf32>
    %c0_9 = arith.constant 0 : index
    %c0_10 = arith.constant 0 : index
    %10 = vector.load %arg5[%c0_9, %c0_10] : memref<1x896xf32, #tpu.memory_space<vmem>>, vector<1x896xf32>
    %11 = vector.broadcast %10 : vector<1x896xf32> to vector<8x896xf32>
    %12 = arith.addf %9, %11 : vector<8x896xf32>
    %cst_11 = arith.constant 0.000000e+00 : f32
    %13 = vector.broadcast %cst_11 : f32 to vector<8x896xf32>
    %14 = arith.maximumf %12, %13 : vector<8x896xf32>
    %c0_12 = arith.constant 0 : index
    %c0_13 = arith.constant 0 : index
    %15 = vector.load %arg6[%c0_12, %c0_13] : memref<896x512xf32, #tpu.memory_space<vmem>>, vector<896x512xf32>
    %cst_14 = arith.constant dense<0.000000e+00> : vector<8x512xf32>
    %16 = tpu.matmul %14, %15, %cst_14 {dimension_numbers = #tpu.dot_dimension_numbers<[1], [0], [0], [1], [0, 0, 1, 1], [], []>} : vector<8x896xf32>, vector<896x512xf32>, vector<8x512xf32> -> vector<8x512xf32>
    %c0_15 = arith.constant 0 : index
    %c0_16 = arith.constant 0 : index
    %17 = vector.load %arg7[%c0_15, %c0_16] : memref<1x512xf32, #tpu.memory_space<vmem>>, vector<1x512xf32>
    %18 = vector.broadcast %17 : vector<1x512xf32> to vector<8x512xf32>
    %19 = arith.addf %16, %18 : vector<8x512xf32>
    %c0_17 = arith.constant 0 : index
    %c0_18 = arith.constant 0 : index
    %20 = vector.load %arg8[%c0_17, %c0_18] : memref<8x512xf32, #tpu.memory_space<vmem>>, vector<8x512xf32>
    tpu.vector_store %arg8[%c0_17, %c0_18], %19 {strides = array<i32>} : memref<8x512xf32, #tpu.memory_space<vmem>>, vector<8x512xf32>,
    return
  }
  func.func @transform_0(%arg0: i32) -> (i32, i32) {
    %c0_i32 = arith.constant 0 : i32
    %c0_i32_0 = arith.constant 0 : i32
    return %arg0, %c0_i32 : i32, i32
  }
  func.func @transform_1(%arg0: i32) -> (i32, i32) {
    %c0_i32 = arith.constant 0 : i32
    %c0_i32_0 = arith.constant 0 : i32
    %c0_i32_1 = arith.constant 0 : i32
    return %c0_i32, %c0_i32_0 : i32, i32
  }
  func.func @transform_2(%arg0: i32) -> (i32, i32) {
    %c0_i32 = arith.constant 0 : i32
    %c0_i32_0 = arith.constant 0 : i32
    %c0_i32_1 = arith.constant 0 : i32
    return %c0_i32, %c0_i32_0 : i32, i32
  }
  func.func @transform_3(%arg0: i32) -> (i32, i32) {
    %c0_i32 = arith.constant 0 : i32
    %c0_i32_0 = arith.constant 0 : i32
    %c0_i32_1 = arith.constant 0 : i32
    return %c0_i32, %c0_i32_0 : i32, i32
  }
  func.func @transform_4(%arg0: i32) -> (i32, i32) {
    %c0_i32 = arith.constant 0 : i32
    %c0_i32_0 = arith.constant 0 : i32
    %c0_i32_1 = arith.constant 0 : i32
    return %c0_i32, %c0_i32_0 : i32, i32
  }
  func.func @transform_5(%arg0: i32) -> (i32, i32) {
    %c0_i32 = arith.constant 0 : i32
    %c0_i32_0 = arith.constant 0 : i32
    %c0_i32_1 = arith.constant 0 : i32
    return %c0_i32, %c0_i32_0 : i32, i32
  }
  func.func @transform_6(%arg0: i32) -> (i32, i32) {
    %c0_i32 = arith.constant 0 : i32
    %c0_i32_0 = arith.constant 0 : i32
    %c0_i32_1 = arith.constant 0 : i32
    return %c0_i32, %c0_i32_0 : i32, i32
  }
  func.func @transform_7(%arg0: i32) -> (i32, i32) {
    %c0_i32 = arith.constant 0 : i32
    %c0_i32_0 = arith.constant 0 : i32
    return %arg0, %c0_i32 : i32, i32
  }
}

</mosaic_0001>

<llo_original>
// kernel: tpu_custom_call.1
$region0: #{tpu_custom_call.1}
  #allocation0 [shape = 'u32[]', space=smem, size = 0x4, offset = 0x4, fixed_abs, tag = 'smem constant byte address 0x4 - core index']
  #allocation1 [shape = 'u32[144,128]{1,0:T(1,128)}', space=vmem, size = 0x12000, scoped, tag = 'internal scratch']
  %s0 = inlined_call_operand.hbm [shape: f32[8,1024], index: 0, kind: input, shape index: {}]
  %s1 = inlined_call_operand.hbm [shape: f32[1024,512], index: 1, kind: input, shape index: {}]
  %s2 = inlined_call_operand.hbm [shape: f32[1,512], index: 2, kind: input, shape index: {}]
  %s3 = inlined_call_operand.hbm [shape: f32[512,896], index: 3, kind: input, shape index: {}]
  %s4 = inlined_call_operand.hbm [shape: f32[1,896], index: 4, kind: input, shape index: {}]
  %s5 = inlined_call_operand.hbm [shape: f32[896,512], index: 5, kind: input, shape index: {}]
  %s6 = inlined_call_operand.hbm [shape: f32[1,512], index: 6, kind: input, shape index: {}]
  %s7 = inlined_call_operand.hbm [shape: f32[8,512], index: 7, kind: output, shape index: {}]
  %s8 = sld [smem:[#allocation0]]
  $region66: #{tpu_custom_call.1} parent=0
    _
  %s10 = ssub.s32 1, %s8
  %s11 = scalar_select 0, %s10, %s8
  $region1: #{tpu_custom_call.1} parent=0
    #allocation2 [shape = 'u8[32768]{0}', space=vmem, size = 0x8000, scoped, tag = 'input window, operand 0, single buffered']
    #allocation3 [shape = 's32[1]{0}', space=sflag, size = 0x4, scoped, tag = 'scoped memory for tpu_custom_call.1']
    #allocation4 [shape = 's32[1]{0}', space=sflag, size = 0x4, scoped, tag = 'scoped memory for tpu_custom_call.1']
    #allocation5 [shape = 'u8[2097152]{0}', space=vmem, size = 0x200000, scoped, tag = 'input window, operand 1, single buffered']
    #allocation6 [shape = 's32[1]{0}', space=sflag, size = 0x4, scoped, tag = 'scoped memory for tpu_custom_call.1']
    #allocation7 [shape = 'u8[2048]{0}', space=vmem, size = 0x800, scoped, tag = 'input window, operand 2, single buffered']
    #allocation8 [shape = 'u8[1835008]{0}', space=vmem, size = 0x1c0000, scoped, tag = 'input window, operand 3, single buffered']
    #allocation9 [shape = 's32[1]{0}', space=sflag, size = 0x4, scoped, tag = 'scoped memory for tpu_custom_call.1']
    #allocation10 [shape = 'u8[3584]{0}', space=vmem, size = 0x1000, scoped, tag = 'input window, operand 4, single buffered']
    #allocation11 [shape = 'u8[1835008]{0}', space=vmem, size = 0x1c0000, scoped, tag = 'input window, operand 5, single buffered']
    #allocation12 [shape = 's32[1]{0}', space=sflag, size = 0x4, scoped, tag = 'scoped memory for tpu_custom_call.1']
    #allocation13 [shape = 'u8[2048]{0}', space=vmem, size = 0x800, scoped, tag = 'input window, operand 6, single buffered']
    #allocation14 [shape = 'u8[16384]{0}', space=vmem, size = 0x4000, scoped, tag = 'output window, operand 0, single buffered']
    %12 = vsyncpa [#allocation3], 0
    %13 = vsyncpa [#allocation6], 0
    %14 = vsyncpa [#allocation9], 0
    %15 = vsyncpa [#allocation12], 0
    %16 = vsyncpa [#allocation4], 0
    // Predicated region
    $region2: #{tpu_custom_call.1} parent=1 // pred_check
      _
    $region3: #{tpu_custom_call.1} parent=1 // pred_check_branch
      %18 = sbr.rel (0) target = $region5
    $region4: #{tpu_custom_call.1} parent=1 // pred_region
      %s20 = ssub.s32 1024, 1024
      %21 = vsyncadd [#allocation3], %s20
      %s23 = sshll.u32 [#allocation2], 4
      %s24 = int_to_ptr.vmem [resolvable:$true] %s23
      %26 = dma.hbm_to_vmem [thread:$0]  %s0, 1024, %s24, [#allocation3]
    $region5: #{tpu_custom_call.1} parent=1 // pred_fallthru
      _
    // Predicated region
    $region6: #{tpu_custom_call.1} parent=1 // pred_check
      _
    $region7: #{tpu_custom_call.1} parent=1 // pred_check_branch
      %28 = sbr.rel (0) target = $region9
    $region8: #{tpu_custom_call.1} parent=1 // pred_region
      %s30 = ssub.s32 65536, 65536
      %31 = vsyncadd [#allocation6], %s30
      %s32 = sshll.u32 [#allocation5], 4
      %s33 = int_to_ptr.vmem [resolvable:$true] %s32
      %38 = dma.hbm_to_vmem [thread:$0]  %s1, 65536, %s33, [#allocation6], 512, 512, 32
    $region9: #{tpu_custom_call.1} parent=1 // pred_fallthru
      _
    // Predicated region
    $region10: #{tpu_custom_call.1} parent=1 // pred_check
      _
    $region11: #{tpu_custom_call.1} parent=1 // pred_check_branch
      %40 = sbr.rel (0) target = $region13
    $region12: #{tpu_custom_call.1} parent=1 // pred_region
      %s42 = ssub.s32 64, 64
      %43 = vsyncadd [#allocation6], %s42
      %s45 = sshll.u32 [#allocation7], 4
      %s46 = int_to_ptr.vmem [resolvable:$true] %s45
      %48 = dma.hbm_to_vmem [thread:$0]  %s2, 64, %s46, [#allocation6]
    $region13: #{tpu_custom_call.1} parent=1 // pred_fallthru
      _
    // Predicated region
    $region14: #{tpu_custom_call.1} parent=1 // pred_check
      _
    $region15: #{tpu_custom_call.1} parent=1 // pred_check_branch
      %50 = sbr.rel (0) target = $region17
    $region16: #{tpu_custom_call.1} parent=1 // pred_region
      %s52 = ssub.s32 57344, 57344
      %53 = vsyncadd [#allocation9], %s52
      %s54 = sshll.u32 [#allocation8], 4
      %s55 = int_to_ptr.vmem [resolvable:$true] %s54
      %60 = dma.hbm_to_vmem [thread:$0]  %s3, 57344, %s55, [#allocation9], 896, 896, 56
    $region17: #{tpu_custom_call.1} parent=1 // pred_fallthru
      _
    // Predicated region
    $region18: #{tpu_custom_call.1} parent=1 // pred_check
      _
    $region19: #{tpu_custom_call.1} parent=1 // pred_check_branch
      %62 = sbr.rel (0) target = $region21
    $region20: #{tpu_custom_call.1} parent=1 // pred_region
      %s64 = ssub.s32 112, 112
      %65 = vsyncadd [#allocation9], %s64
      %s67 = sshll.u32 [#allocation10], 4
      %s68 = int_to_ptr.vmem [resolvable:$true] %s67
      %70 = dma.hbm_to_vmem [thread:$0]  %s4, 112, %s68, [#allocation9]
    $region21: #{tpu_custom_call.1} parent=1 // pred_fallthru
      _
    // Predicated region
    $region22: #{tpu_custom_call.1} parent=1 // pred_check
      _
    $region23: #{tpu_custom_call.1} parent=1 // pred_check_branch
      %72 = sbr.rel (0) target = $region25
    $region24: #{tpu_custom_call.1} parent=1 // pred_region
      %s74 = ssub.s32 57344, 57344
      %75 = vsyncadd [#allocation12], %s74
      %s76 = sshll.u32 [#allocation11], 4
      %s77 = int_to_ptr.vmem [resolvable:$true] %s76
      %82 = dma.hbm_to_vmem [thread:$0]  %s5, 57344, %s77, [#allocation12], 512, 512, 32
    $region25: #{tpu_custom_call.1} parent=1 // pred_fallthru
      _
    // Predicated region
    $region26: #{tpu_custom_call.1} parent=1 // pred_check
      _
    $region27: #{tpu_custom_call.1} parent=1 // pred_check_branch
      %84 = sbr.rel (0) target = $region29
    $region28: #{tpu_custom_call.1} parent=1 // pred_region
      %s86 = ssub.s32 64, 64
      %87 = vsyncadd [#allocation12], %s86
      %s89 = sshll.u32 [#allocation13], 4
      %s90 = int_to_ptr.vmem [resolvable:$true] %s89
      %92 = dma.hbm_to_vmem [thread:$0]  %s6, 64, %s90, [#allocation12]
    $region29: #{tpu_custom_call.1} parent=1 // pred_fallthru
      _
    // Predicated region
    $region30: #{tpu_custom_call.1} parent=1 // pred_check
      _
    $region31: #{tpu_custom_call.1} parent=1 // pred_check_branch
      %94 = sbr.rel (0) target = $region33
    $region32: #{tpu_custom_call.1} parent=1 // pred_region
      %95 = dma.done [#allocation3], 1024
    $region33: #{tpu_custom_call.1} parent=1 // pred_fallthru
      _
    // Predicated region
    $region34: #{tpu_custom_call.1} parent=1 // pred_check
      _
    $region35: #{tpu_custom_call.1} parent=1 // pred_check_branch
      %97 = sbr.rel (0) target = $region37
    $region36: #{tpu_custom_call.1} parent=1 // pred_region
      %98 = dma.done [#allocation6], 65536
    $region37: #{tpu_custom_call.1} parent=1 // pred_fallthru
      _
    // Predicated region
    $region38: #{tpu_custom_call.1} parent=1 // pred_check
      _
    $region39: #{tpu_custom_call.1} parent=1 // pred_check_branch
      %100 = sbr.rel (0) target = $region41
    $region40: #{tpu_custom_call.1} parent=1 // pred_region
      %101 = dma.done [#allocation6], 64
    $region41: #{tpu_custom_call.1} parent=1 // pred_fallthru
      _
    // Predicated region
    $region42: #{tpu_custom_call.1} parent=1 // pred_check
      _
    $region43: #{tpu_custom_call.1} parent=1 // pred_check_branch
      %103 = sbr.rel (0) target = $region45
    $region44: #{tpu_custom_call.1} parent=1 // pred_region
      %104 = dma.done [#allocation9], 57344
    $region45: #{tpu_custom_call.1} parent=1 // pred_fallthru
      _
    // Predicated region
    $region46: #{tpu_custom_call.1} parent=1 // pred_check
      _
    $region47: #{tpu_custom_call.1} parent=1 // pred_check_branch
      %106 = sbr.rel (0) target = $region49
    $region48: #{tpu_custom_call.1} parent=1 // pred_region
      %107 = dma.done [#allocation9], 112
    $region49: #{tpu_custom_call.1} parent=1 // pred_fallthru
      _
    // Predicated region
    $region50: #{tpu_custom_call.1} parent=1 // pred_check
      _
    $region51: #{tpu_custom_call.1} parent=1 // pred_check_branch
      %109 = sbr.rel (0) target = $region53
    $region52: #{tpu_custom_call.1} parent=1 // pred_region
      %110 = dma.done [#allocation12], 57344
    $region53: #{tpu_custom_call.1} parent=1 // pred_fallthru
      _
    // Predicated region
    $region54: #{tpu_custom_call.1} parent=1 // pred_check
      _
    $region55: #{tpu_custom_call.1} parent=1 // pred_check_branch
      %112 = sbr.rel (0) target = $region57
    $region56: #{tpu_custom_call.1} parent=1 // pred_region
      %113 = dma.done [#allocation12], 64
    $region57: #{tpu_custom_call.1} parent=1 // pred_fallthru
      _
    %v114 = vld [vmem:[#allocation2] sm:$0xff]
    %v115 = vld [vmem:[#allocation2 + $0x8] sm:$0xff]
    %v116 = vld [vmem:[#allocation2 + $0x10] sm:$0xff]
    %v117 = vld [vmem:[#allocation2 + $0x18] sm:$0xff]
    %v118 = vld [vmem:[#allocation2 + $0x20] sm:$0xff]
    %v119 = vld [vmem:[#allocation2 + $0x28] sm:$0xff]
    %v120 = vld [vmem:[#allocation2 + $0x30] sm:$0xff]
    %v121 = vld [vmem:[#allocation2 + $0x38] sm:$0xff]
    %v122 = vld [vmem:[#allocation5] sm:$0xff]
    %v123 = vld [vmem:[#allocation5 + $0x8] sm:$0xff]
    %v124 = vld [vmem:[#allocation5 + $0x10] sm:$0xff]
    %v125 = vld [vmem:[#allocation5 + $0x18] sm:$0xff]
    %v126 = vld [vmem:[#allocation5 + $0x20] sm:$0xff]
    %v127 = vld [vmem:[#allocation5 + $0x28] sm:$0xff]
    %v128 = vld [vmem:[#allocation5 + $0x30] sm:$0xff]
    %v129 = vld [vmem:[#allocation5 + $0x38] sm:$0xff]
    %v130 = vld [vmem:[#allocation5 + $0x40] sm:$0xff]
    %v131 = vld [vmem:[#allocation5 + $0x48] sm:$0xff]
    %v132 = vld [vmem:[#allocation5 + $0x50] sm:$0xff]
    %v133 = vld [vmem:[#allocation5 + $0x58] sm:$0xff]
    %v134 = vld [vmem:[#allocation5 + $0x60] sm:$0xff]
    %v135 = vld [vmem:[#allocation5 + $0x68] sm:$0xff]
    %v136 = vld [vmem:[#allocation5 + $0x70] sm:$0xff]
    %v137 = vld [vmem:[#allocation5 + $0x78] sm:$0xff]
    %v138 = vld [vmem:[#allocation5 + $0x80] sm:$0xff]
    %v139 = vld [vmem:[#allocation5 + $0x88] sm:$0xff]
    %v140 = vld [vmem:[#allocation5 + $0x90] sm:$0xff]
    %v141 = vld [vmem:[#allocation5 + $0x98] sm:$0xff]
    %v142 = vld [vmem:[#allocation5 + $0xa0] sm:$0xff]
    %v143 = vld [vmem:[#allocation5 + $0xa8] sm:$0xff]
    %v144 = vld [vmem:[#allocation5 + $0xb0] sm:$0xff]
    %v145 = vld [vmem:[#allocation5 + $0xb8] sm:$0xff]
    %v146 = vld [vmem:[#allocation5 + $0xc0] sm:$0xff]
    %v147 = vld [vmem:[#allocation5 + $0xc8] sm:$0xff]
    %v148 = vld [vmem:[#allocation5 + $0xd0] sm:$0xff]
    %v149 = vld [vmem:[#allocation5 + $0xd8] sm:$0xff]
    %v150 = vld [vmem:[#allocation5 + $0xe0] sm:$0xff]
    %v151 = vld [vmem:[#allocation5 + $0xe8] sm:$0xff]
    %v152 = vld [vmem:[#allocation5 + $0xf0] sm:$0xff]
    %v153 = vld [vmem:[#allocation5 + $0xf8] sm:$0xff]
    %v154 = vld [vmem:[#allocation5 + $0x100] sm:$0xff]
    %v155 = vld [vmem:[#allocation5 + $0x108] sm:$0xff]
    %v156 = vld [vmem:[#allocation5 + $0x110] sm:$0xff]
    %v157 = vld [vmem:[#allocation5 + $0x118] sm:$0xff]
    %v158 = vld [vmem:[#allocation5 + $0x120] sm:$0xff]
    %v159 = vld [vmem:[#allocation5 + $0x128] sm:$0xff]
    %v160 = vld [vmem:[#allocation5 + $0x130] sm:$0xff]
    %v161 = vld [vmem:[#allocation5 + $0x138] sm:$0xff]
    %v162 = vld [vmem:[#allocation5 + $0x140] sm:$0xff]
    %v163 = vld [vmem:[#allocation5 + $0x148] sm:$0xff]
    %v164 = vld [vmem:[#allocation5 + $0x150] sm:$0xff]
    %v165 = vld [vmem:[#allocation5 + $0x158] sm:$0xff]
    %v166 = vld [vmem:[#allocation5 + $0x160] sm:$0xff]
    %v167 = vld [vmem:[#allocation5 + $0x168] sm:$0xff]
    %v168 = vld [vmem:[#allocation5 + $0x170] sm:$0xff]
    %v169 = vld [vmem:[#allocation5 + $0x178] sm:$0xff]
    %v170 = vld [vmem:[#allocation5 + $0x180] sm:$0xff]
    %v171 = vld [vmem:[#allocation5 + $0x188] sm:$0xff]
    %v172 = vld [vmem:[#allocation5 + $0x190] sm:$0xff]
    %v173 = vld [vmem:[#allocation5 + $0x198] sm:$0xff]
    %v174 = vld [vmem:[#allocation5 + $0x1a0] sm:$0xff]
    %v175 = vld [vmem:[#allocation5 + $0x1a8] sm:$0xff]
    %v176 = vld [vmem:[#allocation5 + $0x1b0] sm:$0xff]
    %v177 = vld [vmem:[#allocation5 + $0x1b8] sm:$0xff]
    %v178 = vld [vmem:[#allocation5 + $0x1c0] sm:$0xff]
    %v179 = vld [vmem:[#allocation5 + $0x1c8] sm:$0xff]
    %v180 = vld [vmem:[#allocation5 + $0x1d0] sm:$0xff]
    %v181 = vld [vmem:[#allocation5 + $0x1d8] sm:$0xff]
    %v182 = vld [vmem:[#allocation5 + $0x1e0] sm:$0xff]
    %v183 = vld [vmem:[#allocation5 + $0x1e8] sm:$0xff]
    %v184 = vld [vmem:[#allocation5 + $0x1f0] sm:$0xff]
    %v185 = vld [vmem:[#allocation5 + $0x1f8] sm:$0xff]
    %v186 = vld [vmem:[#allocation5 + $0x200] sm:$0xff]
    %v187 = vld [vmem:[#allocation5 + $0x208] sm:$0xff]
    %v188 = vld [vmem:[#allocation5 + $0x210] sm:$0xff]
    %v189 = vld [vmem:[#allocation5 + $0x218] sm:$0xff]
    %v190 = vld [vmem:[#allocation5 + $0x220] sm:$0xff]
    %v191 = vld [vmem:[#allocation5 + $0x228] sm:$0xff]
    %v192 = vld [vmem:[#allocation5 + $0x230] sm:$0xff]
    %v193 = vld [vmem:[#allocation5 + $0x238] sm:$0xff]
    %v194 = vld [vmem:[#allocation5 + $0x240] sm:$0xff]
    %v195 = vld [vmem:[#allocation5 + $0x248] sm:$0xff]
    %v196 = vld [vmem:[#allocation5 + $0x250] sm:$0xff]
    %v197 = vld [vmem:[#allocation5 + $0x258] sm:$0xff]
    %v198 = vld [vmem:[#allocation5 + $0x260] sm:$0xff]
    %v199 = vld [vmem:[#allocation5 + $0x268] sm:$0xff]
    %v200 = vld [vmem:[#allocation5 + $0x270] sm:$0xff]
    %v201 = vld [vmem:[#allocation5 + $0x278] sm:$0xff]
    %v202 = vld [vmem:[#allocation5 + $0x280] sm:$0xff]
    %v203 = vld [vmem:[#allocation5 + $0x288] sm:$0xff]
    %v204 = vld [vmem:[#allocation5 + $0x290] sm:$0xff]
    %v205 = vld [vmem:[#allocation5 + $0x298] sm:$0xff]
    %v206 = vld [vmem:[#allocation5 + $0x2a0] sm:$0xff]
    %v207 = vld [vmem:[#allocation5 + $0x2a8] sm:$0xff]
    %v208 = vld [vmem:[#allocation5 + $0x2b0] sm:$0xff]
    %v209 = vld [vmem:[#allocation5 + $0x2b8] sm:$0xff]
    %v210 = vld [vmem:[#allocation5 + $0x2c0] sm:$0xff]
    %v211 = vld [vmem:[#allocation5 + $0x2c8] sm:$0xff]
    %v212 = vld [vmem:[#allocation5 + $0x2d0] sm:$0xff]
    %v213 = vld [vmem:[#allocation5 + $0x2d8] sm:$0xff]
    %v214 = vld [vmem:[#allocation5 + $0x2e0] sm:$0xff]
    %v215 = vld [vmem:[#allocation5 + $0x2e8] sm:$0xff]
    %v216 = vld [vmem:[#allocation5 + $0x2f0] sm:$0xff]
    %v217 = vld [vmem:[#allocation5 + $0x2f8] sm:$0xff]
    %v218 = vld [vmem:[#allocation5 + $0x300] sm:$0xff]
    %v219 = vld [vmem:[#allocation5 + $0x308] sm:$0xff]
    %v220 = vld [vmem:[#allocation5 + $0x310] sm:$0xff]
    %v221 = vld [vmem:[#allocation5 + $0x318] sm:$0xff]
    %v222 = vld [vmem:[#allocation5 + $0x320] sm:$0xff]
    %v223 = vld [vmem:[#allocation5 + $0x328] sm:$0xff]
    %v224 = vld [vmem:[#allocation5 + $0x330] sm:$0xff]
    %v225 = vld [vmem:[#allocation5 + $0x338] sm:$0xff]
    %v226 = vld [vmem:[#allocation5 + $0x340] sm:$0xff]
    %v227 = vld [vmem:[#allocation5 + $0x348] sm:$0xff]
    %v228 = vld [vmem:[#allocation5 + $0x350] sm:$0xff]
    %v229 = vld [vmem:[#allocation5 + $0x358] sm:$0xff]
    %v230 = vld [vmem:[#allocation5 + $0x360] sm:$0xff]
    %v231 = vld [vmem:[#allocation5 + $0x368] sm:$0xff]
    %v232 = vld [vmem:[#allocation5 + $0x370] sm:$0xff]
    %v233 = vld [vmem:[#allocation5 + $0x378] sm:$0xff]
    %v234 = vld [vmem:[#allocation5 + $0x380] sm:$0xff]
    %v235 = vld [vmem:[#allocation5 + $0x388] sm:$0xff]
    %v236 = vld [vmem:[#allocation5 + $0x390] sm:$0xff]
    %v237 = vld [vmem:[#allocation5 + $0x398] sm:$0xff]
    %v238 = vld [vmem:[#allocation5 + $0x3a0] sm:$0xff]
    %v239 = vld [vmem:[#allocation5 + $0x3a8] sm:$0xff]
    %v240 = vld [vmem:[#allocation5 + $0x3b0] sm:$0xff]
    %v241 = vld [vmem:[#allocation5 + $0x3b8] sm:$0xff]
    %v242 = vld [vmem:[#allocation5 + $0x3c0] sm:$0xff]
    %v243 = vld [vmem:[#allocation5 + $0x3c8] sm:$0xff]
    %v244 = vld [vmem:[#allocation5 + $0x3d0] sm:$0xff]
    %v245 = vld [vmem:[#allocation5 + $0x3d8] sm:$0xff]
    %v246 = vld [vmem:[#allocation5 + $0x3e0] sm:$0xff]
    %v247 = vld [vmem:[#allocation5 + $0x3e8] sm:$0xff]
    %v248 = vld [vmem:[#allocation5 + $0x3f0] sm:$0xff]
    %v249 = vld [vmem:[#allocation5 + $0x3f8] sm:$0xff]
    %v250 = vld [vmem:[#allocation5 + $0x400] sm:$0xff]
    %v251 = vld [vmem:[#allocation5 + $0x408] sm:$0xff]
    %v252 = vld [vmem:[#allocation5 + $0x410] sm:$0xff]
    %v253 = vld [vmem:[#allocation5 + $0x418] sm:$0xff]
    %v254 = vld [vmem:[#allocation5 + $0x420] sm:$0xff]
    %v255 = vld [vmem:[#allocation5 + $0x428] sm:$0xff]
    %v256 = vld [vmem:[#allocation5 + $0x430] sm:$0xff]
    %v257 = vld [vmem:[#allocation5 + $0x438] sm:$0xff]
    %v258 = vld [vmem:[#allocation5 + $0x440] sm:$0xff]
    %v259 = vld [vmem:[#allocation5 + $0x448] sm:$0xff]
    %v260 = vld [vmem:[#allocation5 + $0x450] sm:$0xff]
    %v261 = vld [vmem:[#allocation5 + $0x458] sm:$0xff]
    %v262 = vld [vmem:[#allocation5 + $0x460] sm:$0xff]
    %v263 = vld [vmem:[#allocation5 + $0x468] sm:$0xff]
    %v264 = vld [vmem:[#allocation5 + $0x470] sm:$0xff]
    %v265 = vld [vmem:[#allocation5 + $0x478] sm:$0xff]
    %v266 = vld [vmem:[#allocation5 + $0x480] sm:$0xff]
    %v267 = vld [vmem:[#allocation5 + $0x488] sm:$0xff]
    %v268 = vld [vmem:[#allocation5 + $0x490] sm:$0xff]
    %v269 = vld [vmem:[#allocation5 + $0x498] sm:$0xff]
    %v270 = vld [vmem:[#allocation5 + $0x4a0] sm:$0xff]
    %v271 = vld [vmem:[#allocation5 + $0x4a8] sm:$0xff]
    %v272 = vld [vmem:[#allocation5 + $0x4b0] sm:$0xff]
    %v273 = vld [vmem:[#allocation5 + $0x4b8] sm:$0xff]
    %v274 = vld [vmem:[#allocation5 + $0x4c0] sm:$0xff]
    %v275 = vld [vmem:[#allocation5 + $0x4c8] sm:$0xff]
    %v276 = vld [vmem:[#allocation5 + $0x4d0] sm:$0xff]
    %v277 = vld [vmem:[#allocation5 + $0x4d8] sm:$0xff]
    %v278 = vld [vmem:[#allocation5 + $0x4e0] sm:$0xff]
    %v279 = vld [vmem:[#allocation5 + $0x4e8] sm:$0xff]
    %v280 = vld [vmem:[#allocation5 + $0x4f0] sm:$0xff]
    %v281 = vld [vmem:[#allocation5 + $0x4f8] sm:$0xff]
    %v282 = vld [vmem:[#allocation5 + $0x500] sm:$0xff]
    %v283 = vld [vmem:[#allocation5 + $0x508] sm:$0xff]
    %v284 = vld [vmem:[#allocation5 + $0x510] sm:$0xff]
    %v285 = vld [vmem:[#allocation5 + $0x518] sm:$0xff]
    %v286 = vld [vmem:[#allocation5 + $0x520] sm:$0xff]
    %v287 = vld [vmem:[#allocation5 + $0x528] sm:$0xff]
    %v288 = vld [vmem:[#allocation5 + $0x530] sm:$0xff]
    %v289 = vld [vmem:[#allocation5 + $0x538] sm:$0xff]
    %v290 = vld [vmem:[#allocation5 + $0x540] sm:$0xff]
    %v291 = vld [vmem:[#allocation5 + $0x548] sm:$0xff]
    %v292 = vld [vmem:[#allocation5 + $0x550] sm:$0xff]
    %v293 = vld [vmem:[#allocation5 + $0x558] sm:$0xff]
    %v294 = vld [vmem:[#allocation5 + $0x560] sm:$0xff]
    %v295 = vld [vmem:[#allocation5 + $0x568] sm:$0xff]
    %v296 = vld [vmem:[#allocation5 + $0x570] sm:$0xff]
    %v297 = vld [vmem:[#allocation5 + $0x578] sm:$0xff]
    %v298 = vld [vmem:[#allocation5 + $0x580] sm:$0xff]
    %v299 = vld [vmem:[#allocation5 + $0x588] sm:$0xff]
    %v300 = vld [vmem:[#allocation5 + $0x590] sm:$0xff]
    %v301 = vld [vmem:[#allocation5 + $0x598] sm:$0xff]
    %v302 = vld [vmem:[#allocation5 + $0x5a0] sm:$0xff]
    %v303 = vld [vmem:[#allocation5 + $0x5a8] sm:$0xff]
    %v304 = vld [vmem:[#allocation5 + $0x5b0] sm:$0xff]
    %v305 = vld [vmem:[#allocation5 + $0x5b8] sm:$0xff]
    %v306 = vld [vmem:[#allocation5 + $0x5c0] sm:$0xff]
    %v307 = vld [vmem:[#allocation5 + $0x5c8] sm:$0xff]
    %v308 = vld [vmem:[#allocation5 + $0x5d0] sm:$0xff]
    %v309 = vld [vmem:[#allocation5 + $0x5d8] sm:$0xff]
    %v310 = vld [vmem:[#allocation5 + $0x5e0] sm:$0xff]
    %v311 = vld [vmem:[#allocation5 + $0x5e8] sm:$0xff]
    %v312 = vld [vmem:[#allocation5 + $0x5f0] sm:$0xff]
    %v313 = vld [vmem:[#allocation5 + $0x5f8] sm:$0xff]
    %v314 = vld [vmem:[#allocation5 + $0x600] sm:$0xff]
    %v315 = vld [vmem:[#allocation5 + $0x608] sm:$0xff]
    %v316 = vld [vmem:[#allocation5 + $0x610] sm:$0xff]
    %v317 = vld [vmem:[#allocation5 + $0x618] sm:$0xff]
    %v318 = vld [vmem:[#allocation5 + $0x620] sm:$0xff]
    %v319 = vld [vmem:[#allocation5 + $0x628] sm:$0xff]
    %v320 = vld [vmem:[#allocation5 + $0x630] sm:$0xff]
    %v321 = vld [vmem:[#allocation5 + $0x638] sm:$0xff]
    %v322 = vld [vmem:[#allocation5 + $0x640] sm:$0xff]
    %v323 = vld [vmem:[#allocation5 + $0x648] sm:$0xff]
    %v324 = vld [vmem:[#allocation5 + $0x650] sm:$0xff]
    %v325 = vld [vmem:[#allocation5 + $0x658] sm:$0xff]
    %v326 = vld [vmem:[#allocation5 + $0x660] sm:$0xff]
    %v327 = vld [vmem:[#allocation5 + $0x668] sm:$0xff]
    %v328 = vld [vmem:[#allocation5 + $0x670] sm:$0xff]
    %v329 = vld [vmem:[#allocation5 + $0x678] sm:$0xff]
    %v330 = vld [vmem:[#allocation5 + $0x680] sm:$0xff]
    %v331 = vld [vmem:[#allocation5 + $0x688] sm:$0xff]
    %v332 = vld [vmem:[#allocation5 + $0x690] sm:$0xff]
    %v333 = vld [vmem:[#allocation5 + $0x698] sm:$0xff]
    %v334 = vld [vmem:[#allocation5 + $0x6a0] sm:$0xff]
    %v335 = vld [vmem:[#allocation5 + $0x6a8] sm:$0xff]
    %v336 = vld [vmem:[#allocation5 + $0x6b0] sm:$0xff]
    %v337 = vld [vmem:[#allocation5 + $0x6b8] sm:$0xff]
    %v338 = vld [vmem:[#allocation5 + $0x6c0] sm:$0xff]
    %v339 = vld [vmem:[#allocation5 + $0x6c8] sm:$0xff]
    %v340 = vld [vmem:[#allocation5 + $0x6d0] sm:$0xff]
    %v341 = vld [vmem:[#allocation5 + $0x6d8] sm:$0xff]
    %v342 = vld [vmem:[#allocation5 + $0x6e0] sm:$0xff]
    %v343 = vld [vmem:[#allocation5 + $0x6e8] sm:$0xff]
    %v344 = vld [vmem:[#allocation5 + $0x6f0] sm:$0xff]
    %v345 = vld [vmem:[#allocation5 + $0x6f8] sm:$0xff]
    %v346 = vld [vmem:[#allocation5 + $0x700] sm:$0xff]
    %v347 = vld [vmem:[#allocation5 + $0x708] sm:$0xff]
    %v348 = vld [vmem:[#allocation5 + $0x710] sm:$0xff]
    %v349 = vld [vmem:[#allocation5 + $0x718] sm:$0xff]
    %v350 = vld [vmem:[#allocation5 + $0x720] sm:$0xff]
    %v351 = vld [vmem:[#allocation5 + $0x728] sm:$0xff]
    %v352 = vld [vmem:[#allocation5 + $0x730] sm:$0xff]
    %v353 = vld [vmem:[#allocation5 + $0x738] sm:$0xff]
    %v354 = vld [vmem:[#allocation5 + $0x740] sm:$0xff]
    %v355 = vld [vmem:[#allocation5 + $0x748] sm:$0xff]
    %v356 = vld [vmem:[#allocation5 + $0x750] sm:$0xff]
    %v357 = vld [vmem:[#allocation5 + $0x758] sm:$0xff]
    %v358 = vld [vmem:[#allocation5 + $0x760] sm:$0xff]
    %v359 = vld [vmem:[#allocation5 + $0x768] sm:$0xff]
    %v360 = vld [vmem:[#allocation5 + $0x770] sm:$0xff]
    %v361 = vld [vmem:[#allocation5 + $0x778] sm:$0xff]
    %v362 = vld [vmem:[#allocation5 + $0x780] sm:$0xff]
    %v363 = vld [vmem:[#allocation5 + $0x788] sm:$0xff]
    %v364 = vld [vmem:[#allocation5 + $0x790] sm:$0xff]
    %v365 = vld [vmem:[#allocation5 + $0x798] sm:$0xff]
    %v366 = vld [vmem:[#allocation5 + $0x7a0] sm:$0xff]
    %v367 = vld [vmem:[#allocation5 + $0x7a8] sm:$0xff]
    %v368 = vld [vmem:[#allocation5 + $0x7b0] sm:$0xff]
    %v369 = vld [vmem:[#allocation5 + $0x7b8] sm:$0xff]
    %v370 = vld [vmem:[#allocation5 + $0x7c0] sm:$0xff]
    %v371 = vld [vmem:[#allocation5 + $0x7c8] sm:$0xff]
    %v372 = vld [vmem:[#allocation5 + $0x7d0] sm:$0xff]
    %v373 = vld [vmem:[#allocation5 + $0x7d8] sm:$0xff]
    %v374 = vld [vmem:[#allocation5 + $0x7e0] sm:$0xff]
    %v375 = vld [vmem:[#allocation5 + $0x7e8] sm:$0xff]
    %v376 = vld [vmem:[#allocation5 + $0x7f0] sm:$0xff]
    %v377 = vld [vmem:[#allocation5 + $0x7f8] sm:$0xff]
    %v378 = vld [vmem:[#allocation5 + $0x800] sm:$0xff]
    %v379 = vld [vmem:[#allocation5 + $0x808] sm:$0xff]
    %v380 = vld [vmem:[#allocation5 + $0x810] sm:$0xff]
    %v381 = vld [vmem:[#allocation5 + $0x818] sm:$0xff]
    %v382 = vld [vmem:[#allocation5 + $0x820] sm:$0xff]
    %v383 = vld [vmem:[#allocation5 + $0x828] sm:$0xff]
    %v384 = vld [vmem:[#allocation5 + $0x830] sm:$0xff]
    %v385 = vld [vmem:[#allocation5 + $0x838] sm:$0xff]
    %v386 = vld [vmem:[#allocation5 + $0x840] sm:$0xff]
    %v387 = vld [vmem:[#allocation5 + $0x848] sm:$0xff]
    %v388 = vld [vmem:[#allocation5 + $0x850] sm:$0xff]
    %v389 = vld [vmem:[#allocation5 + $0x858] sm:$0xff]
    %v390 = vld [vmem:[#allocation5 + $0x860] sm:$0xff]
    %v391 = vld [vmem:[#allocation5 + $0x868] sm:$0xff]
    %v392 = vld [vmem:[#allocation5 + $0x870] sm:$0xff]
    %v393 = vld [vmem:[#allocation5 + $0x878] sm:$0xff]
    %v394 = vld [vmem:[#allocation5 + $0x880] sm:$0xff]
    %v395 = vld [vmem:[#allocation5 + $0x888] sm:$0xff]
    %v396 = vld [vmem:[#allocation5 + $0x890] sm:$0xff]
    %v397 = vld [vmem:[#allocation5 + $0x898] sm:$0xff]
    %v398 = vld [vmem:[#allocation5 + $0x8a0] sm:$0xff]
    %v399 = vld [vmem:[#allocation5 + $0x8a8] sm:$0xff]
    %v400 = vld [vmem:[#allocation5 + $0x8b0] sm:$0xff]
    %v401 = vld [vmem:[#allocation5 + $0x8b8] sm:$0xff]
    %v402 = vld [vmem:[#allocation5 + $0x8c0] sm:$0xff]
    %v403 = vld [vmem:[#allocation5 + $0x8c8] sm:$0xff]
    %v404 = vld [vmem:[#allocation5 + $0x8d0] sm:$0xff]
    %v405 = vld [vmem:[#allocation5 + $0x8d8] sm:$0xff]
    %v406 = vld [vmem:[#allocation5 + $0x8e0] sm:$0xff]
    %v407 = vld [vmem:[#allocation5 + $0x8e8] sm:$0xff]
    %v408 = vld [vmem:[#allocation5 + $0x8f0] sm:$0xff]
    %v409 = vld [vmem:[#allocation5 + $0x8f8] sm:$0xff]
    %v410 = vld [vmem:[#allocation5 + $0x900] sm:$0xff]
    %v411 = vld [vmem:[#allocation5 + $0x908] sm:$0xff]
    %v412 = vld [vmem:[#allocation5 + $0x910] sm:$0xff]
    %v413 = vld [vmem:[#allocation5 + $0x918] sm:$0xff]
    %v414 = vld [vmem:[#allocation5 + $0x920] sm:$0xff]
    %v415 = vld [vmem:[#allocation5 + $0x928] sm:$0xff]
    %v416 = vld [vmem:[#allocation5 + $0x930] sm:$0xff]
    %v417 = vld [vmem:[#allocation5 + $0x938] sm:$0xff]
    %v418 = vld [vmem:[#allocation5 + $0x940] sm:$0xff]
    %v419 = vld [vmem:[#allocation5 + $0x948] sm:$0xff]
    %v420 = vld [vmem:[#allocation5 + $0x950] sm:$0xff]
    %v421 = vld [vmem:[#allocation5 + $0x958] sm:$0xff]
    %v422 = vld [vmem:[#allocation5 + $0x960] sm:$0xff]
    %v423 = vld [vmem:[#allocation5 + $0x968] sm:$0xff]
    %v424 = vld [vmem:[#allocation5 + $0x970] sm:$0xff]
    %v425 = vld [vmem:[#allocation5 + $0x978] sm:$0xff]
    %v426 = vld [vmem:[#allocation5 + $0x980] sm:$0xff]
    %v427 = vld [vmem:[#allocation5 + $0x988] sm:$0xff]
    %v428 = vld [vmem:[#allocation5 + $0x990] sm:$0xff]
    %v429 = vld [vmem:[#allocation5 + $0x998] sm:$0xff]
    %v430 = vld [vmem:[#allocation5 + $0x9a0] sm:$0xff]
    %v431 = vld [vmem:[#allocation5 + $0x9a8] sm:$0xff]
    %v432 = vld [vmem:[#allocation5 + $0x9b0] sm:$0xff]
    %v433 = vld [vmem:[#allocation5 + $0x9b8] sm:$0xff]
    %v434 = vld [vmem:[#allocation5 + $0x9c0] sm:$0xff]
    %v435 = vld [vmem:[#allocation5 + $0x9c8] sm:$0xff]
    %v436 = vld [vmem:[#allocation5 + $0x9d0] sm:$0xff]
    %v437 = vld [vmem:[#allocation5 + $0x9d8] sm:$0xff]
    %v438 = vld [vmem:[#allocation5 + $0x9e0] sm:$0xff]
    %v439 = vld [vmem:[#allocation5 + $0x9e8] sm:$0xff]
    %v440 = vld [vmem:[#allocation5 + $0x9f0] sm:$0xff]
    %v441 = vld [vmem:[#allocation5 + $0x9f8] sm:$0xff]
    %v442 = vld [vmem:[#allocation5 + $0xa00] sm:$0xff]
    %v443 = vld [vmem:[#allocation5 + $0xa08] sm:$0xff]
    %v444 = vld [vmem:[#allocation5 + $0xa10] sm:$0xff]
    %v445 = vld [vmem:[#allocation5 + $0xa18] sm:$0xff]
    %v446 = vld [vmem:[#allocation5 + $0xa20] sm:$0xff]
    %v447 = vld [vmem:[#allocation5 + $0xa28] sm:$0xff]
    %v448 = vld [vmem:[#allocation5 + $0xa30] sm:$0xff]
    %v449 = vld [vmem:[#allocation5 + $0xa38] sm:$0xff]
    %v450 = vld [vmem:[#allocation5 + $0xa40] sm:$0xff]
    %v451 = vld [vmem:[#allocation5 + $0xa48] sm:$0xff]
    %v452 = vld [vmem:[#allocation5 + $0xa50] sm:$0xff]
    %v453 = vld [vmem:[#allocation5 + $0xa58] sm:$0xff]
    %v454 = vld [vmem:[#allocation5 + $0xa60] sm:$0xff]
    %v455 = vld [vmem:[#allocation5 + $0xa68] sm:$0xff]
    %v456 = vld [vmem:[#allocation5 + $0xa70] sm:$0xff]
    %v457 = vld [vmem:[#allocation5 + $0xa78] sm:$0xff]
    %v458 = vld [vmem:[#allocation5 + $0xa80] sm:$0xff]
    %v459 = vld [vmem:[#allocation5 + $0xa88] sm:$0xff]
    %v460 = vld [vmem:[#allocation5 + $0xa90] sm:$0xff]
    %v461 = vld [vmem:[#allocation5 + $0xa98] sm:$0xff]
    %v462 = vld [vmem:[#allocation5 + $0xaa0] sm:$0xff]
    %v463 = vld [vmem:[#allocation5 + $0xaa8] sm:$0xff]
    %v464 = vld [vmem:[#allocation5 + $0xab0] sm:$0xff]
    %v465 = vld [vmem:[#allocation5 + $0xab8] sm:$0xff]
    %v466 = vld [vmem:[#allocation5 + $0xac0] sm:$0xff]
    %v467 = vld [vmem:[#allocation5 + $0xac8] sm:$0xff]
    %v468 = vld [vmem:[#allocation5 + $0xad0] sm:$0xff]
    %v469 = vld [vmem:[#allocation5 + $0xad8] sm:$0xff]
    %v470 = vld [vmem:[#allocation5 + $0xae0] sm:$0xff]
    %v471 = vld [vmem:[#allocation5 + $0xae8] sm:$0xff]
    %v472 = vld [vmem:[#allocation5 + $0xaf0] sm:$0xff]
    %v473 = vld [vmem:[#allocation5 + $0xaf8] sm:$0xff]
    %v474 = vld [vmem:[#allocation5 + $0xb00] sm:$0xff]
    %v475 = vld [vmem:[#allocation5 + $0xb08] sm:$0xff]
    %v476 = vld [vmem:[#allocation5 + $0xb10] sm:$0xff]
    %v477 = vld [vmem:[#allocation5 + $0xb18] sm:$0xff]
    %v478 = vld [vmem:[#allocation5 + $0xb20] sm:$0xff]
    %v479 = vld [vmem:[#allocation5 + $0xb28] sm:$0xff]
    %v480 = vld [vmem:[#allocation5 + $0xb30] sm:$0xff]
    %v481 = vld [vmem:[#allocation5 + $0xb38] sm:$0xff]
    %v482 = vld [vmem:[#allocation5 + $0xb40] sm:$0xff]
    %v483 = vld [vmem:[#allocation5 + $0xb48] sm:$0xff]
    %v484 = vld [vmem:[#allocation5 + $0xb50] sm:$0xff]
    %v485 = vld [vmem:[#allocation5 + $0xb58] sm:$0xff]
    %v486 = vld [vmem:[#allocation5 + $0xb60] sm:$0xff]
    %v487 = vld [vmem:[#allocation5 + $0xb68] sm:$0xff]
    %v488 = vld [vmem:[#allocation5 + $0xb70] sm:$0xff]
    %v489 = vld [vmem:[#allocation5 + $0xb78] sm:$0xff]
    %v490 = vld [vmem:[#allocation5 + $0xb80] sm:$0xff]
    %v491 = vld [vmem:[#allocation5 + $0xb88] sm:$0xff]
    %v492 = vld [vmem:[#allocation5 + $0xb90] sm:$0xff]
    %v493 = vld [vmem:[#allocation5 + $0xb98] sm:$0xff]
    %v494 = vld [vmem:[#allocation5 + $0xba0] sm:$0xff]
    %v495 = vld [vmem:[#allocation5 + $0xba8] sm:$0xff]
    %v496 = vld [vmem:[#allocation5 + $0xbb0] sm:$0xff]
    %v497 = vld [vmem:[#allocation5 + $0xbb8] sm:$0xff]
    %v498 = vld [vmem:[#allocation5 + $0xbc0] sm:$0xff]
    %v499 = vld [vmem:[#allocation5 + $0xbc8] sm:$0xff]
    %v500 = vld [vmem:[#allocation5 + $0xbd0] sm:$0xff]
    %v501 = vld [vmem:[#allocation5 + $0xbd8] sm:$0xff]
    %v502 = vld [vmem:[#allocation5 + $0xbe0] sm:$0xff]
    %v503 = vld [vmem:[#allocation5 + $0xbe8] sm:$0xff]
    %v504 = vld [vmem:[#allocation5 + $0xbf0] sm:$0xff]
    %v505 = vld [vmem:[#allocation5 + $0xbf8] sm:$0xff]
    %v506 = vld [vmem:[#allocation5 + $0xc00] sm:$0xff]
    %v507 = vld [vmem:[#allocation5 + $0xc08] sm:$0xff]
    %v508 = vld [vmem:[#allocation5 + $0xc10] sm:$0xff]
    %v509 = vld [vmem:[#allocation5 + $0xc18] sm:$0xff]
    %v510 = vld [vmem:[#allocation5 + $0xc20] sm:$0xff]
    %v511 = vld [vmem:[#allocation5 + $0xc28] sm:$0xff]
    %v512 = vld [vmem:[#allocation5 + $0xc30] sm:$0xff]
    %v513 = vld [vmem:[#allocation5 + $0xc38] sm:$0xff]
    %v514 = vld [vmem:[#allocation5 + $0xc40] sm:$0xff]
    %v515 = vld [vmem:[#allocation5 + $0xc48] sm:$0xff]
    %v516 = vld [vmem:[#allocation5 + $0xc50] sm:$0xff]
    %v517 = vld [vmem:[#allocation5 + $0xc58] sm:$0xff]
    %v518 = vld [vmem:[#allocation5 + $0xc60] sm:$0xff]
    %v519 = vld [vmem:[#allocation5 + $0xc68] sm:$0xff]
    %v520 = vld [vmem:[#allocation5 + $0xc70] sm:$0xff]
    %v521 = vld [vmem:[#allocation5 + $0xc78] sm:$0xff]
    %v522 = vld [vmem:[#allocation5 + $0xc80] sm:$0xff]
    %v523 = vld [vmem:[#allocation5 + $0xc88] sm:$0xff]
    %v524 = vld [vmem:[#allocation5 + $0xc90] sm:$0xff]
    %v525 = vld [vmem:[#allocation5 + $0xc98] sm:$0xff]
    %v526 = vld [vmem:[#allocation5 + $0xca0] sm:$0xff]
    %v527 = vld [vmem:[#allocation5 + $0xca8] sm:$0xff]
    %v528 = vld [vmem:[#allocation5 + $0xcb0] sm:$0xff]
    %v529 = vld [vmem:[#allocation5 + $0xcb8] sm:$0xff]
    %v530 = vld [vmem:[#allocation5 + $0xcc0] sm:$0xff]
    %v531 = vld [vmem:[#allocation5 + $0xcc8] sm:$0xff]
    %v532 = vld [vmem:[#allocation5 + $0xcd0] sm:$0xff]
    %v533 = vld [vmem:[#allocation5 + $0xcd8] sm:$0xff]
    %v534 = vld [vmem:[#allocation5 + $0xce0] sm:$0xff]
    %v535 = vld [vmem:[#allocation5 + $0xce8] sm:$0xff]
    %v536 = vld [vmem:[#allocation5 + $0xcf0] sm:$0xff]
    %v537 = vld [vmem:[#allocation5 + $0xcf8] sm:$0xff]
    %v538 = vld [vmem:[#allocation5 + $0xd00] sm:$0xff]
    %v539 = vld [vmem:[#allocation5 + $0xd08] sm:$0xff]
    %v540 = vld [vmem:[#allocation5 + $0xd10] sm:$0xff]
    %v541 = vld [vmem:[#allocation5 + $0xd18] sm:$0xff]
    %v542 = vld [vmem:[#allocation5 + $0xd20] sm:$0xff]
    %v543 = vld [vmem:[#allocation5 + $0xd28] sm:$0xff]
    %v544 = vld [vmem:[#allocation5 + $0xd30] sm:$0xff]
    %v545 = vld [vmem:[#allocation5 + $0xd38] sm:$0xff]
    %v546 = vld [vmem:[#allocation5 + $0xd40] sm:$0xff]
    %v547 = vld [vmem:[#allocation5 + $0xd48] sm:$0xff]
    %v548 = vld [vmem:[#allocation5 + $0xd50] sm:$0xff]
    %v549 = vld [vmem:[#allocation5 + $0xd58] sm:$0xff]
    %v550 = vld [vmem:[#allocation5 + $0xd60] sm:$0xff]
    %v551 = vld [vmem:[#allocation5 + $0xd68] sm:$0xff]
    %v552 = vld [vmem:[#allocation5 + $0xd70] sm:$0xff]
    %v553 = vld [vmem:[#allocation5 + $0xd78] sm:$0xff]
    %v554 = vld [vmem:[#allocation5 + $0xd80] sm:$0xff]
    %v555 = vld [vmem:[#allocation5 + $0xd88] sm:$0xff]
    %v556 = vld [vmem:[#allocation5 + $0xd90] sm:$0xff]
    %v557 = vld [vmem:[#allocation5 + $0xd98] sm:$0xff]
    %v558 = vld [vmem:[#allocation5 + $0xda0] sm:$0xff]
    %v559 = vld [vmem:[#allocation5 + $0xda8] sm:$0xff]
    %v560 = vld [vmem:[#allocation5 + $0xdb0] sm:$0xff]
    %v561 = vld [vmem:[#allocation5 + $0xdb8] sm:$0xff]
    %v562 = vld [vmem:[#allocation5 + $0xdc0] sm:$0xff]
    %v563 = vld [vmem:[#allocation5 + $0xdc8] sm:$0xff]
    %v564 = vld [vmem:[#allocation5 + $0xdd0] sm:$0xff]
    %v565 = vld [vmem:[#allocation5 + $0xdd8] sm:$0xff]
    %v566 = vld [vmem:[#allocation5 + $0xde0] sm:$0xff]
    %v567 = vld [vmem:[#allocation5 + $0xde8] sm:$0xff]
    %v568 = vld [vmem:[#allocation5 + $0xdf0] sm:$0xff]
    %v569 = vld [vmem:[#allocation5 + $0xdf8] sm:$0xff]
    %v570 = vld [vmem:[#allocation5 + $0xe00] sm:$0xff]
    %v571 = vld [vmem:[#allocation5 + $0xe08] sm:$0xff]
    %v572 = vld [vmem:[#allocation5 + $0xe10] sm:$0xff]
    %v573 = vld [vmem:[#allocation5 + $0xe18] sm:$0xff]
    %v574 = vld [vmem:[#allocation5 + $0xe20] sm:$0xff]
    %v575 = vld [vmem:[#allocation5 + $0xe28] sm:$0xff]
    %v576 = vld [vmem:[#allocation5 + $0xe30] sm:$0xff]
    %v577 = vld [vmem:[#allocation5 + $0xe38] sm:$0xff]
    %v578 = vld [vmem:[#allocation5 + $0xe40] sm:$0xff]
    %v579 = vld [vmem:[#allocation5 + $0xe48] sm:$0xff]
    %v580 = vld [vmem:[#allocation5 + $0xe50] sm:$0xff]
    %v581 = vld [vmem:[#allocation5 + $0xe58] sm:$0xff]
    %v582 = vld [vmem:[#allocation5 + $0xe60] sm:$0xff]
    %v583 = vld [vmem:[#allocation5 + $0xe68] sm:$0xff]
    %v584 = vld [vmem:[#allocation5 + $0xe70] sm:$0xff]
    %v585 = vld [vmem:[#allocation5 + $0xe78] sm:$0xff]
    %v586 = vld [vmem:[#allocation5 + $0xe80] sm:$0xff]
    %v587 = vld [vmem:[#allocation5 + $0xe88] sm:$0xff]
    %v588 = vld [vmem:[#allocation5 + $0xe90] sm:$0xff]
    %v589 = vld [vmem:[#allocation5 + $0xe98] sm:$0xff]
    %v590 = vld [vmem:[#allocation5 + $0xea0] sm:$0xff]
    %v591 = vld [vmem:[#allocation5 + $0xea8] sm:$0xff]
    %v592 = vld [vmem:[#allocation5 + $0xeb0] sm:$0xff]
    %v593 = vld [vmem:[#allocation5 + $0xeb8] sm:$0xff]
    %v594 = vld [vmem:[#allocation5 + $0xec0] sm:$0xff]
    %v595 = vld [vmem:[#allocation5 + $0xec8] sm:$0xff]
    %v596 = vld [vmem:[#allocation5 + $0xed0] sm:$0xff]
    %v597 = vld [vmem:[#allocation5 + $0xed8] sm:$0xff]
    %v598 = vld [vmem:[#allocation5 + $0xee0] sm:$0xff]
    %v599 = vld [vmem:[#allocation5 + $0xee8] sm:$0xff]
    %v600 = vld [vmem:[#allocation5 + $0xef0] sm:$0xff]
    %v601 = vld [vmem:[#allocation5 + $0xef8] sm:$0xff]
    %v602 = vld [vmem:[#allocation5 + $0xf00] sm:$0xff]
    %v603 = vld [vmem:[#allocation5 + $0xf08] sm:$0xff]
    %v604 = vld [vmem:[#allocation5 + $0xf10] sm:$0xff]
    %v605 = vld [vmem:[#allocation5 + $0xf18] sm:$0xff]
    %v606 = vld [vmem:[#allocation5 + $0xf20] sm:$0xff]
    %v607 = vld [vmem:[#allocation5 + $0xf28] sm:$0xff]
    %v608 = vld [vmem:[#allocation5 + $0xf30] sm:$0xff]
    %v609 = vld [vmem:[#allocation5 + $0xf38] sm:$0xff]
    %v610 = vld [vmem:[#allocation5 + $0xf40] sm:$0xff]
    %v611 = vld [vmem:[#allocation5 + $0xf48] sm:$0xff]
    %v612 = vld [vmem:[#allocation5 + $0xf50] sm:$0xff]
    %v613 = vld [vmem:[#allocation5 + $0xf58] sm:$0xff]
    %v614 = vld [vmem:[#allocation5 + $0xf60] sm:$0xff]
    %v615 = vld [vmem:[#allocation5 + $0xf68] sm:$0xff]
    %v616 = vld [vmem:[#allocation5 + $0xf70] sm:$0xff]
    %v617 = vld [vmem:[#allocation5 + $0xf78] sm:$0xff]
    %v618 = vld [vmem:[#allocation5 + $0xf80] sm:$0xff]
    %v619 = vld [vmem:[#allocation5 + $0xf88] sm:$0xff]
    %v620 = vld [vmem:[#allocation5 + $0xf90] sm:$0xff]
    %v621 = vld [vmem:[#allocation5 + $0xf98] sm:$0xff]
    %v622 = vld [vmem:[#allocation5 + $0xfa0] sm:$0xff]
    %v623 = vld [vmem:[#allocation5 + $0xfa8] sm:$0xff]
    %v624 = vld [vmem:[#allocation5 + $0xfb0] sm:$0xff]
    %v625 = vld [vmem:[#allocation5 + $0xfb8] sm:$0xff]
    %v626 = vld [vmem:[#allocation5 + $0xfc0] sm:$0xff]
    %v627 = vld [vmem:[#allocation5 + $0xfc8] sm:$0xff]
    %v628 = vld [vmem:[#allocation5 + $0xfd0] sm:$0xff]
    %v629 = vld [vmem:[#allocation5 + $0xfd8] sm:$0xff]
    %v630 = vld [vmem:[#allocation5 + $0xfe0] sm:$0xff]
    %v631 = vld [vmem:[#allocation5 + $0xfe8] sm:$0xff]
    %v632 = vld [vmem:[#allocation5 + $0xff0] sm:$0xff]
    %v633 = vld [vmem:[#allocation5 + $0xff8] sm:$0xff]
    %v634 = vld [vmem:[#allocation7] sm:$0xf]
    %v636 = vlaneseq
    %v637 = vshrl.u32 %v636, 7
    %v638 = vsub.s32 0, %v637
    %v639 = vrot.slane %v634, %v638
    %v640 = vlaneseq
    %v641 = vshrl.u32 %v640, 7
    %v642 = vsub.s32 1, %v641
    %v643 = vrot.slane %v634, %v642
    %v644 = vlaneseq
    %v645 = vshrl.u32 %v644, 7
    %v646 = vsub.s32 2, %v645
    %v647 = vrot.slane %v634, %v646
    %v648 = vlaneseq
    %v649 = vshrl.u32 %v648, 7
    %v650 = vsub.s32 3, %v649
    %v651 = vrot.slane %v634, %v650
    %656 = vmatprep.subr.mxu0 %v123
    %657 = vmatpush1.msra.mxu0 %v122
    %658 = vmatprep.subr.mxu0 %v127
    %659 = vmatpush1.msra.mxu0 %v126
    %660 = vmatprep.subr.mxu0 %v131
    %661 = vmatpush1.msra.mxu0 %v130
    %662 = vmatprep.subr.mxu0 %v135
    %663 = vmatpush1.msra.mxu0 %v134
    %664 = vmatprep.subr.mxu0 %v139
    %665 = vmatpush1.msra.mxu0 %v138
    %666 = vmatprep.subr.mxu0 %v143
    %667 = vmatpush1.msra.mxu0 %v142
    %668 = vmatprep.subr.mxu0 %v147
    %669 = vmatpush1.msra.mxu0 %v146
    %670 = vmatprep.subr.mxu0 %v151
    %671 = vmatpush1.msra.mxu0 %v150
    %672 = vmatprep.subr.mxu0 %v155
    %673 = vmatpush1.msra.mxu0 %v154
    %674 = vmatprep.subr.mxu0 %v159
    %675 = vmatpush1.msra.mxu0 %v158
    %676 = vmatprep.subr.mxu0 %v163
    %677 = vmatpush1.msra.mxu0 %v162
    %678 = vmatprep.subr.mxu0 %v167
    %679 = vmatpush1.msra.mxu0 %v166
    %680 = vmatprep.subr.mxu0 %v171
    %681 = vmatpush1.msra.mxu0 %v170
    %682 = vmatprep.subr.mxu0 %v175
    %683 = vmatpush1.msra.mxu0 %v174
    %684 = vmatprep.subr.mxu0 %v179
    %685 = vmatpush1.msra.mxu0 %v178
    %686 = vmatprep.subr.mxu0 %v183
    %687 = vmatpush1.msra.mxu0 %v182
    %688 = vmatprep.subr.mxu0 %v187
    %689 = vmatpush1.msra.mxu0 %v186
    %690 = vmatprep.subr.mxu0 %v191
    %691 = vmatpush1.msra.mxu0 %v190
    %692 = vmatprep.subr.mxu0 %v195
    %693 = vmatpush1.msra.mxu0 %v194
    %694 = vmatprep.subr.mxu0 %v199
    %695 = vmatpush1.msra.mxu0 %v198
    %696 = vmatprep.subr.mxu0 %v203
    %697 = vmatpush1.msra.mxu0 %v202
    %698 = vmatprep.subr.mxu0 %v207
    %699 = vmatpush1.msra.mxu0 %v206
    %700 = vmatprep.subr.mxu0 %v211
    %701 = vmatpush1.msra.mxu0 %v210
    %702 = vmatprep.subr.mxu0 %v215
    %703 = vmatpush1.msra.mxu0 %v214
    %704 = vmatprep.subr.mxu0 %v219
    %705 = vmatpush1.msra.mxu0 %v218
    %706 = vmatprep.subr.mxu0 %v223
    %707 = vmatpush1.msra.mxu0 %v222
    %708 = vmatprep.subr.mxu0 %v227
    %709 = vmatpush1.msra.mxu0 %v226
    %710 = vmatprep.subr.mxu0 %v231
    %711 = vmatpush1.msra.mxu0 %v230
    %712 = vmatprep.subr.mxu0 %v235
    %713 = vmatpush1.msra.mxu0 %v234
    %714 = vmatprep.subr.mxu0 %v239
    %715 = vmatpush1.msra.mxu0 %v238
    %716 = vmatprep.subr.mxu0 %v243
    %717 = vmatpush1.msra.mxu0 %v242
    %718 = vmatprep.subr.mxu0 %v247
    %719 = vmatpush1.msra.mxu0 %v246
    %720 = vmatprep.mubr.f32.mxu0 %v115
    %721 = vmatmul.mubr.f32.gmra.mrb[0].mxu0 %v114
    %v722 = vpop.f32.mrb[0].mxu0
    %v723 = vadd.f32 %v639, %v722
    %v724 = vpop.f32.mrb[0].mxu0
    %v725 = vadd.f32 %v643, %v724
    %726 = vdwg.mxu0
    %727 = vmatprep.subr.mxu0 %v251
    %728 = vmatpush1.msra.mxu0 %v250
    %729 = vmatprep.subr.mxu0 %v255
    %730 = vmatpush1.msra.mxu0 %v254
    %731 = vmatprep.subr.mxu0 %v259
    %732 = vmatpush1.msra.mxu0 %v258
    %733 = vmatprep.subr.mxu0 %v263
    %734 = vmatpush1.msra.mxu0 %v262
    %735 = vmatprep.subr.mxu0 %v267
    %736 = vmatpush1.msra.mxu0 %v266
    %737 = vmatprep.subr.mxu0 %v271
    %738 = vmatpush1.msra.mxu0 %v270
    %739 = vmatprep.subr.mxu0 %v275
    %740 = vmatpush1.msra.mxu0 %v274
    %741 = vmatprep.subr.mxu0 %v279
    %742 = vmatpush1.msra.mxu0 %v278
    %743 = vmatprep.subr.mxu0 %v283
    %744 = vmatpush1.msra.mxu0 %v282
    %745 = vmatprep.subr.mxu0 %v287
    %746 = vmatpush1.msra.mxu0 %v286
    %747 = vmatprep.subr.mxu0 %v291
    %748 = vmatpush1.msra.mxu0 %v290
    %749 = vmatprep.subr.mxu0 %v295
    %750 = vmatpush1.msra.mxu0 %v294
    %751 = vmatprep.subr.mxu0 %v299
    %752 = vmatpush1.msra.mxu0 %v298
    %753 = vmatprep.subr.mxu0 %v303
    %754 = vmatpush1.msra.mxu0 %v302
    %755 = vmatprep.subr.mxu0 %v307
    %756 = vmatpush1.msra.mxu0 %v306
    %757 = vmatprep.subr.mxu0 %v311
    %758 = vmatpush1.msra.mxu0 %v310
    %759 = vmatprep.subr.mxu0 %v315
    %760 = vmatpush1.msra.mxu0 %v314
    %761 = vmatprep.subr.mxu0 %v319
    %762 = vmatpush1.msra.mxu0 %v318
    %763 = vmatprep.subr.mxu0 %v323
    %764 = vmatpush1.msra.mxu0 %v322
    %765 = vmatprep.subr.mxu0 %v327
    %766 = vmatpush1.msra.mxu0 %v326
    %767 = vmatprep.subr.mxu0 %v331
    %768 = vmatpush1.msra.mxu0 %v330
    %769 = vmatprep.subr.mxu0 %v335
    %770 = vmatpush1.msra.mxu0 %v334
    %771 = vmatprep.subr.mxu0 %v339
    %772 = vmatpush1.msra.mxu0 %v338
    %773 = vmatprep.subr.mxu0 %v343
    %774 = vmatpush1.msra.mxu0 %v342
    %775 = vmatprep.subr.mxu0 %v347
    %776 = vmatpush1.msra.mxu0 %v346
    %777 = vmatprep.subr.mxu0 %v351
    %778 = vmatpush1.msra.mxu0 %v350
    %779 = vmatprep.subr.mxu0 %v355
    %780 = vmatpush1.msra.mxu0 %v354
    %781 = vmatprep.subr.mxu0 %v359
    %782 = vmatpush1.msra.mxu0 %v358
    %783 = vmatprep.subr.mxu0 %v363
    %784 = vmatpush1.msra.mxu0 %v362
    %785 = vmatprep.subr.mxu0 %v367
    %786 = vmatpush1.msra.mxu0 %v366
    %787 = vmatprep.subr.mxu0 %v371
    %788 = vmatpush1.msra.mxu0 %v370
    %789 = vmatprep.subr.mxu0 %v375
    %790 = vmatpush1.msra.mxu0 %v374
    %791 = vmatprep.mubr.f32.mxu0 %v117
    %792 = vmatmul.mubr.f32.gmra.mrb[0].mxu0 %v116
    %v793 = vpop.f32.mrb[0].mxu0
    %v794 = vadd.f32 %v723, %v793
    %v795 = vpop.f32.mrb[0].mxu0
    %v796 = vadd.f32 %v725, %v795
    %797 = vdwg.mxu0
    %798 = vmatprep.subr.mxu0 %v379
    %799 = vmatpush1.msra.mxu0 %v378
    %800 = vmatprep.subr.mxu0 %v383
    %801 = vmatpush1.msra.mxu0 %v382
    %802 = vmatprep.subr.mxu0 %v387
    %803 = vmatpush1.msra.mxu0 %v386
    %804 = vmatprep.subr.mxu0 %v391
    %805 = vmatpush1.msra.mxu0 %v390
    %806 = vmatprep.subr.mxu0 %v395
    %807 = vmatpush1.msra.mxu0 %v394
    %808 = vmatprep.subr.mxu0 %v399
    %809 = vmatpush1.msra.mxu0 %v398
    %810 = vmatprep.subr.mxu0 %v403
    %811 = vmatpush1.msra.mxu0 %v402
    %812 = vmatprep.subr.mxu0 %v407
    %813 = vmatpush1.msra.mxu0 %v406
    %814 = vmatprep.subr.mxu0 %v411
    %815 = vmatpush1.msra.mxu0 %v410
    %816 = vmatprep.subr.mxu0 %v415
    %817 = vmatpush1.msra.mxu0 %v414
    %818 = vmatprep.subr.mxu0 %v419
    %819 = vmatpush1.msra.mxu0 %v418
    %820 = vmatprep.subr.mxu0 %v423
    %821 = vmatpush1.msra.mxu0 %v422
    %822 = vmatprep.subr.mxu0 %v427
    %823 = vmatpush1.msra.mxu0 %v426
    %824 = vmatprep.subr.mxu0 %v431
    %825 = vmatpush1.msra.mxu0 %v430
    %826 = vmatprep.subr.mxu0 %v435
    %827 = vmatpush1.msra.mxu0 %v434
    %828 = vmatprep.subr.mxu0 %v439
    %829 = vmatpush1.msra.mxu0 %v438
    %830 = vmatprep.subr.mxu0 %v443
    %831 = vmatpush1.msra.mxu0 %v442
    %832 = vmatprep.subr.mxu0 %v447
    %833 = vmatpush1.msra.mxu0 %v446
    %834 = vmatprep.subr.mxu0 %v451
    %835 = vmatpush1.msra.mxu0 %v450
    %836 = vmatprep.subr.mxu0 %v455
    %837 = vmatpush1.msra.mxu0 %v454
    %838 = vmatprep.subr.mxu0 %v459
    %839 = vmatpush1.msra.mxu0 %v458
    %840 = vmatprep.subr.mxu0 %v463
    %841 = vmatpush1.msra.mxu0 %v462
    %842 = vmatprep.subr.mxu0 %v467
    %843 = vmatpush1.msra.mxu0 %v466
    %844 = vmatprep.subr.mxu0 %v471
    %845 = vmatpush1.msra.mxu0 %v470
    %846 = vmatprep.subr.mxu0 %v475
    %847 = vmatpush1.msra.mxu0 %v474
    %848 = vmatprep.subr.mxu0 %v479
    %849 = vmatpush1.msra.mxu0 %v478
    %850 = vmatprep.subr.mxu0 %v483
    %851 = vmatpush1.msra.mxu0 %v482
    %852 = vmatprep.subr.mxu0 %v487
    %853 = vmatpush1.msra.mxu0 %v486
    %854 = vmatprep.subr.mxu0 %v491
    %855 = vmatpush1.msra.mxu0 %v490
    %856 = vmatprep.subr.mxu0 %v495
    %857 = vmatpush1.msra.mxu0 %v494
    %858 = vmatprep.subr.mxu0 %v499
    %859 = vmatpush1.msra.mxu0 %v498
    %860 = vmatprep.subr.mxu0 %v503
    %861 = vmatpush1.msra.mxu0 %v502
    %862 = vmatprep.mubr.f32.mxu0 %v119
    %863 = vmatmul.mubr.f32.gmra.mrb[0].mxu0 %v118
    %v864 = vpop.f32.mrb[0].mxu0
    %v865 = vadd.f32 %v794, %v864
    %v866 = vpop.f32.mrb[0].mxu0
    %v867 = vadd.f32 %v796, %v866
    %868 = vdwg.mxu0
    %869 = vmatprep.subr.mxu0 %v507
    %870 = vmatpush1.msra.mxu0 %v506
    %871 = vmatprep.subr.mxu0 %v511
    %872 = vmatpush1.msra.mxu0 %v510
    %873 = vmatprep.subr.mxu0 %v515
    %874 = vmatpush1.msra.mxu0 %v514
    %875 = vmatprep.subr.mxu0 %v519
    %876 = vmatpush1.msra.mxu0 %v518
    %877 = vmatprep.subr.mxu0 %v523
    %878 = vmatpush1.msra.mxu0 %v522
    %879 = vmatprep.subr.mxu0 %v527
    %880 = vmatpush1.msra.mxu0 %v526
    %881 = vmatprep.subr.mxu0 %v531
    %882 = vmatpush1.msra.mxu0 %v530
    %883 = vmatprep.subr.mxu0 %v535
    %884 = vmatpush1.msra.mxu0 %v534
    %885 = vmatprep.subr.mxu0 %v539
    %886 = vmatpush1.msra.mxu0 %v538
    %887 = vmatprep.subr.mxu0 %v543
    %888 = vmatpush1.msra.mxu0 %v542
    %889 = vmatprep.subr.mxu0 %v547
    %890 = vmatpush1.msra.mxu0 %v546
    %891 = vmatprep.subr.mxu0 %v551
    %892 = vmatpush1.msra.mxu0 %v550
    %893 = vmatprep.subr.mxu0 %v555
    %894 = vmatpush1.msra.mxu0 %v554
    %895 = vmatprep.subr.mxu0 %v559
    %896 = vmatpush1.msra.mxu0 %v558
    %897 = vmatprep.subr.mxu0 %v563
    %898 = vmatpush1.msra.mxu0 %v562
    %899 = vmatprep.subr.mxu0 %v567
    %900 = vmatpush1.msra.mxu0 %v566
    %901 = vmatprep.subr.mxu0 %v571
    %902 = vmatpush1.msra.mxu0 %v570
    %903 = vmatprep.subr.mxu0 %v575
    %904 = vmatpush1.msra.mxu0 %v574
    %905 = vmatprep.subr.mxu0 %v579
    %906 = vmatpush1.msra.mxu0 %v578
    %907 = vmatprep.subr.mxu0 %v583
    %908 = vmatpush1.msra.mxu0 %v582
    %909 = vmatprep.subr.mxu0 %v587
    %910 = vmatpush1.msra.mxu0 %v586
    %911 = vmatprep.subr.mxu0 %v591
    %912 = vmatpush1.msra.mxu0 %v590
    %913 = vmatprep.subr.mxu0 %v595
    %914 = vmatpush1.msra.mxu0 %v594
    %915 = vmatprep.subr.mxu0 %v599
    %916 = vmatpush1.msra.mxu0 %v598
    %917 = vmatprep.subr.mxu0 %v603
    %918 = vmatpush1.msra.mxu0 %v602
    %919 = vmatprep.subr.mxu0 %v607
    %920 = vmatpush1.msra.mxu0 %v606
    %921 = vmatprep.subr.mxu0 %v611
    %922 = vmatpush1.msra.mxu0 %v610
    %923 = vmatprep.subr.mxu0 %v615
    %924 = vmatpush1.msra.mxu0 %v614
    %925 = vmatprep.subr.mxu0 %v619
    %926 = vmatpush1.msra.mxu0 %v618
    %927 = vmatprep.subr.mxu0 %v623
    %928 = vmatpush1.msra.mxu0 %v622
    %929 = vmatprep.subr.mxu0 %v627
    %930 = vmatpush1.msra.mxu0 %v626
    %931 = vmatprep.subr.mxu0 %v631
    %932 = vmatpush1.msra.mxu0 %v630
    %933 = vmatprep.mubr.f32.mxu0 %v121
    %934 = vmatmul.mubr.f32.gmra.mrb[0].mxu0 %v120
    %v935 = vpop.f32.mrb[0].mxu0
    %v936 = vadd.f32 %v865, %v935
    %v937 = vpop.f32.mrb[0].mxu0
    %v938 = vadd.f32 %v867, %v937
    %939 = vdwg.mxu0
    %940 = vmatprep.subr.mxu0 %v125
    %941 = vmatpush1.msra.mxu0 %v124
    %942 = vmatprep.subr.mxu0 %v129
    %943 = vmatpush1.msra.mxu0 %v128
    %944 = vmatprep.subr.mxu0 %v133
    %945 = vmatpush1.msra.mxu0 %v132
    %946 = vmatprep.subr.mxu0 %v137
    %947 = vmatpush1.msra.mxu0 %v136
    %948 = vmatprep.subr.mxu0 %v141
    %949 = vmatpush1.msra.mxu0 %v140
    %950 = vmatprep.subr.mxu0 %v145
    %951 = vmatpush1.msra.mxu0 %v144
    %952 = vmatprep.subr.mxu0 %v149
    %953 = vmatpush1.msra.mxu0 %v148
    %954 = vmatprep.subr.mxu0 %v153
    %955 = vmatpush1.msra.mxu0 %v152
    %956 = vmatprep.subr.mxu0 %v157
    %957 = vmatpush1.msra.mxu0 %v156
    %958 = vmatprep.subr.mxu0 %v161
    %959 = vmatpush1.msra.mxu0 %v160
    %960 = vmatprep.subr.mxu0 %v165
    %961 = vmatpush1.msra.mxu0 %v164
    %962 = vmatprep.subr.mxu0 %v169
    %963 = vmatpush1.msra.mxu0 %v168
    %964 = vmatprep.subr.mxu0 %v173
    %965 = vmatpush1.msra.mxu0 %v172
    %966 = vmatprep.subr.mxu0 %v177
    %967 = vmatpush1.msra.mxu0 %v176
    %968 = vmatprep.subr.mxu0 %v181
    %969 = vmatpush1.msra.mxu0 %v180
    %970 = vmatprep.subr.mxu0 %v185
    %971 = vmatpush1.msra.mxu0 %v184
    %972 = vmatprep.subr.mxu0 %v189
    %973 = vmatpush1.msra.mxu0 %v188
    %974 = vmatprep.subr.mxu0 %v193
    %975 = vmatpush1.msra.mxu0 %v192
    %976 = vmatprep.subr.mxu0 %v197
    %977 = vmatpush1.msra.mxu0 %v196
    %978 = vmatprep.subr.mxu0 %v201
    %979 = vmatpush1.msra.mxu0 %v200
    %980 = vmatprep.subr.mxu0 %v205
    %981 = vmatpush1.msra.mxu0 %v204
    %982 = vmatprep.subr.mxu0 %v209
    %983 = vmatpush1.msra.mxu0 %v208
    %984 = vmatprep.subr.mxu0 %v213
    %985 = vmatpush1.msra.mxu0 %v212
    %986 = vmatprep.subr.mxu0 %v217
    %987 = vmatpush1.msra.mxu0 %v216
    %988 = vmatprep.subr.mxu0 %v221
    %989 = vmatpush1.msra.mxu0 %v220
    %990 = vmatprep.subr.mxu0 %v225
    %991 = vmatpush1.msra.mxu0 %v224
    %992 = vmatprep.subr.mxu0 %v229
    %993 = vmatpush1.msra.mxu0 %v228
    %994 = vmatprep.subr.mxu0 %v233
    %995 = vmatpush1.msra.mxu0 %v232
    %996 = vmatprep.subr.mxu0 %v237
    %997 = vmatpush1.msra.mxu0 %v236
    %998 = vmatprep.subr.mxu0 %v241
    %999 = vmatpush1.msra.mxu0 %v240
    %1000 = vmatprep.subr.mxu0 %v245
    %1001 = vmatpush1.msra.mxu0 %v244
    %1002 = vmatprep.subr.mxu0 %v249
    %1003 = vmatpush1.msra.mxu0 %v248
    %1004 = vmatprep.mubr.f32.mxu0 %v115
    %1005 = vmatmul.mubr.f32.gmra.mrb[0].mxu0 %v114
    %v1006 = vpop.f32.mrb[0].mxu0
    %v1007 = vadd.f32 %v647, %v1006
    %v1008 = vpop.f32.mrb[0].mxu0
    %v1009 = vadd.f32 %v651, %v1008
    %1010 = vdwg.mxu0
    %1011 = vmatprep.subr.mxu0 %v253
    %1012 = vmatpush1.msra.mxu0 %v252
    %1013 = vmatprep.subr.mxu0 %v257
    %1014 = vmatpush1.msra.mxu0 %v256
    %1015 = vmatprep.subr.mxu0 %v261
    %1016 = vmatpush1.msra.mxu0 %v260
    %1017 = vmatprep.subr.mxu0 %v265
    %1018 = vmatpush1.msra.mxu0 %v264
    %1019 = vmatprep.subr.mxu0 %v269
    %1020 = vmatpush1.msra.mxu0 %v268
    %1021 = vmatprep.subr.mxu0 %v273
    %1022 = vmatpush1.msra.mxu0 %v272
    %1023 = vmatprep.subr.mxu0 %v277
    %1024 = vmatpush1.msra.mxu0 %v276
    %1025 = vmatprep.subr.mxu0 %v281
    %1026 = vmatpush1.msra.mxu0 %v280
    %1027 = vmatprep.subr.mxu0 %v285
    %1028 = vmatpush1.msra.mxu0 %v284
    %1029 = vmatprep.subr.mxu0 %v289
    %1030 = vmatpush1.msra.mxu0 %v288
    %1031 = vmatprep.subr.mxu0 %v293
    %1032 = vmatpush1.msra.mxu0 %v292
    %1033 = vmatprep.subr.mxu0 %v297
    %1034 = vmatpush1.msra.mxu0 %v296
    %1035 = vmatprep.subr.mxu0 %v301
    %1036 = vmatpush1.msra.mxu0 %v300
    %1037 = vmatprep.subr.mxu0 %v305
    %1038 = vmatpush1.msra.mxu0 %v304
    %1039 = vmatprep.subr.mxu0 %v309
    %1040 = vmatpush1.msra.mxu0 %v308
    %1041 = vmatprep.subr.mxu0 %v313
    %1042 = vmatpush1.msra.mxu0 %v312
    %1043 = vmatprep.subr.mxu0 %v317
    %1044 = vmatpush1.msra.mxu0 %v316
    %1045 = vmatprep.subr.mxu0 %v321
    %1046 = vmatpush1.msra.mxu0 %v320
    %1047 = vmatprep.subr.mxu0 %v325
    %1048 = vmatpush1.msra.mxu0 %v324
    %1049 = vmatprep.subr.mxu0 %v329
    %1050 = vmatpush1.msra.mxu0 %v328
    %1051 = vmatprep.subr.mxu0 %v333
    %1052 = vmatpush1.msra.mxu0 %v332
    %1053 = vmatprep.subr.mxu0 %v337
    %1054 = vmatpush1.msra.mxu0 %v336
    %1055 = vmatprep.subr.mxu0 %v341
    %1056 = vmatpush1.msra.mxu0 %v340
    %1057 = vmatprep.subr.mxu0 %v345
    %1058 = vmatpush1.msra.mxu0 %v344
    %1059 = vmatprep.subr.mxu0 %v349
    %1060 = vmatpush1.msra.mxu0 %v348
    %1061 = vmatprep.subr.mxu0 %v353
    %1062 = vmatpush1.msra.mxu0 %v352
    %1063 = vmatprep.subr.mxu0 %v357
    %1064 = vmatpush1.msra.mxu0 %v356
    %1065 = vmatprep.subr.mxu0 %v361
    %1066 = vmatpush1.msra.mxu0 %v360
    %1067 = vmatprep.subr.mxu0 %v365
    %1068 = vmatpush1.msra.mxu0 %v364
    %1069 = vmatprep.subr.mxu0 %v369
    %1070 = vmatpush1.msra.mxu0 %v368
    %1071 = vmatprep.subr.mxu0 %v373
    %1072 = vmatpush1.msra.mxu0 %v372
    %1073 = vmatprep.subr.mxu0 %v377
    %1074 = vmatpush1.msra.mxu0 %v376
    %1075 = vmatprep.mubr.f32.mxu0 %v117
    %1076 = vmatmul.mubr.f32.gmra.mrb[0].mxu0 %v116
    %v1077 = vpop.f32.mrb[0].mxu0
    %v1078 = vadd.f32 %v1007, %v1077
    %v1079 = vpop.f32.mrb[0].mxu0
    %v1080 = vadd.f32 %v1009, %v1079
    %1081 = vdwg.mxu0
    %1082 = vmatprep.subr.mxu0 %v381
    %1083 = vmatpush1.msra.mxu0 %v380
    %1084 = vmatprep.subr.mxu0 %v385
    %1085 = vmatpush1.msra.mxu0 %v384
    %1086 = vmatprep.subr.mxu0 %v389
    %1087 = vmatpush1.msra.mxu0 %v388
    %1088 = vmatprep.subr.mxu0 %v393
    %1089 = vmatpush1.msra.mxu0 %v392
    %1090 = vmatprep.subr.mxu0 %v397
    %1091 = vmatpush1.msra.mxu0 %v396
    %1092 = vmatprep.subr.mxu0 %v401
    %1093 = vmatpush1.msra.mxu0 %v400
    %1094 = vmatprep.subr.mxu0 %v405
    %1095 = vmatpush1.msra.mxu0 %v404
    %1096 = vmatprep.subr.mxu0 %v409
    %1097 = vmatpush1.msra.mxu0 %v408
    %1098 = vmatprep.subr.mxu0 %v413
    %1099 = vmatpush1.msra.mxu0 %v412
    %1100 = vmatprep.subr.mxu0 %v417
    %1101 = vmatpush1.msra.mxu0 %v416
    %1102 = vmatprep.subr.mxu0 %v421
    %1103 = vmatpush1.msra.mxu0 %v420
    %1104 = vmatprep.subr.mxu0 %v425
    %1105 = vmatpush1.msra.mxu0 %v424
    %1106 = vmatprep.subr.mxu0 %v429
    %1107 = vmatpush1.msra.mxu0 %v428
    %1108 = vmatprep.subr.mxu0 %v433
    %1109 = vmatpush1.msra.mxu0 %v432
    %1110 = vmatprep.subr.mxu0 %v437
    %1111 = vmatpush1.msra.mxu0 %v436
    %1112 = vmatprep.subr.mxu0 %v441
    %1113 = vmatpush1.msra.mxu0 %v440
    %1114 = vmatprep.subr.mxu0 %v445
    %1115 = vmatpush1.msra.mxu0 %v444
    %1116 = vmatprep.subr.mxu0 %v449
    %1117 = vmatpush1.msra.mxu0 %v448
    %1118 = vmatprep.subr.mxu0 %v453
    %1119 = vmatpush1.msra.mxu0 %v452
    %1120 = vmatprep.subr.mxu0 %v457
    %1121 = vmatpush1.msra.mxu0 %v456
    %1122 = vmatprep.subr.mxu0 %v461
    %1123 = vmatpush1.msra.mxu0 %v460
    %1124 = vmatprep.subr.mxu0 %v465
    %1125 = vmatpush1.msra.mxu0 %v464
    %1126 = vmatprep.subr.mxu0 %v469
    %1127 = vmatpush1.msra.mxu0 %v468
    %1128 = vmatprep.subr.mxu0 %v473
    %1129 = vmatpush1.msra.mxu0 %v472
    %1130 = vmatprep.subr.mxu0 %v477
    %1131 = vmatpush1.msra.mxu0 %v476
    %1132 = vmatprep.subr.mxu0 %v481
    %1133 = vmatpush1.msra.mxu0 %v480
    %1134 = vmatprep.subr.mxu0 %v485
    %1135 = vmatpush1.msra.mxu0 %v484
    %1136 = vmatprep.subr.mxu0 %v489
    %1137 = vmatpush1.msra.mxu0 %v488
    %1138 = vmatprep.subr.mxu0 %v493
    %1139 = vmatpush1.msra.mxu0 %v492
    %1140 = vmatprep.subr.mxu0 %v497
    %1141 = vmatpush1.msra.mxu0 %v496
    %1142 = vmatprep.subr.mxu0 %v501
    %1143 = vmatpush1.msra.mxu0 %v500
    %1144 = vmatprep.subr.mxu0 %v505
    %1145 = vmatpush1.msra.mxu0 %v504
    %1146 = vmatprep.mubr.f32.mxu0 %v119
    %1147 = vmatmul.mubr.f32.gmra.mrb[0].mxu0 %v118
    %v1148 = vpop.f32.mrb[0].mxu0
    %v1149 = vadd.f32 %v1078, %v1148
    %v1150 = vpop.f32.mrb[0].mxu0
    %v1151 = vadd.f32 %v1080, %v1150
    %1152 = vdwg.mxu0
    %1153 = vmatprep.subr.mxu0 %v509
    %1154 = vmatpush1.msra.mxu0 %v508
    %1155 = vmatprep.subr.mxu0 %v513
    %1156 = vmatpush1.msra.mxu0 %v512
    %1157 = vmatprep.subr.mxu0 %v517
    %1158 = vmatpush1.msra.mxu0 %v516
    %1159 = vmatprep.subr.mxu0 %v521
    %1160 = vmatpush1.msra.mxu0 %v520
    %1161 = vmatprep.subr.mxu0 %v525
    %1162 = vmatpush1.msra.mxu0 %v524
    %1163 = vmatprep.subr.mxu0 %v529
    %1164 = vmatpush1.msra.mxu0 %v528
    %1165 = vmatprep.subr.mxu0 %v533
    %1166 = vmatpush1.msra.mxu0 %v532
    %1167 = vmatprep.subr.mxu0 %v537
    %1168 = vmatpush1.msra.mxu0 %v536
    %1169 = vmatprep.subr.mxu0 %v541
    %1170 = vmatpush1.msra.mxu0 %v540
    %1171 = vmatprep.subr.mxu0 %v545
    %1172 = vmatpush1.msra.mxu0 %v544
    %1173 = vmatprep.subr.mxu0 %v549
    %1174 = vmatpush1.msra.mxu0 %v548
    %1175 = vmatprep.subr.mxu0 %v553
    %1176 = vmatpush1.msra.mxu0 %v552
    %1177 = vmatprep.subr.mxu0 %v557
    %1178 = vmatpush1.msra.mxu0 %v556
    %1179 = vmatprep.subr.mxu0 %v561
    %1180 = vmatpush1.msra.mxu0 %v560
    %1181 = vmatprep.subr.mxu0 %v565
    %1182 = vmatpush1.msra.mxu0 %v564
    %1183 = vmatprep.subr.mxu0 %v569
    %1184 = vmatpush1.msra.mxu0 %v568
    %1185 = vmatprep.subr.mxu0 %v573
    %1186 = vmatpush1.msra.mxu0 %v572
    %1187 = vmatprep.subr.mxu0 %v577
    %1188 = vmatpush1.msra.mxu0 %v576
    %1189 = vmatprep.subr.mxu0 %v581
    %1190 = vmatpush1.msra.mxu0 %v580
    %1191 = vmatprep.subr.mxu0 %v585
    %1192 = vmatpush1.msra.mxu0 %v584
    %1193 = vmatprep.subr.mxu0 %v589
    %1194 = vmatpush1.msra.mxu0 %v588
    %1195 = vmatprep.subr.mxu0 %v593
    %1196 = vmatpush1.msra.mxu0 %v592
    %1197 = vmatprep.subr.mxu0 %v597
    %1198 = vmatpush1.msra.mxu0 %v596
    %1199 = vmatprep.subr.mxu0 %v601
    %1200 = vmatpush1.msra.mxu0 %v600
    %1201 = vmatprep.subr.mxu0 %v605
    %1202 = vmatpush1.msra.mxu0 %v604
    %1203 = vmatprep.subr.mxu0 %v609
    %1204 = vmatpush1.msra.mxu0 %v608
    %1205 = vmatprep.subr.mxu0 %v613
    %1206 = vmatpush1.msra.mxu0 %v612
    %1207 = vmatprep.subr.mxu0 %v617
    %1208 = vmatpush1.msra.mxu0 %v616
    %1209 = vmatprep.subr.mxu0 %v621
    %1210 = vmatpush1.msra.mxu0 %v620
    %1211 = vmatprep.subr.mxu0 %v625
    %1212 = vmatpush1.msra.mxu0 %v624
    %1213 = vmatprep.subr.mxu0 %v629
    %1214 = vmatpush1.msra.mxu0 %v628
    %1215 = vmatprep.subr.mxu0 %v633
    %1216 = vmatpush1.msra.mxu0 %v632
    %1217 = vmatprep.mubr.f32.mxu0 %v121
    %1218 = vmatmul.mubr.f32.gmra.mrb[0].mxu0 %v120
    %v1219 = vpop.f32.mrb[0].mxu0
    %v1220 = vadd.f32 %v1149, %v1219
    %v1221 = vpop.f32.mrb[0].mxu0
    %v1222 = vadd.f32 %v1151, %v1221
    %1223 = vdwg.mxu0
    %v1224 = vmax.f32 %v936, 0.0
    %v1225 = vmax.f32 %v938, 0.0
    %v1226 = vmax.f32 %v1220, 0.0
    %v1227 = vmax.f32 %v1222, 0.0
    %v1228 = vld [vmem:[#allocation8] sm:$0xff]
    %v1229 = vld [vmem:[#allocation8 + $0x8] sm:$0xff]
    %v1230 = vld [vmem:[#allocation8 + $0x10] sm:$0xff]
    %v1231 = vld [vmem:[#allocation8 + $0x18] sm:$0xff]
    %v1232 = vld [vmem:[#allocation8 + $0x20] sm:$0xff]
    %v1233 = vld [vmem:[#allocation8 + $0x28] sm:$0xff]
    %v1234 = vld [vmem:[#allocation8 + $0x30] sm:$0xff]
    %v1235 = vld [vmem:[#allocation8 + $0x38] sm:$0xff]
    %v1236 = vld [vmem:[#allocation8 + $0x40] sm:$0xff]
    %v1237 = vld [vmem:[#allocation8 + $0x48] sm:$0xff]
    %v1238 = vld [vmem:[#allocation8 + $0x50] sm:$0xff]
    %v1239 = vld [vmem:[#allocation8 + $0x58] sm:$0xff]
    %v1240 = vld [vmem:[#allocation8 + $0x60] sm:$0xff]
    %v1241 = vld [vmem:[#allocation8 + $0x68] sm:$0xff]
    %v1242 = vld [vmem:[#allocation8 + $0x70] sm:$0xff]
    %v1243 = vld [vmem:[#allocation8 + $0x78] sm:$0xff]
    %v1244 = vld [vmem:[#allocation8 + $0x80] sm:$0xff]
    %v1245 = vld [vmem:[#allocation8 + $0x88] sm:$0xff]
    %v1246 = vld [vmem:[#allocation8 + $0x90] sm:$0xff]
    %v1247 = vld [vmem:[#allocation8 + $0x98] sm:$0xff]
    %v1248 = vld [vmem:[#allocation8 + $0xa0] sm:$0xff]
    %v1249 = vld [vmem:[#allocation8 + $0xa8] sm:$0xff]
    %v1250 = vld [vmem:[#allocation8 + $0xb0] sm:$0xff]
    %v1251 = vld [vmem:[#allocation8 + $0xb8] sm:$0xff]
    %v1252 = vld [vmem:[#allocation8 + $0xc0] sm:$0xff]
    %v1253 = vld [vmem:[#allocation8 + $0xc8] sm:$0xff]
    %v1254 = vld [vmem:[#allocation8 + $0xd0] sm:$0xff]
    %v1255 = vld [vmem:[#allocation8 + $0xd8] sm:$0xff]
    %v1256 = vld [vmem:[#allocation8 + $0xe0] sm:$0xff]
    %v1257 = vld [vmem:[#allocation8 + $0xe8] sm:$0xff]
    %v1258 = vld [vmem:[#allocation8 + $0xf0] sm:$0xff]
    %v1259 = vld [vmem:[#allocation8 + $0xf8] sm:$0xff]
    %v1260 = vld [vmem:[#allocation8 + $0x100] sm:$0xff]
    %v1261 = vld [vmem:[#allocation8 + $0x108] sm:$0xff]
    %v1262 = vld [vmem:[#allocation8 + $0x110] sm:$0xff]
    %v1263 = vld [vmem:[#allocation8 + $0x118] sm:$0xff]
    %v1264 = vld [vmem:[#allocation8 + $0x120] sm:$0xff]
    %v1265 = vld [vmem:[#allocation8 + $0x128] sm:$0xff]
    %v1266 = vld [vmem:[#allocation8 + $0x130] sm:$0xff]
    %v1267 = vld [vmem:[#allocation8 + $0x138] sm:$0xff]
    %v1268 = vld [vmem:[#allocation8 + $0x140] sm:$0xff]
    %v1269 = vld [vmem:[#allocation8 + $0x148] sm:$0xff]
    %v1270 = vld [vmem:[#allocation8 + $0x150] sm:$0xff]
    %v1271 = vld [vmem:[#allocation8 + $0x158] sm:$0xff]
    %v1272 = vld [vmem:[#allocation8 + $0x160] sm:$0xff]
    %v1273 = vld [vmem:[#allocation8 + $0x168] sm:$0xff]
    %v1274 = vld [vmem:[#allocation8 + $0x170] sm:$0xff]
    %v1275 = vld [vmem:[#allocation8 + $0x178] sm:$0xff]
    %v1276 = vld [vmem:[#allocation8 + $0x180] sm:$0xff]
    %v1277 = vld [vmem:[#allocation8 + $0x188] sm:$0xff]
    %v1278 = vld [vmem:[#allocation8 + $0x190] sm:$0xff]
    %v1279 = vld [vmem:[#allocation8 + $0x198] sm:$0xff]
    %v1280 = vld [vmem:[#allocation8 + $0x1a0] sm:$0xff]
    %v1281 = vld [vmem:[#allocation8 + $0x1a8] sm:$0xff]
    %v1282 = vld [vmem:[#allocation8 + $0x1b0] sm:$0xff]
    %v1283 = vld [vmem:[#allocation8 + $0x1b8] sm:$0xff]
    %v1284 = vld [vmem:[#allocation8 + $0x1c0] sm:$0xff]
    %v1285 = vld [vmem:[#allocation8 + $0x1c8] sm:$0xff]
    %v1286 = vld [vmem:[#allocation8 + $0x1d0] sm:$0xff]
    %v1287 = vld [vmem:[#allocation8 + $0x1d8] sm:$0xff]
    %v1288 = vld [vmem:[#allocation8 + $0x1e0] sm:$0xff]
    %v1289 = vld [vmem:[#allocation8 + $0x1e8] sm:$0xff]
    %v1290 = vld [vmem:[#allocation8 + $0x1f0] sm:$0xff]
    %v1291 = vld [vmem:[#allocation8 + $0x1f8] sm:$0xff]
    %v1292 = vld [vmem:[#allocation8 + $0x200] sm:$0xff]
    %v1293 = vld [vmem:[#allocation8 + $0x208] sm:$0xff]
    %v1294 = vld [vmem:[#allocation8 + $0x210] sm:$0xff]
    %v1295 = vld [vmem:[#allocation8 + $0x218] sm:$0xff]
    %v1296 = vld [vmem:[#allocation8 + $0x220] sm:$0xff]
    %v1297 = vld [vmem:[#allocation8 + $0x228] sm:$0xff]
    %v1298 = vld [vmem:[#allocation8 + $0x230] sm:$0xff]
    %v1299 = vld [vmem:[#allocation8 + $0x238] sm:$0xff]
    %v1300 = vld [vmem:[#allocation8 + $0x240] sm:$0xff]
    %v1301 = vld [vmem:[#allocation8 + $0x248] sm:$0xff]
    %v1302 = vld [vmem:[#allocation8 + $0x250] sm:$0xff]
    %v1303 = vld [vmem:[#allocation8 + $0x258] sm:$0xff]
    %v1304 = vld [vmem:[#allocation8 + $0x260] sm:$0xff]
    %v1305 = vld [vmem:[#allocation8 + $0x268] sm:$0xff]
    %v1306 = vld [vmem:[#allocation8 + $0x270] sm:$0xff]
    %v1307 = vld [vmem:[#allocation8 + $0x278] sm:$0xff]
    %v1308 = vld [vmem:[#allocation8 + $0x280] sm:$0xff]
    %v1309 = vld [vmem:[#allocation8 + $0x288] sm:$0xff]
    %v1310 = vld [vmem:[#allocation8 + $0x290] sm:$0xff]
    %v1311 = vld [vmem:[#allocation8 + $0x298] sm:$0xff]
    %v1312 = vld [vmem:[#allocation8 + $0x2a0] sm:$0xff]
    %v1313 = vld [vmem:[#allocation8 + $0x2a8] sm:$0xff]
    %v1314 = vld [vmem:[#allocation8 + $0x2b0] sm:$0xff]
    %v1315 = vld [vmem:[#allocation8 + $0x2b8] sm:$0xff]
    %v1316 = vld [vmem:[#allocation8 + $0x2c0] sm:$0xff]
    %v1317 = vld [vmem:[#allocation8 + $0x2c8] sm:$0xff]
    %v1318 = vld [vmem:[#allocation8 + $0x2d0] sm:$0xff]
    %v1319 = vld [vmem:[#allocation8 + $0x2d8] sm:$0xff]
    %v1320 = vld [vmem:[#allocation8 + $0x2e0] sm:$0xff]
    %v1321 = vld [vmem:[#allocation8 + $0x2e8] sm:$0xff]
    %v1322 = vld [vmem:[#allocation8 + $0x2f0] sm:$0xff]
    %v1323 = vld [vmem:[#allocation8 + $0x2f8] sm:$0xff]
    %v1324 = vld [vmem:[#allocation8 + $0x300] sm:$0xff]
    %v1325 = vld [vmem:[#allocation8 + $0x308] sm:$0xff]
    %v1326 = vld [vmem:[#allocation8 + $0x310] sm:$0xff]
    %v1327 = vld [vmem:[#allocation8 + $0x318] sm:$0xff]
    %v1328 = vld [vmem:[#allocation8 + $0x320] sm:$0xff]
    %v1329 = vld [vmem:[#allocation8 + $0x328] sm:$0xff]
    %v1330 = vld [vmem:[#allocation8 + $0x330] sm:$0xff]
    %v1331 = vld [vmem:[#allocation8 + $0x338] sm:$0xff]
    %v1332 = vld [vmem:[#allocation8 + $0x340] sm:$0xff]
    %v1333 = vld [vmem:[#allocation8 + $0x348] sm:$0xff]
    %v1334 = vld [vmem:[#allocation8 + $0x350] sm:$0xff]
    %v1335 = vld [vmem:[#allocation8 + $0x358] sm:$0xff]
    %v1336 = vld [vmem:[#allocation8 + $0x360] sm:$0xff]
    %v1337 = vld [vmem:[#allocation8 + $0x368] sm:$0xff]
    %v1338 = vld [vmem:[#allocation8 + $0x370] sm:$0xff]
    %v1339 = vld [vmem:[#allocation8 + $0x378] sm:$0xff]
    %v1340 = vld [vmem:[#allocation8 + $0x380] sm:$0xff]
    %v1341 = vld [vmem:[#allocation8 + $0x388] sm:$0xff]
    %v1342 = vld [vmem:[#allocation8 + $0x390] sm:$0xff]
    %v1343 = vld [vmem:[#allocation8 + $0x398] sm:$0xff]
    %v1344 = vld [vmem:[#allocation8 + $0x3a0] sm:$0xff]
    %v1345 = vld [vmem:[#allocation8 + $0x3a8] sm:$0xff]
    %v1346 = vld [vmem:[#allocation8 + $0x3b0] sm:$0xff]
    %v1347 = vld [vmem:[#allocation8 + $0x3b8] sm:$0xff]
    %v1348 = vld [vmem:[#allocation8 + $0x3c0] sm:$0xff]
    %v1349 = vld [vmem:[#allocation8 + $0x3c8] sm:$0xff]
    %v1350 = vld [vmem:[#allocation8 + $0x3d0] sm:$0xff]
    %v1351 = vld [vmem:[#allocation8 + $0x3d8] sm:$0xff]
    %v1352 = vld [vmem:[#allocation8 + $0x3e0] sm:$0xff]
    %v1353 = vld [vmem:[#allocation8 + $0x3e8] sm:$0xff]
    %v1354 = vld [vmem:[#allocation8 + $0x3f0] sm:$0xff]
    %v1355 = vld [vmem:[#allocation8 + $0x3f8] sm:$0xff]
    %v1356 = vld [vmem:[#allocation8 + $0x400] sm:$0xff]
    %v1357 = vld [vmem:[#allocation8 + $0x408] sm:$0xff]
    %v1358 = vld [vmem:[#allocation8 + $0x410] sm:$0xff]
    %v1359 = vld [vmem:[#allocation8 + $0x418] sm:$0xff]
    %v1360 = vld [vmem:[#allocation8 + $0x420] sm:$0xff]
    %v1361 = vld [vmem:[#allocation8 + $0x428] sm:$0xff]
    %v1362 = vld [vmem:[#allocation8 + $0x430] sm:$0xff]
    %v1363 = vld [vmem:[#allocation8 + $0x438] sm:$0xff]
    %v1364 = vld [vmem:[#allocation8 + $0x440] sm:$0xff]
    %v1365 = vld [vmem:[#allocation8 + $0x448] sm:$0xff]
    %v1366 = vld [vmem:[#allocation8 + $0x450] sm:$0xff]
    %v1367 = vld [vmem:[#allocation8 + $0x458] sm:$0xff]
    %v1368 = vld [vmem:[#allocation8 + $0x460] sm:$0xff]
    %v1369 = vld [vmem:[#allocation8 + $0x468] sm:$0xff]
    %v1370 = vld [vmem:[#allocation8 + $0x470] sm:$0xff]
    %v1371 = vld [vmem:[#allocation8 + $0x478] sm:$0xff]
    %v1372 = vld [vmem:[#allocation8 + $0x480] sm:$0xff]
    %v1373 = vld [vmem:[#allocation8 + $0x488] sm:$0xff]
    %v1374 = vld [vmem:[#allocation8 + $0x490] sm:$0xff]
    %v1375 = vld [vmem:[#allocation8 + $0x498] sm:$0xff]
    %v1376 = vld [vmem:[#allocation8 + $0x4a0] sm:$0xff]
    %v1377 = vld [vmem:[#allocation8 + $0x4a8] sm:$0xff]
    %v1378 = vld [vmem:[#allocation8 + $0x4b0] sm:$0xff]
    %v1379 = vld [vmem:[#allocation8 + $0x4b8] sm:$0xff]
    %v1380 = vld [vmem:[#allocation8 + $0x4c0] sm:$0xff]
    %v1381 = vld [vmem:[#allocation8 + $0x4c8] sm:$0xff]
    %v1382 = vld [vmem:[#allocation8 + $0x4d0] sm:$0xff]
    %v1383 = vld [vmem:[#allocation8 + $0x4d8] sm:$0xff]
    %v1384 = vld [vmem:[#allocation8 + $0x4e0] sm:$0xff]
    %v1385 = vld [vmem:[#allocation8 + $0x4e8] sm:$0xff]
    %v1386 = vld [vmem:[#allocation8 + $0x4f0] sm:$0xff]
    %v1387 = vld [vmem:[#allocation8 + $0x4f8] sm:$0xff]
    %v1388 = vld [vmem:[#allocation8 + $0x500] sm:$0xff]
    %v1389 = vld [vmem:[#allocation8 + $0x508] sm:$0xff]
    %v1390 = vld [vmem:[#allocation8 + $0x510] sm:$0xff]
    %v1391 = vld [vmem:[#allocation8 + $0x518] sm:$0xff]
    %v1392 = vld [vmem:[#allocation8 + $0x520] sm:$0xff]
    %v1393 = vld [vmem:[#allocation8 + $0x528] sm:$0xff]
    %v1394 = vld [vmem:[#allocation8 + $0x530] sm:$0xff]
    %v1395 = vld [vmem:[#allocation8 + $0x538] sm:$0xff]
    %v1396 = vld [vmem:[#allocation8 + $0x540] sm:$0xff]
    %v1397 = vld [vmem:[#allocation8 + $0x548] sm:$0xff]
    %v1398 = vld [vmem:[#allocation8 + $0x550] sm:$0xff]
    %v1399 = vld [vmem:[#allocation8 + $0x558] sm:$0xff]
    %v1400 = vld [vmem:[#allocation8 + $0x560] sm:$0xff]
    %v1401 = vld [vmem:[#allocation8 + $0x568] sm:$0xff]
    %v1402 = vld [vmem:[#allocation8 + $0x570] sm:$0xff]
    %v1403 = vld [vmem:[#allocation8 + $0x578] sm:$0xff]
    %v1404 = vld [vmem:[#allocation8 + $0x580] sm:$0xff]
    %v1405 = vld [vmem:[#allocation8 + $0x588] sm:$0xff]
    %v1406 = vld [vmem:[#allocation8 + $0x590] sm:$0xff]
    %v1407 = vld [vmem:[#allocation8 + $0x598] sm:$0xff]
    %v1408 = vld [vmem:[#allocation8 + $0x5a0] sm:$0xff]
    %v1409 = vld [vmem:[#allocation8 + $0x5a8] sm:$0xff]
    %v1410 = vld [vmem:[#allocation8 + $0x5b0] sm:$0xff]
    %v1411 = vld [vmem:[#allocation8 + $0x5b8] sm:$0xff]
    %v1412 = vld [vmem:[#allocation8 + $0x5c0] sm:$0xff]
    %v1413 = vld [vmem:[#allocation8 + $0x5c8] sm:$0xff]
    %v1414 = vld [vmem:[#allocation8 + $0x5d0] sm:$0xff]
    %v1415 = vld [vmem:[#allocation8 + $0x5d8] sm:$0xff]
    %v1416 = vld [vmem:[#allocation8 + $0x5e0] sm:$0xff]
    %v1417 = vld [vmem:[#allocation8 + $0x5e8] sm:$0xff]
    %v1418 = vld [vmem:[#allocation8 + $0x5f0] sm:$0xff]
    %v1419 = vld [vmem:[#allocation8 + $0x5f8] sm:$0xff]
    %v1420 = vld [vmem:[#allocation8 + $0x600] sm:$0xff]
    %v1421 = vld [vmem:[#allocation8 + $0x608] sm:$0xff]
    %v1422 = vld [vmem:[#allocation8 + $0x610] sm:$0xff]
    %v1423 = vld [vmem:[#allocation8 + $0x618] sm:$0xff]
    %v1424 = vld [vmem:[#allocation8 + $0x620] sm:$0xff]
    %v1425 = vld [vmem:[#allocation8 + $0x628] sm:$0xff]
    %v1426 = vld [vmem:[#allocation8 + $0x630] sm:$0xff]
    %v1427 = vld [vmem:[#allocation8 + $0x638] sm:$0xff]
    %v1428 = vld [vmem:[#allocation8 + $0x640] sm:$0xff]
    %v1429 = vld [vmem:[#allocation8 + $0x648] sm:$0xff]
    %v1430 = vld [vmem:[#allocation8 + $0x650] sm:$0xff]
    %v1431 = vld [vmem:[#allocation8 + $0x658] sm:$0xff]
    %v1432 = vld [vmem:[#allocation8 + $0x660] sm:$0xff]
    %v1433 = vld [vmem:[#allocation8 + $0x668] sm:$0xff]
    %v1434 = vld [vmem:[#allocation8 + $0x670] sm:$0xff]
    %v1435 = vld [vmem:[#allocation8 + $0x678] sm:$0xff]
    %v1436 = vld [vmem:[#allocation8 + $0x680] sm:$0xff]
    %v1437 = vld [vmem:[#allocation8 + $0x688] sm:$0xff]
    %v1438 = vld [vmem:[#allocation8 + $0x690] sm:$0xff]
    %v1439 = vld [vmem:[#allocation8 + $0x698] sm:$0xff]
    %v1440 = vld [vmem:[#allocation8 + $0x6a0] sm:$0xff]
    %v1441 = vld [vmem:[#allocation8 + $0x6a8] sm:$0xff]
    %v1442 = vld [vmem:[#allocation8 + $0x6b0] sm:$0xff]
    %v1443 = vld [vmem:[#allocation8 + $0x6b8] sm:$0xff]
    %v1444 = vld [vmem:[#allocation8 + $0x6c0] sm:$0xff]
    %v1445 = vld [vmem:[#allocation8 + $0x6c8] sm:$0xff]
    %v1446 = vld [vmem:[#allocation8 + $0x6d0] sm:$0xff]
    %v1447 = vld [vmem:[#allocation8 + $0x6d8] sm:$0xff]
    %v1448 = vld [vmem:[#allocation8 + $0x6e0] sm:$0xff]
    %v1449 = vld [vmem:[#allocation8 + $0x6e8] sm:$0xff]
    %v1450 = vld [vmem:[#allocation8 + $0x6f0] sm:$0xff]
    %v1451 = vld [vmem:[#allocation8 + $0x6f8] sm:$0xff]
    %v1452 = vld [vmem:[#allocation8 + $0x700] sm:$0xff]
    %v1453 = vld [vmem:[#allocation8 + $0x708] sm:$0xff]
    %v1454 = vld [vmem:[#allocation8 + $0x710] sm:$0xff]
    %v1455 = vld [vmem:[#allocation8 + $0x718] sm:$0xff]
    %v1456 = vld [vmem:[#allocation8 + $0x720] sm:$0xff]
    %v1457 = vld [vmem:[#allocation8 + $0x728] sm:$0xff]
    %v1458 = vld [vmem:[#allocation8 + $0x730] sm:$0xff]
    %v1459 = vld [vmem:[#allocation8 + $0x738] sm:$0xff]
    %v1460 = vld [vmem:[#allocation8 + $0x740] sm:$0xff]
    %v1461 = vld [vmem:[#allocation8 + $0x748] sm:$0xff]
    %v1462 = vld [vmem:[#allocation8 + $0x750] sm:$0xff]
    %v1463 = vld [vmem:[#allocation8 + $0x758] sm:$0xff]
    %v1464 = vld [vmem:[#allocation8 + $0x760] sm:$0xff]
    %v1465 = vld [vmem:[#allocation8 + $0x768] sm:$0xff]
    %v1466 = vld [vmem:[#allocation8 + $0x770] sm:$0xff]
    %v1467 = vld [vmem:[#allocation8 + $0x778] sm:$0xff]
    %v1468 = vld [vmem:[#allocation8 + $0x780] sm:$0xff]
    %v1469 = vld [vmem:[#allocation8 + $0x788] sm:$0xff]
    %v1470 = vld [vmem:[#allocation8 + $0x790] sm:$0xff]
    %v1471 = vld [vmem:[#allocation8 + $0x798] sm:$0xff]
    %v1472 = vld [vmem:[#allocation8 + $0x7a0] sm:$0xff]
    %v1473 = vld [vmem:[#allocation8 + $0x7a8] sm:$0xff]
    %v1474 = vld [vmem:[#allocation8 + $0x7b0] sm:$0xff]
    %v1475 = vld [vmem:[#allocation8 + $0x7b8] sm:$0xff]
    %v1476 = vld [vmem:[#allocation8 + $0x7c0] sm:$0xff]
    %v1477 = vld [vmem:[#allocation8 + $0x7c8] sm:$0xff]
    %v1478 = vld [vmem:[#allocation8 + $0x7d0] sm:$0xff]
    %v1479 = vld [vmem:[#allocation8 + $0x7d8] sm:$0xff]
    %v1480 = vld [vmem:[#allocation8 + $0x7e0] sm:$0xff]
    %v1481 = vld [vmem:[#allocation8 + $0x7e8] sm:$0xff]
    %v1482 = vld [vmem:[#allocation8 + $0x7f0] sm:$0xff]
    %v1483 = vld [vmem:[#allocation8 + $0x7f8] sm:$0xff]
    %v1484 = vld [vmem:[#allocation8 + $0x800] sm:$0xff]
    %v1485 = vld [vmem:[#allocation8 + $0x808] sm:$0xff]
    %v1486 = vld [vmem:[#allocation8 + $0x810] sm:$0xff]
    %v1487 = vld [vmem:[#allocation8 + $0x818] sm:$0xff]
    %v1488 = vld [vmem:[#allocation8 + $0x820] sm:$0xff]
    %v1489 = vld [vmem:[#allocation8 + $0x828] sm:$0xff]
    %v1490 = vld [vmem:[#allocation8 + $0x830] sm:$0xff]
    %v1491 = vld [vmem:[#allocation8 + $0x838] sm:$0xff]
    %v1492 = vld [vmem:[#allocation8 + $0x840] sm:$0xff]
    %v1493 = vld [vmem:[#allocation8 + $0x848] sm:$0xff]
    %v1494 = vld [vmem:[#allocation8 + $0x850] sm:$0xff]
    %v1495 = vld [vmem:[#allocation8 + $0x858] sm:$0xff]
    %v1496 = vld [vmem:[#allocation8 + $0x860] sm:$0xff]
    %v1497 = vld [vmem:[#allocation8 + $0x868] sm:$0xff]
    %v1498 = vld [vmem:[#allocation8 + $0x870] sm:$0xff]
    %v1499 = vld [vmem:[#allocation8 + $0x878] sm:$0xff]
    %v1500 = vld [vmem:[#allocation8 + $0x880] sm:$0xff]
    %v1501 = vld [vmem:[#allocation8 + $0x888] sm:$0xff]
    %v1502 = vld [vmem:[#allocation8 + $0x890] sm:$0xff]
    %v1503 = vld [vmem:[#allocation8 + $0x898] sm:$0xff]
    %v1504 = vld [vmem:[#allocation8 + $0x8a0] sm:$0xff]
    %v1505 = vld [vmem:[#allocation8 + $0x8a8] sm:$0xff]
    %v1506 = vld [vmem:[#allocation8 + $0x8b0] sm:$0xff]
    %v1507 = vld [vmem:[#allocation8 + $0x8b8] sm:$0xff]
    %v1508 = vld [vmem:[#allocation8 + $0x8c0] sm:$0xff]
    %v1509 = vld [vmem:[#allocation8 + $0x8c8] sm:$0xff]
    %v1510 = vld [vmem:[#allocation8 + $0x8d0] sm:$0xff]
    %v1511 = vld [vmem:[#allocation8 + $0x8d8] sm:$0xff]
    %v1512 = vld [vmem:[#allocation8 + $0x8e0] sm:$0xff]
    %v1513 = vld [vmem:[#allocation8 + $0x8e8] sm:$0xff]
    %v1514 = vld [vmem:[#allocation8 + $0x8f0] sm:$0xff]
    %v1515 = vld [vmem:[#allocation8 + $0x8f8] sm:$0xff]
    %v1516 = vld [vmem:[#allocation8 + $0x900] sm:$0xff]
    %v1517 = vld [vmem:[#allocation8 + $0x908] sm:$0xff]
    %v1518 = vld [vmem:[#allocation8 + $0x910] sm:$0xff]
    %v1519 = vld [vmem:[#allocation8 + $0x918] sm:$0xff]
    %v1520 = vld [vmem:[#allocation8 + $0x920] sm:$0xff]
    %v1521 = vld [vmem:[#allocation8 + $0x928] sm:$0xff]
    %v1522 = vld [vmem:[#allocation8 + $0x930] sm:$0xff]
    %v1523 = vld [vmem:[#allocation8 + $0x938] sm:$0xff]
    %v1524 = vld [vmem:[#allocation8 + $0x940] sm:$0xff]
    %v1525 = vld [vmem:[#allocation8 + $0x948] sm:$0xff]
    %v1526 = vld [vmem:[#allocation8 + $0x950] sm:$0xff]
    %v1527 = vld [vmem:[#allocation8 + $0x958] sm:$0xff]
    %v1528 = vld [vmem:[#allocation8 + $0x960] sm:$0xff]
    %v1529 = vld [vmem:[#allocation8 + $0x968] sm:$0xff]
    %v1530 = vld [vmem:[#allocation8 + $0x970] sm:$0xff]
    %v1531 = vld [vmem:[#allocation8 + $0x978] sm:$0xff]
    %v1532 = vld [vmem:[#allocation8 + $0x980] sm:$0xff]
    %v1533 = vld [vmem:[#allocation8 + $0x988] sm:$0xff]
    %v1534 = vld [vmem:[#allocation8 + $0x990] sm:$0xff]
    %v1535 = vld [vmem:[#allocation8 + $0x998] sm:$0xff]
    %v1536 = vld [vmem:[#allocation8 + $0x9a0] sm:$0xff]
    %v1537 = vld [vmem:[#allocation8 + $0x9a8] sm:$0xff]
    %v1538 = vld [vmem:[#allocation8 + $0x9b0] sm:$0xff]
    %v1539 = vld [vmem:[#allocation8 + $0x9b8] sm:$0xff]
    %v1540 = vld [vmem:[#allocation8 + $0x9c0] sm:$0xff]
    %v1541 = vld [vmem:[#allocation8 + $0x9c8] sm:$0xff]
    %v1542 = vld [vmem:[#allocation8 + $0x9d0] sm:$0xff]
    %v1543 = vld [vmem:[#allocation8 + $0x9d8] sm:$0xff]
    %v1544 = vld [vmem:[#allocation8 + $0x9e0] sm:$0xff]
    %v1545 = vld [vmem:[#allocation8 + $0x9e8] sm:$0xff]
    %v1546 = vld [vmem:[#allocation8 + $0x9f0] sm:$0xff]
    %v1547 = vld [vmem:[#allocation8 + $0x9f8] sm:$0xff]
    %v1548 = vld [vmem:[#allocation8 + $0xa00] sm:$0xff]
    %v1549 = vld [vmem:[#allocation8 + $0xa08] sm:$0xff]
    %v1550 = vld [vmem:[#allocation8 + $0xa10] sm:$0xff]
    %v1551 = vld [vmem:[#allocation8 + $0xa18] sm:$0xff]
    %v1552 = vld [vmem:[#allocation8 + $0xa20] sm:$0xff]
    %v1553 = vld [vmem:[#allocation8 + $0xa28] sm:$0xff]
    %v1554 = vld [vmem:[#allocation8 + $0xa30] sm:$0xff]
    %v1555 = vld [vmem:[#allocation8 + $0xa38] sm:$0xff]
    %v1556 = vld [vmem:[#allocation8 + $0xa40] sm:$0xff]
    %v1557 = vld [vmem:[#allocation8 + $0xa48] sm:$0xff]
    %v1558 = vld [vmem:[#allocation8 + $0xa50] sm:$0xff]
    %v1559 = vld [vmem:[#allocation8 + $0xa58] sm:$0xff]
    %v1560 = vld [vmem:[#allocation8 + $0xa60] sm:$0xff]
    %v1561 = vld [vmem:[#allocation8 + $0xa68] sm:$0xff]
    %v1562 = vld [vmem:[#allocation8 + $0xa70] sm:$0xff]
    %v1563 = vld [vmem:[#allocation8 + $0xa78] sm:$0xff]
    %v1564 = vld [vmem:[#allocation8 + $0xa80] sm:$0xff]
    %v1565 = vld [vmem:[#allocation8 + $0xa88] sm:$0xff]
    %v1566 = vld [vmem:[#allocation8 + $0xa90] sm:$0xff]
    %v1567 = vld [vmem:[#allocation8 + $0xa98] sm:$0xff]
    %v1568 = vld [vmem:[#allocation8 + $0xaa0] sm:$0xff]
    %v1569 = vld [vmem:[#allocation8 + $0xaa8] sm:$0xff]
    %v1570 = vld [vmem:[#allocation8 + $0xab0] sm:$0xff]
    %v1571 = vld [vmem:[#allocation8 + $0xab8] sm:$0xff]
    %v1572 = vld [vmem:[#allocation8 + $0xac0] sm:$0xff]
    %v1573 = vld [vmem:[#allocation8 + $0xac8] sm:$0xff]
    %v1574 = vld [vmem:[#allocation8 + $0xad0] sm:$0xff]
    %v1575 = vld [vmem:[#allocation8 + $0xad8] sm:$0xff]
    %v1576 = vld [vmem:[#allocation8 + $0xae0] sm:$0xff]
    %v1577 = vld [vmem:[#allocation8 + $0xae8] sm:$0xff]
    %v1578 = vld [vmem:[#allocation8 + $0xaf0] sm:$0xff]
    %v1579 = vld [vmem:[#allocation8 + $0xaf8] sm:$0xff]
    %v1580 = vld [vmem:[#allocation8 + $0xb00] sm:$0xff]
    %v1581 = vld [vmem:[#allocation8 + $0xb08] sm:$0xff]
    %v1582 = vld [vmem:[#allocation8 + $0xb10] sm:$0xff]
    %v1583 = vld [vmem:[#allocation8 + $0xb18] sm:$0xff]
    %v1584 = vld [vmem:[#allocation8 + $0xb20] sm:$0xff]
    %v1585 = vld [vmem:[#allocation8 + $0xb28] sm:$0xff]
    %v1586 = vld [vmem:[#allocation8 + $0xb30] sm:$0xff]
    %v1587 = vld [vmem:[#allocation8 + $0xb38] sm:$0xff]
    %v1588 = vld [vmem:[#allocation8 + $0xb40] sm:$0xff]
    %v1589 = vld [vmem:[#allocation8 + $0xb48] sm:$0xff]
    %v1590 = vld [vmem:[#allocation8 + $0xb50] sm:$0xff]
    %v1591 = vld [vmem:[#allocation8 + $0xb58] sm:$0xff]
    %v1592 = vld [vmem:[#allocation8 + $0xb60] sm:$0xff]
    %v1593 = vld [vmem:[#allocation8 + $0xb68] sm:$0xff]
    %v1594 = vld [vmem:[#allocation8 + $0xb70] sm:$0xff]
    %v1595 = vld [vmem:[#allocation8 + $0xb78] sm:$0xff]
    %v1596 = vld [vmem:[#allocation8 + $0xb80] sm:$0xff]
    %v1597 = vld [vmem:[#allocation8 + $0xb88] sm:$0xff]
    %v1598 = vld [vmem:[#allocation8 + $0xb90] sm:$0xff]
    %v1599 = vld [vmem:[#allocation8 + $0xb98] sm:$0xff]
    %v1600 = vld [vmem:[#allocation8 + $0xba0] sm:$0xff]
    %v1601 = vld [vmem:[#allocation8 + $0xba8] sm:$0xff]
    %v1602 = vld [vmem:[#allocation8 + $0xbb0] sm:$0xff]
    %v1603 = vld [vmem:[#allocation8 + $0xbb8] sm:$0xff]
    %v1604 = vld [vmem:[#allocation8 + $0xbc0] sm:$0xff]
    %v1605 = vld [vmem:[#allocation8 + $0xbc8] sm:$0xff]
    %v1606 = vld [vmem:[#allocation8 + $0xbd0] sm:$0xff]
    %v1607 = vld [vmem:[#allocation8 + $0xbd8] sm:$0xff]
    %v1608 = vld [vmem:[#allocation8 + $0xbe0] sm:$0xff]
    %v1609 = vld [vmem:[#allocation8 + $0xbe8] sm:$0xff]
    %v1610 = vld [vmem:[#allocation8 + $0xbf0] sm:$0xff]
    %v1611 = vld [vmem:[#allocation8 + $0xbf8] sm:$0xff]
    %v1612 = vld [vmem:[#allocation8 + $0xc00] sm:$0xff]
    %v1613 = vld [vmem:[#allocation8 + $0xc08] sm:$0xff]
    %v1614 = vld [vmem:[#allocation8 + $0xc10] sm:$0xff]
    %v1615 = vld [vmem:[#allocation8 + $0xc18] sm:$0xff]
    %v1616 = vld [vmem:[#allocation8 + $0xc20] sm:$0xff]
    %v1617 = vld [vmem:[#allocation8 + $0xc28] sm:$0xff]
    %v1618 = vld [vmem:[#allocation8 + $0xc30] sm:$0xff]
    %v1619 = vld [vmem:[#allocation8 + $0xc38] sm:$0xff]
    %v1620 = vld [vmem:[#allocation8 + $0xc40] sm:$0xff]
    %v1621 = vld [vmem:[#allocation8 + $0xc48] sm:$0xff]
    %v1622 = vld [vmem:[#allocation8 + $0xc50] sm:$0xff]
    %v1623 = vld [vmem:[#allocation8 + $0xc58] sm:$0xff]
    %v1624 = vld [vmem:[#allocation8 + $0xc60] sm:$0xff]
    %v1625 = vld [vmem:[#allocation8 + $0xc68] sm:$0xff]
    %v1626 = vld [vmem:[#allocation8 + $0xc70] sm:$0xff]
    %v1627 = vld [vmem:[#allocation8 + $0xc78] sm:$0xff]
    %v1628 = vld [vmem:[#allocation8 + $0xc80] sm:$0xff]
    %v1629 = vld [vmem:[#allocation8 + $0xc88] sm:$0xff]
    %v1630 = vld [vmem:[#allocation8 + $0xc90] sm:$0xff]
    %v1631 = vld [vmem:[#allocation8 + $0xc98] sm:$0xff]
    %v1632 = vld [vmem:[#allocation8 + $0xca0] sm:$0xff]
    %v1633 = vld [vmem:[#allocation8 + $0xca8] sm:$0xff]
    %v1634 = vld [vmem:[#allocation8 + $0xcb0] sm:$0xff]
    %v1635 = vld [vmem:[#allocation8 + $0xcb8] sm:$0xff]
    %v1636 = vld [vmem:[#allocation8 + $0xcc0] sm:$0xff]
    %v1637 = vld [vmem:[#allocation8 + $0xcc8] sm:$0xff]
    %v1638 = vld [vmem:[#allocation8 + $0xcd0] sm:$0xff]
    %v1639 = vld [vmem:[#allocation8 + $0xcd8] sm:$0xff]
    %v1640 = vld [vmem:[#allocation8 + $0xce0] sm:$0xff]
    %v1641 = vld [vmem:[#allocation8 + $0xce8] sm:$0xff]
    %v1642 = vld [vmem:[#allocation8 + $0xcf0] sm:$0xff]
    %v1643 = vld [vmem:[#allocation8 + $0xcf8] sm:$0xff]
    %v1644 = vld [vmem:[#allocation8 + $0xd00] sm:$0xff]
    %v1645 = vld [vmem:[#allocation8 + $0xd08] sm:$0xff]
    %v1646 = vld [vmem:[#allocation8 + $0xd10] sm:$0xff]
    %v1647 = vld [vmem:[#allocation8 + $0xd18] sm:$0xff]
    %v1648 = vld [vmem:[#allocation8 + $0xd20] sm:$0xff]
    %v1649 = vld [vmem:[#allocation8 + $0xd28] sm:$0xff]
    %v1650 = vld [vmem:[#allocation8 + $0xd30] sm:$0xff]
    %v1651 = vld [vmem:[#allocation8 + $0xd38] sm:$0xff]
    %v1652 = vld [vmem:[#allocation8 + $0xd40] sm:$0xff]
    %v1653 = vld [vmem:[#allocation8 + $0xd48] sm:$0xff]
    %v1654 = vld [vmem:[#allocation8 + $0xd50] sm:$0xff]
    %v1655 = vld [vmem:[#allocation8 + $0xd58] sm:$0xff]
    %v1656 = vld [vmem:[#allocation8 + $0xd60] sm:$0xff]
    %v1657 = vld [vmem:[#allocation8 + $0xd68] sm:$0xff]
    %v1658 = vld [vmem:[#allocation8 + $0xd70] sm:$0xff]
    %v1659 = vld [vmem:[#allocation8 + $0xd78] sm:$0xff]
    %v1660 = vld [vmem:[#allocation8 + $0xd80] sm:$0xff]
    %v1661 = vld [vmem:[#allocation8 + $0xd88] sm:$0xff]
    %v1662 = vld [vmem:[#allocation8 + $0xd90] sm:$0xff]
    %v1663 = vld [vmem:[#allocation8 + $0xd98] sm:$0xff]
    %v1664 = vld [vmem:[#allocation8 + $0xda0] sm:$0xff]
    %v1665 = vld [vmem:[#allocation8 + $0xda8] sm:$0xff]
    %v1666 = vld [vmem:[#allocation8 + $0xdb0] sm:$0xff]
    %v1667 = vld [vmem:[#allocation8 + $0xdb8] sm:$0xff]
    %v1668 = vld [vmem:[#allocation8 + $0xdc0] sm:$0xff]
    %v1669 = vld [vmem:[#allocation8 + $0xdc8] sm:$0xff]
    %v1670 = vld [vmem:[#allocation8 + $0xdd0] sm:$0xff]
    %v1671 = vld [vmem:[#allocation8 + $0xdd8] sm:$0xff]
    %v1672 = vld [vmem:[#allocation8 + $0xde0] sm:$0xff]
    %v1673 = vld [vmem:[#allocation8 + $0xde8] sm:$0xff]
    %v1674 = vld [vmem:[#allocation8 + $0xdf0] sm:$0xff]
    %v1675 = vld [vmem:[#allocation8 + $0xdf8] sm:$0xff]
    %v1676 = vld [vmem:[#allocation10] sm:$0xff]
    %v1678 = vlaneseq
    %v1679 = vshrl.u32 %v1678, 7
    %v1680 = vsub.s32 0, %v1679
    %v1681 = vrot.slane %v1676, %v1680
    %v1682 = vlaneseq
    %v1683 = vshrl.u32 %v1682, 7
    %v1684 = vsub.s32 1, %v1683
    %v1685 = vrot.slane %v1676, %v1684
    %v1686 = vlaneseq
    %v1687 = vshrl.u32 %v1686, 7
    %v1688 = vsub.s32 2, %v1687
    %v1689 = vrot.slane %v1676, %v1688
    %v1690 = vlaneseq
    %v1691 = vshrl.u32 %v1690, 7
    %v1692 = vsub.s32 3, %v1691
    %v1693 = vrot.slane %v1676, %v1692
    %v1694 = vlaneseq
    %v1695 = vshrl.u32 %v1694, 7
    %v1696 = vsub.s32 4, %v1695
    %v1697 = vrot.slane %v1676, %v1696
    %v1698 = vlaneseq
    %v1699 = vshrl.u32 %v1698, 7
    %v1700 = vsub.s32 5, %v1699
    %v1701 = vrot.slane %v1676, %v1700
    %v1702 = vlaneseq
    %v1703 = vshrl.u32 %v1702, 7
    %v1704 = vsub.s32 6, %v1703
    %v1705 = vrot.slane %v1676, %v1704
    %1713 = vmatprep.subr.mxu0 %v1229
    %1714 = vmatpush1.msra.mxu0 %v1228
    %1715 = vmatprep.subr.mxu0 %v1236
    %1716 = vmatpush1.msra.mxu0 %v1235
    %1717 = vmatprep.subr.mxu0 %v1243
    %1718 = vmatpush1.msra.mxu0 %v1242
    %1719 = vmatprep.subr.mxu0 %v1250
    %1720 = vmatpush1.msra.mxu0 %v1249
    %1721 = vmatprep.subr.mxu0 %v1257
    %1722 = vmatpush1.msra.mxu0 %v1256
    %1723 = vmatprep.subr.mxu0 %v1264
    %1724 = vmatpush1.msra.mxu0 %v1263
    %1725 = vmatprep.subr.mxu0 %v1271
    %1726 = vmatpush1.msra.mxu0 %v1270
    %1727 = vmatprep.subr.mxu0 %v1278
    %1728 = vmatpush1.msra.mxu0 %v1277
    %1729 = vmatprep.subr.mxu0 %v1285
    %1730 = vmatpush1.msra.mxu0 %v1284
    %1731 = vmatprep.subr.mxu0 %v1292
    %1732 = vmatpush1.msra.mxu0 %v1291
    %1733 = vmatprep.subr.mxu0 %v1299
    %1734 = vmatpush1.msra.mxu0 %v1298
    %1735 = vmatprep.subr.mxu0 %v1306
    %1736 = vmatpush1.msra.mxu0 %v1305
    %1737 = vmatprep.subr.mxu0 %v1313
    %1738 = vmatpush1.msra.mxu0 %v1312
    %1739 = vmatprep.subr.mxu0 %v1320
    %1740 = vmatpush1.msra.mxu0 %v1319
    %1741 = vmatprep.subr.mxu0 %v1327
    %1742 = vmatpush1.msra.mxu0 %v1326
    %1743 = vmatprep.subr.mxu0 %v1334
    %1744 = vmatpush1.msra.mxu0 %v1333
    %1745 = vmatprep.subr.mxu0 %v1341
    %1746 = vmatpush1.msra.mxu0 %v1340
    %1747 = vmatprep.subr.mxu0 %v1348
    %1748 = vmatpush1.msra.mxu0 %v1347
    %1749 = vmatprep.subr.mxu0 %v1355
    %1750 = vmatpush1.msra.mxu0 %v1354
    %1751 = vmatprep.subr.mxu0 %v1362
    %1752 = vmatpush1.msra.mxu0 %v1361
    %1753 = vmatprep.subr.mxu0 %v1369
    %1754 = vmatpush1.msra.mxu0 %v1368
    %1755 = vmatprep.subr.mxu0 %v1376
    %1756 = vmatpush1.msra.mxu0 %v1375
    %1757 = vmatprep.subr.mxu0 %v1383
    %1758 = vmatpush1.msra.mxu0 %v1382
    %1759 = vmatprep.subr.mxu0 %v1390
    %1760 = vmatpush1.msra.mxu0 %v1389
    %1761 = vmatprep.subr.mxu0 %v1397
    %1762 = vmatpush1.msra.mxu0 %v1396
    %1763 = vmatprep.subr.mxu0 %v1404
    %1764 = vmatpush1.msra.mxu0 %v1403
    %1765 = vmatprep.subr.mxu0 %v1411
    %1766 = vmatpush1.msra.mxu0 %v1410
    %1767 = vmatprep.subr.mxu0 %v1418
    %1768 = vmatpush1.msra.mxu0 %v1417
    %1769 = vmatprep.subr.mxu0 %v1425
    %1770 = vmatpush1.msra.mxu0 %v1424
    %1771 = vmatprep.subr.mxu0 %v1432
    %1772 = vmatpush1.msra.mxu0 %v1431
    %1773 = vmatprep.subr.mxu0 %v1439
    %1774 = vmatpush1.msra.mxu0 %v1438
    %1775 = vmatprep.subr.mxu0 %v1446
    %1776 = vmatpush1.msra.mxu0 %v1445
    %1777 = vmatprep.mubr.f32.mxu0 %v1225
    %1778 = vmatmul.mubr.f32.gmra.mrb[0].mxu0 %v1224
    %v1779 = vpop.f32.mrb[0].mxu0
    %v1780 = vadd.f32 %v1681, %v1779
    %v1781 = vpop.f32.mrb[0].mxu0
    %v1782 = vadd.f32 %v1685, %v1781
    %1783 = vdwg.mxu0
    %1784 = vmatprep.subr.mxu0 %v1453
    %1785 = vmatpush1.msra.mxu0 %v1452
    %1786 = vmatprep.subr.mxu0 %v1460
    %1787 = vmatpush1.msra.mxu0 %v1459
    %1788 = vmatprep.subr.mxu0 %v1467
    %1789 = vmatpush1.msra.mxu0 %v1466
    %1790 = vmatprep.subr.mxu0 %v1474
    %1791 = vmatpush1.msra.mxu0 %v1473
    %1792 = vmatprep.subr.mxu0 %v1481
    %1793 = vmatpush1.msra.mxu0 %v1480
    %1794 = vmatprep.subr.mxu0 %v1488
    %1795 = vmatpush1.msra.mxu0 %v1487
    %1796 = vmatprep.subr.mxu0 %v1495
    %1797 = vmatpush1.msra.mxu0 %v1494
    %1798 = vmatprep.subr.mxu0 %v1502
    %1799 = vmatpush1.msra.mxu0 %v1501
    %1800 = vmatprep.subr.mxu0 %v1509
    %1801 = vmatpush1.msra.mxu0 %v1508
    %1802 = vmatprep.subr.mxu0 %v1516
    %1803 = vmatpush1.msra.mxu0 %v1515
    %1804 = vmatprep.subr.mxu0 %v1523
    %1805 = vmatpush1.msra.mxu0 %v1522
    %1806 = vmatprep.subr.mxu0 %v1530
    %1807 = vmatpush1.msra.mxu0 %v1529
    %1808 = vmatprep.subr.mxu0 %v1537
    %1809 = vmatpush1.msra.mxu0 %v1536
    %1810 = vmatprep.subr.mxu0 %v1544
    %1811 = vmatpush1.msra.mxu0 %v1543
    %1812 = vmatprep.subr.mxu0 %v1551
    %1813 = vmatpush1.msra.mxu0 %v1550
    %1814 = vmatprep.subr.mxu0 %v1558
    %1815 = vmatpush1.msra.mxu0 %v1557
    %1816 = vmatprep.subr.mxu0 %v1565
    %1817 = vmatpush1.msra.mxu0 %v1564
    %1818 = vmatprep.subr.mxu0 %v1572
    %1819 = vmatpush1.msra.mxu0 %v1571
    %1820 = vmatprep.subr.mxu0 %v1579
    %1821 = vmatpush1.msra.mxu0 %v1578
    %1822 = vmatprep.subr.mxu0 %v1586
    %1823 = vmatpush1.msra.mxu0 %v1585
    %1824 = vmatprep.subr.mxu0 %v1593
    %1825 = vmatpush1.msra.mxu0 %v1592
    %1826 = vmatprep.subr.mxu0 %v1600
    %1827 = vmatpush1.msra.mxu0 %v1599
    %1828 = vmatprep.subr.mxu0 %v1607
    %1829 = vmatpush1.msra.mxu0 %v1606
    %1830 = vmatprep.subr.mxu0 %v1614
    %1831 = vmatpush1.msra.mxu0 %v1613
    %1832 = vmatprep.subr.mxu0 %v1621
    %1833 = vmatpush1.msra.mxu0 %v1620
    %1834 = vmatprep.subr.mxu0 %v1628
    %1835 = vmatpush1.msra.mxu0 %v1627
    %1836 = vmatprep.subr.mxu0 %v1635
    %1837 = vmatpush1.msra.mxu0 %v1634
    %1838 = vmatprep.subr.mxu0 %v1642
    %1839 = vmatpush1.msra.mxu0 %v1641
    %1840 = vmatprep.subr.mxu0 %v1649
    %1841 = vmatpush1.msra.mxu0 %v1648
    %1842 = vmatprep.subr.mxu0 %v1656
    %1843 = vmatpush1.msra.mxu0 %v1655
    %1844 = vmatprep.subr.mxu0 %v1663
    %1845 = vmatpush1.msra.mxu0 %v1662
    %1846 = vmatprep.subr.mxu0 %v1670
    %1847 = vmatpush1.msra.mxu0 %v1669
    %1848 = vmatprep.mubr.f32.mxu0 %v1227
    %1849 = vmatmul.mubr.f32.gmra.mrb[0].mxu0 %v1226
    %v1850 = vpop.f32.mrb[0].mxu0
    %v1851 = vadd.f32 %v1780, %v1850
    %v1852 = vpop.f32.mrb[0].mxu0
    %v1853 = vadd.f32 %v1782, %v1852
    %1854 = vdwg.mxu0
    %1855 = vmatprep.subr.mxu0 %v1231
    %1856 = vmatpush1.msra.mxu0 %v1230
    %1857 = vmatprep.subr.mxu0 %v1238
    %1858 = vmatpush1.msra.mxu0 %v1237
    %1859 = vmatprep.subr.mxu0 %v1245
    %1860 = vmatpush1.msra.mxu0 %v1244
    %1861 = vmatprep.subr.mxu0 %v1252
    %1862 = vmatpush1.msra.mxu0 %v1251
    %1863 = vmatprep.subr.mxu0 %v1259
    %1864 = vmatpush1.msra.mxu0 %v1258
    %1865 = vmatprep.subr.mxu0 %v1266
    %1866 = vmatpush1.msra.mxu0 %v1265
    %1867 = vmatprep.subr.mxu0 %v1273
    %1868 = vmatpush1.msra.mxu0 %v1272
    %1869 = vmatprep.subr.mxu0 %v1280
    %1870 = vmatpush1.msra.mxu0 %v1279
    %1871 = vmatprep.subr.mxu0 %v1287
    %1872 = vmatpush1.msra.mxu0 %v1286
    %1873 = vmatprep.subr.mxu0 %v1294
    %1874 = vmatpush1.msra.mxu0 %v1293
    %1875 = vmatprep.subr.mxu0 %v1301
    %1876 = vmatpush1.msra.mxu0 %v1300
    %1877 = vmatprep.subr.mxu0 %v1308
    %1878 = vmatpush1.msra.mxu0 %v1307
    %1879 = vmatprep.subr.mxu0 %v1315
    %1880 = vmatpush1.msra.mxu0 %v1314
    %1881 = vmatprep.subr.mxu0 %v1322
    %1882 = vmatpush1.msra.mxu0 %v1321
    %1883 = vmatprep.subr.mxu0 %v1329
    %1884 = vmatpush1.msra.mxu0 %v1328
    %1885 = vmatprep.subr.mxu0 %v1336
    %1886 = vmatpush1.msra.mxu0 %v1335
    %1887 = vmatprep.subr.mxu0 %v1343
    %1888 = vmatpush1.msra.mxu0 %v1342
    %1889 = vmatprep.subr.mxu0 %v1350
    %1890 = vmatpush1.msra.mxu0 %v1349
    %1891 = vmatprep.subr.mxu0 %v1357
    %1892 = vmatpush1.msra.mxu0 %v1356
    %1893 = vmatprep.subr.mxu0 %v1364
    %1894 = vmatpush1.msra.mxu0 %v1363
    %1895 = vmatprep.subr.mxu0 %v1371
    %1896 = vmatpush1.msra.mxu0 %v1370
    %1897 = vmatprep.subr.mxu0 %v1378
    %1898 = vmatpush1.msra.mxu0 %v1377
    %1899 = vmatprep.subr.mxu0 %v1385
    %1900 = vmatpush1.msra.mxu0 %v1384
    %1901 = vmatprep.subr.mxu0 %v1392
    %1902 = vmatpush1.msra.mxu0 %v1391
    %1903 = vmatprep.subr.mxu0 %v1399
    %1904 = vmatpush1.msra.mxu0 %v1398
    %1905 = vmatprep.subr.mxu0 %v1406
    %1906 = vmatpush1.msra.mxu0 %v1405
    %1907 = vmatprep.subr.mxu0 %v1413
    %1908 = vmatpush1.msra.mxu0 %v1412
    %1909 = vmatprep.subr.mxu0 %v1420
    %1910 = vmatpush1.msra.mxu0 %v1419
    %1911 = vmatprep.subr.mxu0 %v1427
    %1912 = vmatpush1.msra.mxu0 %v1426
    %1913 = vmatprep.subr.mxu0 %v1434
    %1914 = vmatpush1.msra.mxu0 %v1433
    %1915 = vmatprep.subr.mxu0 %v1441
    %1916 = vmatpush1.msra.mxu0 %v1440
    %1917 = vmatprep.subr.mxu0 %v1448
    %1918 = vmatpush1.msra.mxu0 %v1447
    %1919 = vmatprep.mubr.f32.mxu0 %v1225
    %1920 = vmatmul.mubr.f32.gmra.mrb[0].mxu0 %v1224
    %v1921 = vpop.f32.mrb[0].mxu0
    %v1922 = vadd.f32 %v1689, %v1921
    %v1923 = vpop.f32.mrb[0].mxu0
    %v1924 = vadd.f32 %v1693, %v1923
    %1925 = vdwg.mxu0
    %1926 = vmatprep.subr.mxu0 %v1455
    %1927 = vmatpush1.msra.mxu0 %v1454
    %1928 = vmatprep.subr.mxu0 %v1462
    %1929 = vmatpush1.msra.mxu0 %v1461
    %1930 = vmatprep.subr.mxu0 %v1469
    %1931 = vmatpush1.msra.mxu0 %v1468
    %1932 = vmatprep.subr.mxu0 %v1476
    %1933 = vmatpush1.msra.mxu0 %v1475
    %1934 = vmatprep.subr.mxu0 %v1483
    %1935 = vmatpush1.msra.mxu0 %v1482
    %1936 = vmatprep.subr.mxu0 %v1490
    %1937 = vmatpush1.msra.mxu0 %v1489
    %1938 = vmatprep.subr.mxu0 %v1497
    %1939 = vmatpush1.msra.mxu0 %v1496
    %1940 = vmatprep.subr.mxu0 %v1504
    %1941 = vmatpush1.msra.mxu0 %v1503
    %1942 = vmatprep.subr.mxu0 %v1511
    %1943 = vmatpush1.msra.mxu0 %v1510
    %1944 = vmatprep.subr.mxu0 %v1518
    %1945 = vmatpush1.msra.mxu0 %v1517
    %1946 = vmatprep.subr.mxu0 %v1525
    %1947 = vmatpush1.msra.mxu0 %v1524
    %1948 = vmatprep.subr.mxu0 %v1532
    %1949 = vmatpush1.msra.mxu0 %v1531
    %1950 = vmatprep.subr.mxu0 %v1539
    %1951 = vmatpush1.msra.mxu0 %v1538
    %1952 = vmatprep.subr.mxu0 %v1546
    %1953 = vmatpush1.msra.mxu0 %v1545
    %1954 = vmatprep.subr.mxu0 %v1553
    %1955 = vmatpush1.msra.mxu0 %v1552
    %1956 = vmatprep.subr.mxu0 %v1560
    %1957 = vmatpush1.msra.mxu0 %v1559
    %1958 = vmatprep.subr.mxu0 %v1567
    %1959 = vmatpush1.msra.mxu0 %v1566
    %1960 = vmatprep.subr.mxu0 %v1574
    %1961 = vmatpush1.msra.mxu0 %v1573
    %1962 = vmatprep.subr.mxu0 %v1581
    %1963 = vmatpush1.msra.mxu0 %v1580
    %1964 = vmatprep.subr.mxu0 %v1588
    %1965 = vmatpush1.msra.mxu0 %v1587
    %1966 = vmatprep.subr.mxu0 %v1595
    %1967 = vmatpush1.msra.mxu0 %v1594
    %1968 = vmatprep.subr.mxu0 %v1602
    %1969 = vmatpush1.msra.mxu0 %v1601
    %1970 = vmatprep.subr.mxu0 %v1609
    %1971 = vmatpush1.msra.mxu0 %v1608
    %1972 = vmatprep.subr.mxu0 %v1616
    %1973 = vmatpush1.msra.mxu0 %v1615
    %1974 = vmatprep.subr.mxu0 %v1623
    %1975 = vmatpush1.msra.mxu0 %v1622
    %1976 = vmatprep.subr.mxu0 %v1630
    %1977 = vmatpush1.msra.mxu0 %v1629
    %1978 = vmatprep.subr.mxu0 %v1637
    %1979 = vmatpush1.msra.mxu0 %v1636
    %1980 = vmatprep.subr.mxu0 %v1644
    %1981 = vmatpush1.msra.mxu0 %v1643
    %1982 = vmatprep.subr.mxu0 %v1651
    %1983 = vmatpush1.msra.mxu0 %v1650
    %1984 = vmatprep.subr.mxu0 %v1658
    %1985 = vmatpush1.msra.mxu0 %v1657
    %1986 = vmatprep.subr.mxu0 %v1665
    %1987 = vmatpush1.msra.mxu0 %v1664
    %1988 = vmatprep.subr.mxu0 %v1672
    %1989 = vmatpush1.msra.mxu0 %v1671
    %1990 = vmatprep.mubr.f32.mxu0 %v1227
    %1991 = vmatmul.mubr.f32.gmra.mrb[0].mxu0 %v1226
    %v1992 = vpop.f32.mrb[0].mxu0
    %v1993 = vadd.f32 %v1922, %v1992
    %v1994 = vpop.f32.mrb[0].mxu0
    %v1995 = vadd.f32 %v1924, %v1994
    %1996 = vdwg.mxu0
    %1997 = vmatprep.subr.mxu0 %v1233
    %1998 = vmatpush1.msra.mxu0 %v1232
    %1999 = vmatprep.subr.mxu0 %v1240
    %2000 = vmatpush1.msra.mxu0 %v1239
    %2001 = vmatprep.subr.mxu0 %v1247
    %2002 = vmatpush1.msra.mxu0 %v1246
    %2003 = vmatprep.subr.mxu0 %v1254
    %2004 = vmatpush1.msra.mxu0 %v1253
    %2005 = vmatprep.subr.mxu0 %v1261
    %2006 = vmatpush1.msra.mxu0 %v1260
    %2007 = vmatprep.subr.mxu0 %v1268
    %2008 = vmatpush1.msra.mxu0 %v1267
    %2009 = vmatprep.subr.mxu0 %v1275
    %2010 = vmatpush1.msra.mxu0 %v1274
    %2011 = vmatprep.subr.mxu0 %v1282
    %2012 = vmatpush1.msra.mxu0 %v1281
    %2013 = vmatprep.subr.mxu0 %v1289
    %2014 = vmatpush1.msra.mxu0 %v1288
    %2015 = vmatprep.subr.mxu0 %v1296
    %2016 = vmatpush1.msra.mxu0 %v1295
    %2017 = vmatprep.subr.mxu0 %v1303
    %2018 = vmatpush1.msra.mxu0 %v1302
    %2019 = vmatprep.subr.mxu0 %v1310
    %2020 = vmatpush1.msra.mxu0 %v1309
    %2021 = vmatprep.subr.mxu0 %v1317
    %2022 = vmatpush1.msra.mxu0 %v1316
    %2023 = vmatprep.subr.mxu0 %v1324
    %2024 = vmatpush1.msra.mxu0 %v1323
    %2025 = vmatprep.subr.mxu0 %v1331
    %2026 = vmatpush1.msra.mxu0 %v1330
    %2027 = vmatprep.subr.mxu0 %v1338
    %2028 = vmatpush1.msra.mxu0 %v1337
    %2029 = vmatprep.subr.mxu0 %v1345
    %2030 = vmatpush1.msra.mxu0 %v1344
    %2031 = vmatprep.subr.mxu0 %v1352
    %2032 = vmatpush1.msra.mxu0 %v1351
    %2033 = vmatprep.subr.mxu0 %v1359
    %2034 = vmatpush1.msra.mxu0 %v1358
    %2035 = vmatprep.subr.mxu0 %v1366
    %2036 = vmatpush1.msra.mxu0 %v1365
    %2037 = vmatprep.subr.mxu0 %v1373
    %2038 = vmatpush1.msra.mxu0 %v1372
    %2039 = vmatprep.subr.mxu0 %v1380
    %2040 = vmatpush1.msra.mxu0 %v1379
    %2041 = vmatprep.subr.mxu0 %v1387
    %2042 = vmatpush1.msra.mxu0 %v1386
    %2043 = vmatprep.subr.mxu0 %v1394
    %2044 = vmatpush1.msra.mxu0 %v1393
    %2045 = vmatprep.subr.mxu0 %v1401
    %2046 = vmatpush1.msra.mxu0 %v1400
    %2047 = vmatprep.subr.mxu0 %v1408
    %2048 = vmatpush1.msra.mxu0 %v1407
    %2049 = vmatprep.subr.mxu0 %v1415
    %2050 = vmatpush1.msra.mxu0 %v1414
    %2051 = vmatprep.subr.mxu0 %v1422
    %2052 = vmatpush1.msra.mxu0 %v1421
    %2053 = vmatprep.subr.mxu0 %v1429
    %2054 = vmatpush1.msra.mxu0 %v1428
    %2055 = vmatprep.subr.mxu0 %v1436
    %2056 = vmatpush1.msra.mxu0 %v1435
    %2057 = vmatprep.subr.mxu0 %v1443
    %2058 = vmatpush1.msra.mxu0 %v1442
    %2059 = vmatprep.subr.mxu0 %v1450
    %2060 = vmatpush1.msra.mxu0 %v1449
    %2061 = vmatprep.mubr.f32.mxu0 %v1225
    %2062 = vmatmul.mubr.f32.gmra.mrb[0].mxu0 %v1224
    %v2063 = vpop.f32.mrb[0].mxu0
    %v2064 = vadd.f32 %v1697, %v2063
    %v2065 = vpop.f32.mrb[0].mxu0
    %v2066 = vadd.f32 %v1701, %v2065
    %2067 = vdwg.mxu0
    %2068 = vmatprep.subr.mxu0 %v1457
    %2069 = vmatpush1.msra.mxu0 %v1456
    %2070 = vmatprep.subr.mxu0 %v1464
    %2071 = vmatpush1.msra.mxu0 %v1463
    %2072 = vmatprep.subr.mxu0 %v1471
    %2073 = vmatpush1.msra.mxu0 %v1470
    %2074 = vmatprep.subr.mxu0 %v1478
    %2075 = vmatpush1.msra.mxu0 %v1477
    %2076 = vmatprep.subr.mxu0 %v1485
    %2077 = vmatpush1.msra.mxu0 %v1484
    %2078 = vmatprep.subr.mxu0 %v1492
    %2079 = vmatpush1.msra.mxu0 %v1491
    %2080 = vmatprep.subr.mxu0 %v1499
    %2081 = vmatpush1.msra.mxu0 %v1498
    %2082 = vmatprep.subr.mxu0 %v1506
    %2083 = vmatpush1.msra.mxu0 %v1505
    %2084 = vmatprep.subr.mxu0 %v1513
    %2085 = vmatpush1.msra.mxu0 %v1512
    %2086 = vmatprep.subr.mxu0 %v1520
    %2087 = vmatpush1.msra.mxu0 %v1519
    %2088 = vmatprep.subr.mxu0 %v1527
    %2089 = vmatpush1.msra.mxu0 %v1526
    %2090 = vmatprep.subr.mxu0 %v1534
    %2091 = vmatpush1.msra.mxu0 %v1533
    %2092 = vmatprep.subr.mxu0 %v1541
    %2093 = vmatpush1.msra.mxu0 %v1540
    %2094 = vmatprep.subr.mxu0 %v1548
    %2095 = vmatpush1.msra.mxu0 %v1547
    %2096 = vmatprep.subr.mxu0 %v1555
    %2097 = vmatpush1.msra.mxu0 %v1554
    %2098 = vmatprep.subr.mxu0 %v1562
    %2099 = vmatpush1.msra.mxu0 %v1561
    %2100 = vmatprep.subr.mxu0 %v1569
    %2101 = vmatpush1.msra.mxu0 %v1568
    %2102 = vmatprep.subr.mxu0 %v1576
    %2103 = vmatpush1.msra.mxu0 %v1575
    %2104 = vmatprep.subr.mxu0 %v1583
    %2105 = vmatpush1.msra.mxu0 %v1582
    %2106 = vmatprep.subr.mxu0 %v1590
    %2107 = vmatpush1.msra.mxu0 %v1589
    %2108 = vmatprep.subr.mxu0 %v1597
    %2109 = vmatpush1.msra.mxu0 %v1596
    %2110 = vmatprep.subr.mxu0 %v1604
    %2111 = vmatpush1.msra.mxu0 %v1603
    %2112 = vmatprep.subr.mxu0 %v1611
    %2113 = vmatpush1.msra.mxu0 %v1610
    %2114 = vmatprep.subr.mxu0 %v1618
    %2115 = vmatpush1.msra.mxu0 %v1617
    %2116 = vmatprep.subr.mxu0 %v1625
    %2117 = vmatpush1.msra.mxu0 %v1624
    %2118 = vmatprep.subr.mxu0 %v1632
    %2119 = vmatpush1.msra.mxu0 %v1631
    %2120 = vmatprep.subr.mxu0 %v1639
    %2121 = vmatpush1.msra.mxu0 %v1638
    %2122 = vmatprep.subr.mxu0 %v1646
    %2123 = vmatpush1.msra.mxu0 %v1645
    %2124 = vmatprep.subr.mxu0 %v1653
    %2125 = vmatpush1.msra.mxu0 %v1652
    %2126 = vmatprep.subr.mxu0 %v1660
    %2127 = vmatpush1.msra.mxu0 %v1659
    %2128 = vmatprep.subr.mxu0 %v1667
    %2129 = vmatpush1.msra.mxu0 %v1666
    %2130 = vmatprep.subr.mxu0 %v1674
    %2131 = vmatpush1.msra.mxu0 %v1673
    %2132 = vmatprep.mubr.f32.mxu0 %v1227
    %2133 = vmatmul.mubr.f32.gmra.mrb[0].mxu0 %v1226
    %v2134 = vpop.f32.mrb[0].mxu0
    %v2135 = vadd.f32 %v2064, %v2134
    %v2136 = vpop.f32.mrb[0].mxu0
    %v2137 = vadd.f32 %v2066, %v2136
    %2138 = vdwg.mxu0
    %2139 = vmatprep.subr.mxu0 0.0
    %2140 = vmatpush1.msra.mxu0 %v1234
    %2141 = vmatprep.subr.mxu0 0.0
    %2142 = vmatpush1.msra.mxu0 %v1241
    %2143 = vmatprep.subr.mxu0 0.0
    %2144 = vmatpush1.msra.mxu0 %v1248
    %2145 = vmatprep.subr.mxu0 0.0
    %2146 = vmatpush1.msra.mxu0 %v1255
    %2147 = vmatprep.subr.mxu0 0.0
    %2148 = vmatpush1.msra.mxu0 %v1262
    %2149 = vmatprep.subr.mxu0 0.0
    %2150 = vmatpush1.msra.mxu0 %v1269
    %2151 = vmatprep.subr.mxu0 0.0
    %2152 = vmatpush1.msra.mxu0 %v1276
    %2153 = vmatprep.subr.mxu0 0.0
    %2154 = vmatpush1.msra.mxu0 %v1283
    %2155 = vmatprep.subr.mxu0 0.0
    %2156 = vmatpush1.msra.mxu0 %v1290
    %2157 = vmatprep.subr.mxu0 0.0
    %2158 = vmatpush1.msra.mxu0 %v1297
    %2159 = vmatprep.subr.mxu0 0.0
    %2160 = vmatpush1.msra.mxu0 %v1304
    %2161 = vmatprep.subr.mxu0 0.0
    %2162 = vmatpush1.msra.mxu0 %v1311
    %2163 = vmatprep.subr.mxu0 0.0
    %2164 = vmatpush1.msra.mxu0 %v1318
    %2165 = vmatprep.subr.mxu0 0.0
    %2166 = vmatpush1.msra.mxu0 %v1325
    %2167 = vmatprep.subr.mxu0 0.0
    %2168 = vmatpush1.msra.mxu0 %v1332
    %2169 = vmatprep.subr.mxu0 0.0
    %2170 = vmatpush1.msra.mxu0 %v1339
    %2171 = vmatprep.subr.mxu0 0.0
    %2172 = vmatpush1.msra.mxu0 %v1346
    %2173 = vmatprep.subr.mxu0 0.0
    %2174 = vmatpush1.msra.mxu0 %v1353
    %2175 = vmatprep.subr.mxu0 0.0
    %2176 = vmatpush1.msra.mxu0 %v1360
    %2177 = vmatprep.subr.mxu0 0.0
    %2178 = vmatpush1.msra.mxu0 %v1367
    %2179 = vmatprep.subr.mxu0 0.0
    %2180 = vmatpush1.msra.mxu0 %v1374
    %2181 = vmatprep.subr.mxu0 0.0
    %2182 = vmatpush1.msra.mxu0 %v1381
    %2183 = vmatprep.subr.mxu0 0.0
    %2184 = vmatpush1.msra.mxu0 %v1388
    %2185 = vmatprep.subr.mxu0 0.0
    %2186 = vmatpush1.msra.mxu0 %v1395
    %2187 = vmatprep.subr.mxu0 0.0
    %2188 = vmatpush1.msra.mxu0 %v1402
    %2189 = vmatprep.subr.mxu0 0.0
    %2190 = vmatpush1.msra.mxu0 %v1409
    %2191 = vmatprep.subr.mxu0 0.0
    %2192 = vmatpush1.msra.mxu0 %v1416
    %2193 = vmatprep.subr.mxu0 0.0
    %2194 = vmatpush1.msra.mxu0 %v1423
    %2195 = vmatprep.subr.mxu0 0.0
    %2196 = vmatpush1.msra.mxu0 %v1430
    %2197 = vmatprep.subr.mxu0 0.0
    %2198 = vmatpush1.msra.mxu0 %v1437
    %2199 = vmatprep.subr.mxu0 0.0
    %2200 = vmatpush1.msra.mxu0 %v1444
    %2201 = vmatprep.subr.mxu0 0.0
    %2202 = vmatpush1.msra.mxu0 %v1451
    %2203 = vmatprep.mubr.f32.mxu0 %v1225
    %2204 = vmatmul.mubr.f32.gmra.mrb[0].mxu0 %v1224
    %v2205 = vpop.f32.mrb[0].mxu0
    %v2206 = vadd.f32 %v1705, %v2205
    %v2207 = vpop.f32.mrb[0].mxu0
    %2208 = vdwg.mxu0
    %2209 = vmatprep.subr.mxu0 0.0
    %2210 = vmatpush1.msra.mxu0 %v1458
    %2211 = vmatprep.subr.mxu0 0.0
    %2212 = vmatpush1.msra.mxu0 %v1465
    %2213 = vmatprep.subr.mxu0 0.0
    %2214 = vmatpush1.msra.mxu0 %v1472
    %2215 = vmatprep.subr.mxu0 0.0
    %2216 = vmatpush1.msra.mxu0 %v1479
    %2217 = vmatprep.subr.mxu0 0.0
    %2218 = vmatpush1.msra.mxu0 %v1486
    %2219 = vmatprep.subr.mxu0 0.0
    %2220 = vmatpush1.msra.mxu0 %v1493
    %2221 = vmatprep.subr.mxu0 0.0
    %2222 = vmatpush1.msra.mxu0 %v1500
    %2223 = vmatprep.subr.mxu0 0.0
    %2224 = vmatpush1.msra.mxu0 %v1507
    %2225 = vmatprep.subr.mxu0 0.0
    %2226 = vmatpush1.msra.mxu0 %v1514
    %2227 = vmatprep.subr.mxu0 0.0
    %2228 = vmatpush1.msra.mxu0 %v1521
    %2229 = vmatprep.subr.mxu0 0.0
    %2230 = vmatpush1.msra.mxu0 %v1528
    %2231 = vmatprep.subr.mxu0 0.0
    %2232 = vmatpush1.msra.mxu0 %v1535
    %2233 = vmatprep.subr.mxu0 0.0
    %2234 = vmatpush1.msra.mxu0 %v1542
    %2235 = vmatprep.subr.mxu0 0.0
    %2236 = vmatpush1.msra.mxu0 %v1549
    %2237 = vmatprep.subr.mxu0 0.0
    %2238 = vmatpush1.msra.mxu0 %v1556
    %2239 = vmatprep.subr.mxu0 0.0
    %2240 = vmatpush1.msra.mxu0 %v1563
    %2241 = vmatprep.subr.mxu0 0.0
    %2242 = vmatpush1.msra.mxu0 %v1570
    %2243 = vmatprep.subr.mxu0 0.0
    %2244 = vmatpush1.msra.mxu0 %v1577
    %2245 = vmatprep.subr.mxu0 0.0
    %2246 = vmatpush1.msra.mxu0 %v1584
    %2247 = vmatprep.subr.mxu0 0.0
    %2248 = vmatpush1.msra.mxu0 %v1591
    %2249 = vmatprep.subr.mxu0 0.0
    %2250 = vmatpush1.msra.mxu0 %v1598
    %2251 = vmatprep.subr.mxu0 0.0
    %2252 = vmatpush1.msra.mxu0 %v1605
    %2253 = vmatprep.subr.mxu0 0.0
    %2254 = vmatpush1.msra.mxu0 %v1612
    %2255 = vmatprep.subr.mxu0 0.0
    %2256 = vmatpush1.msra.mxu0 %v1619
    %2257 = vmatprep.subr.mxu0 0.0
    %2258 = vmatpush1.msra.mxu0 %v1626
    %2259 = vmatprep.subr.mxu0 0.0
    %2260 = vmatpush1.msra.mxu0 %v1633
    %2261 = vmatprep.subr.mxu0 0.0
    %2262 = vmatpush1.msra.mxu0 %v1640
    %2263 = vmatprep.subr.mxu0 0.0
    %2264 = vmatpush1.msra.mxu0 %v1647
    %2265 = vmatprep.subr.mxu0 0.0
    %2266 = vmatpush1.msra.mxu0 %v1654
    %2267 = vmatprep.subr.mxu0 0.0
    %2268 = vmatpush1.msra.mxu0 %v1661
    %2269 = vmatprep.subr.mxu0 0.0
    %2270 = vmatpush1.msra.mxu0 %v1668
    %2271 = vmatprep.subr.mxu0 0.0
    %2272 = vmatpush1.msra.mxu0 %v1675
    %2273 = vmatprep.mubr.f32.mxu0 %v1227
    %2274 = vmatmul.mubr.f32.gmra.mrb[0].mxu0 %v1226
    %v2275 = vpop.f32.mrb[0].mxu0
    %v2276 = vadd.f32 %v2206, %v2275
    %v2277 = vpop.f32.mrb[0].mxu0
    %2278 = vdwg.mxu0
    %v2279 = vmax.f32 %v1851, 0.0
    %v2280 = vmax.f32 %v1853, 0.0
    %v2281 = vmax.f32 %v1993, 0.0
    %v2282 = vmax.f32 %v1995, 0.0
    %v2283 = vmax.f32 %v2135, 0.0
    %v2284 = vmax.f32 %v2137, 0.0
    %v2285 = vmax.f32 %v2276, 0.0
    %v2286 = vld [vmem:[#allocation11] sm:$0xff]
    %v2287 = vld [vmem:[#allocation11 + $0x8] sm:$0xff]
    %v2288 = vld [vmem:[#allocation11 + $0x10] sm:$0xff]
    %v2289 = vld [vmem:[#allocation11 + $0x18] sm:$0xff]
    %v2290 = vld [vmem:[#allocation11 + $0x20] sm:$0xff]
    %v2291 = vld [vmem:[#allocation11 + $0x28] sm:$0xff]
    %v2292 = vld [vmem:[#allocation11 + $0x30] sm:$0xff]
    %v2293 = vld [vmem:[#allocation11 + $0x38] sm:$0xff]
    %v2294 = vld [vmem:[#allocation11 + $0x40] sm:$0xff]
    %v2295 = vld [vmem:[#allocation11 + $0x48] sm:$0xff]
    %v2296 = vld [vmem:[#allocation11 + $0x50] sm:$0xff]
    %v2297 = vld [vmem:[#allocation11 + $0x58] sm:$0xff]
    %v2298 = vld [vmem:[#allocation11 + $0x60] sm:$0xff]
    %v2299 = vld [vmem:[#allocation11 + $0x68] sm:$0xff]
    %v2300 = vld [vmem:[#allocation11 + $0x70] sm:$0xff]
    %v2301 = vld [vmem:[#allocation11 + $0x78] sm:$0xff]
    %v2302 = vld [vmem:[#allocation11 + $0x80] sm:$0xff]
    %v2303 = vld [vmem:[#allocation11 + $0x88] sm:$0xff]
    %v2304 = vld [vmem:[#allocation11 + $0x90] sm:$0xff]
    %v2305 = vld [vmem:[#allocation11 + $0x98] sm:$0xff]
    %v2306 = vld [vmem:[#allocation11 + $0xa0] sm:$0xff]
    %v2307 = vld [vmem:[#allocation11 + $0xa8] sm:$0xff]
    %v2308 = vld [vmem:[#allocation11 + $0xb0] sm:$0xff]
    %v2309 = vld [vmem:[#allocation11 + $0xb8] sm:$0xff]
    %v2310 = vld [vmem:[#allocation11 + $0xc0] sm:$0xff]
    %v2311 = vld [vmem:[#allocation11 + $0xc8] sm:$0xff]
    %v2312 = vld [vmem:[#allocation11 + $0xd0] sm:$0xff]
    %v2313 = vld [vmem:[#allocation11 + $0xd8] sm:$0xff]
    %v2314 = vld [vmem:[#allocation11 + $0xe0] sm:$0xff]
    %v2315 = vld [vmem:[#allocation11 + $0xe8] sm:$0xff]
    %v2316 = vld [vmem:[#allocation11 + $0xf0] sm:$0xff]
    %v2317 = vld [vmem:[#allocation11 + $0xf8] sm:$0xff]
    %v2318 = vld [vmem:[#allocation11 + $0x100] sm:$0xff]
    %v2319 = vld [vmem:[#allocation11 + $0x108] sm:$0xff]
    %v2320 = vld [vmem:[#allocation11 + $0x110] sm:$0xff]
    %v2321 = vld [vmem:[#allocation11 + $0x118] sm:$0xff]
    %v2322 = vld [vmem:[#allocation11 + $0x120] sm:$0xff]
    %v2323 = vld [vmem:[#allocation11 + $0x128] sm:$0xff]
    %v2324 = vld [vmem:[#allocation11 + $0x130] sm:$0xff]
    %v2325 = vld [vmem:[#allocation11 + $0x138] sm:$0xff]
    %v2326 = vld [vmem:[#allocation11 + $0x140] sm:$0xff]
    %v2327 = vld [vmem:[#allocation11 + $0x148] sm:$0xff]
    %v2328 = vld [vmem:[#allocation11 + $0x150] sm:$0xff]
    %v2329 = vld [vmem:[#allocation11 + $0x158] sm:$0xff]
    %v2330 = vld [vmem:[#allocation11 + $0x160] sm:$0xff]
    %v2331 = vld [vmem:[#allocation11 + $0x168] sm:$0xff]
    %v2332 = vld [vmem:[#allocation11 + $0x170] sm:$0xff]
    %v2333 = vld [vmem:[#allocation11 + $0x178] sm:$0xff]
    %v2334 = vld [vmem:[#allocation11 + $0x180] sm:$0xff]
    %v2335 = vld [vmem:[#allocation11 + $0x188] sm:$0xff]
    %v2336 = vld [vmem:[#allocation11 + $0x190] sm:$0xff]
    %v2337 = vld [vmem:[#allocation11 + $0x198] sm:$0xff]
    %v2338 = vld [vmem:[#allocation11 + $0x1a0] sm:$0xff]
    %v2339 = vld [vmem:[#allocation11 + $0x1a8] sm:$0xff]
    %v2340 = vld [vmem:[#allocation11 + $0x1b0] sm:$0xff]
    %v2341 = vld [vmem:[#allocation11 + $0x1b8] sm:$0xff]
    %v2342 = vld [vmem:[#allocation11 + $0x1c0] sm:$0xff]
    %v2343 = vld [vmem:[#allocation11 + $0x1c8] sm:$0xff]
    %v2344 = vld [vmem:[#allocation11 + $0x1d0] sm:$0xff]
    %v2345 = vld [vmem:[#allocation11 + $0x1d8] sm:$0xff]
    %v2346 = vld [vmem:[#allocation11 + $0x1e0] sm:$0xff]
    %v2347 = vld [vmem:[#allocation11 + $0x1e8] sm:$0xff]
    %v2348 = vld [vmem:[#allocation11 + $0x1f0] sm:$0xff]
    %v2349 = vld [vmem:[#allocation11 + $0x1f8] sm:$0xff]
    %v2350 = vld [vmem:[#allocation11 + $0x200] sm:$0xff]
    %v2351 = vld [vmem:[#allocation11 + $0x208] sm:$0xff]
    %v2352 = vld [vmem:[#allocation11 + $0x210] sm:$0xff]
    %v2353 = vld [vmem:[#allocation11 + $0x218] sm:$0xff]
    %v2354 = vld [vmem:[#allocation11 + $0x220] sm:$0xff]
    %v2355 = vld [vmem:[#allocation11 + $0x228] sm:$0xff]
    %v2356 = vld [vmem:[#allocation11 + $0x230] sm:$0xff]
    %v2357 = vld [vmem:[#allocation11 + $0x238] sm:$0xff]
    %v2358 = vld [vmem:[#allocation11 + $0x240] sm:$0xff]
    %v2359 = vld [vmem:[#allocation11 + $0x248] sm:$0xff]
    %v2360 = vld [vmem:[#allocation11 + $0x250] sm:$0xff]
    %v2361 = vld [vmem:[#allocation11 + $0x258] sm:$0xff]
    %v2362 = vld [vmem:[#allocation11 + $0x260] sm:$0xff]
    %v2363 = vld [vmem:[#allocation11 + $0x268] sm:$0xff]
    %v2364 = vld [vmem:[#allocation11 + $0x270] sm:$0xff]
    %v2365 = vld [vmem:[#allocation11 + $0x278] sm:$0xff]
    %v2366 = vld [vmem:[#allocation11 + $0x280] sm:$0xff]
    %v2367 = vld [vmem:[#allocation11 + $0x288] sm:$0xff]
    %v2368 = vld [vmem:[#allocation11 + $0x290] sm:$0xff]
    %v2369 = vld [vmem:[#allocation11 + $0x298] sm:$0xff]
    %v2370 = vld [vmem:[#allocation11 + $0x2a0] sm:$0xff]
    %v2371 = vld [vmem:[#allocation11 + $0x2a8] sm:$0xff]
    %v2372 = vld [vmem:[#allocation11 + $0x2b0] sm:$0xff]
    %v2373 = vld [vmem:[#allocation11 + $0x2b8] sm:$0xff]
    %v2374 = vld [vmem:[#allocation11 + $0x2c0] sm:$0xff]
    %v2375 = vld [vmem:[#allocation11 + $0x2c8] sm:$0xff]
    %v2376 = vld [vmem:[#allocation11 + $0x2d0] sm:$0xff]
    %v2377 = vld [vmem:[#allocation11 + $0x2d8] sm:$0xff]
    %v2378 = vld [vmem:[#allocation11 + $0x2e0] sm:$0xff]
    %v2379 = vld [vmem:[#allocation11 + $0x2e8] sm:$0xff]
    %v2380 = vld [vmem:[#allocation11 + $0x2f0] sm:$0xff]
    %v2381 = vld [vmem:[#allocation11 + $0x2f8] sm:$0xff]
    %v2382 = vld [vmem:[#allocation11 + $0x300] sm:$0xff]
    %v2383 = vld [vmem:[#allocation11 + $0x308] sm:$0xff]
    %v2384 = vld [vmem:[#allocation11 + $0x310] sm:$0xff]
    %v2385 = vld [vmem:[#allocation11 + $0x318] sm:$0xff]
    %v2386 = vld [vmem:[#allocation11 + $0x320] sm:$0xff]
    %v2387 = vld [vmem:[#allocation11 + $0x328] sm:$0xff]
    %v2388 = vld [vmem:[#allocation11 + $0x330] sm:$0xff]
    %v2389 = vld [vmem:[#allocation11 + $0x338] sm:$0xff]
    %v2390 = vld [vmem:[#allocation11 + $0x340] sm:$0xff]
    %v2391 = vld [vmem:[#allocation11 + $0x348] sm:$0xff]
    %v2392 = vld [vmem:[#allocation11 + $0x350] sm:$0xff]
    %v2393 = vld [vmem:[#allocation11 + $0x358] sm:$0xff]
    %v2394 = vld [vmem:[#allocation11 + $0x360] sm:$0xff]
    %v2395 = vld [vmem:[#allocation11 + $0x368] sm:$0xff]
    %v2396 = vld [vmem:[#allocation11 + $0x370] sm:$0xff]
    %v2397 = vld [vmem:[#allocation11 + $0x378] sm:$0xff]
    %v2398 = vld [vmem:[#allocation11 + $0x380] sm:$0xff]
    %v2399 = vld [vmem:[#allocation11 + $0x388] sm:$0xff]
    %v2400 = vld [vmem:[#allocation11 + $0x390] sm:$0xff]
    %v2401 = vld [vmem:[#allocation11 + $0x398] sm:$0xff]
    %v2402 = vld [vmem:[#allocation11 + $0x3a0] sm:$0xff]
    %v2403 = vld [vmem:[#allocation11 + $0x3a8] sm:$0xff]
    %v2404 = vld [vmem:[#allocation11 + $0x3b0] sm:$0xff]
    %v2405 = vld [vmem:[#allocation11 + $0x3b8] sm:$0xff]
    %v2406 = vld [vmem:[#allocation11 + $0x3c0] sm:$0xff]
    %v2407 = vld [vmem:[#allocation11 + $0x3c8] sm:$0xff]
    %v2408 = vld [vmem:[#allocation11 + $0x3d0] sm:$0xff]
    %v2409 = vld [vmem:[#allocation11 + $0x3d8] sm:$0xff]
    %v2410 = vld [vmem:[#allocation11 + $0x3e0] sm:$0xff]
    %v2411 = vld [vmem:[#allocation11 + $0x3e8] sm:$0xff]
    %v2412 = vld [vmem:[#allocation11 + $0x3f0] sm:$0xff]
    %v2413 = vld [vmem:[#allocation11 + $0x3f8] sm:$0xff]
    %v2414 = vld [vmem:[#allocation11 + $0x400] sm:$0xff]
    %v2415 = vld [vmem:[#allocation11 + $0x408] sm:$0xff]
    %v2416 = vld [vmem:[#allocation11 + $0x410] sm:$0xff]
    %v2417 = vld [vmem:[#allocation11 + $0x418] sm:$0xff]
    %v2418 = vld [vmem:[#allocation11 + $0x420] sm:$0xff]
    %v2419 = vld [vmem:[#allocation11 + $0x428] sm:$0xff]
    %v2420 = vld [vmem:[#allocation11 + $0x430] sm:$0xff]
    %v2421 = vld [vmem:[#allocation11 + $0x438] sm:$0xff]
    %v2422 = vld [vmem:[#allocation11 + $0x440] sm:$0xff]
    %v2423 = vld [vmem:[#allocation11 + $0x448] sm:$0xff]
    %v2424 = vld [vmem:[#allocation11 + $0x450] sm:$0xff]
    %v2425 = vld [vmem:[#allocation11 + $0x458] sm:$0xff]
    %v2426 = vld [vmem:[#allocation11 + $0x460] sm:$0xff]
    %v2427 = vld [vmem:[#allocation11 + $0x468] sm:$0xff]
    %v2428 = vld [vmem:[#allocation11 + $0x470] sm:$0xff]
    %v2429 = vld [vmem:[#allocation11 + $0x478] sm:$0xff]
    %v2430 = vld [vmem:[#allocation11 + $0x480] sm:$0xff]
    %v2431 = vld [vmem:[#allocation11 + $0x488] sm:$0xff]
    %v2432 = vld [vmem:[#allocation11 + $0x490] sm:$0xff]
    %v2433 = vld [vmem:[#allocation11 + $0x498] sm:$0xff]
    %v2434 = vld [vmem:[#allocation11 + $0x4a0] sm:$0xff]
    %v2435 = vld [vmem:[#allocation11 + $0x4a8] sm:$0xff]
    %v2436 = vld [vmem:[#allocation11 + $0x4b0] sm:$0xff]
    %v2437 = vld [vmem:[#allocation11 + $0x4b8] sm:$0xff]
    %v2438 = vld [vmem:[#allocation11 + $0x4c0] sm:$0xff]
    %v2439 = vld [vmem:[#allocation11 + $0x4c8] sm:$0xff]
    %v2440 = vld [vmem:[#allocation11 + $0x4d0] sm:$0xff]
    %v2441 = vld [vmem:[#allocation11 + $0x4d8] sm:$0xff]
    %v2442 = vld [vmem:[#allocation11 + $0x4e0] sm:$0xff]
    %v2443 = vld [vmem:[#allocation11 + $0x4e8] sm:$0xff]
    %v2444 = vld [vmem:[#allocation11 + $0x4f0] sm:$0xff]
    %v2445 = vld [vmem:[#allocation11 + $0x4f8] sm:$0xff]
    %v2446 = vld [vmem:[#allocation11 + $0x500] sm:$0xff]
    %v2447 = vld [vmem:[#allocation11 + $0x508] sm:$0xff]
    %v2448 = vld [vmem:[#allocation11 + $0x510] sm:$0xff]
    %v2449 = vld [vmem:[#allocation11 + $0x518] sm:$0xff]
    %v2450 = vld [vmem:[#allocation11 + $0x520] sm:$0xff]
    %v2451 = vld [vmem:[#allocation11 + $0x528] sm:$0xff]
    %v2452 = vld [vmem:[#allocation11 + $0x530] sm:$0xff]
    %v2453 = vld [vmem:[#allocation11 + $0x538] sm:$0xff]
    %v2454 = vld [vmem:[#allocation11 + $0x540] sm:$0xff]
    %v2455 = vld [vmem:[#allocation11 + $0x548] sm:$0xff]
    %v2456 = vld [vmem:[#allocation11 + $0x550] sm:$0xff]
    %v2457 = vld [vmem:[#allocation11 + $0x558] sm:$0xff]
    %v2458 = vld [vmem:[#allocation11 + $0x560] sm:$0xff]
    %v2459 = vld [vmem:[#allocation11 + $0x568] sm:$0xff]
    %v2460 = vld [vmem:[#allocation11 + $0x570] sm:$0xff]
    %v2461 = vld [vmem:[#allocation11 + $0x578] sm:$0xff]
    %v2462 = vld [vmem:[#allocation11 + $0x580] sm:$0xff]
    %v2463 = vld [vmem:[#allocation11 + $0x588] sm:$0xff]
    %v2464 = vld [vmem:[#allocation11 + $0x590] sm:$0xff]
    %v2465 = vld [vmem:[#allocation11 + $0x598] sm:$0xff]
    %v2466 = vld [vmem:[#allocation11 + $0x5a0] sm:$0xff]
    %v2467 = vld [vmem:[#allocation11 + $0x5a8] sm:$0xff]
    %v2468 = vld [vmem:[#allocation11 + $0x5b0] sm:$0xff]
    %v2469 = vld [vmem:[#allocation11 + $0x5b8] sm:$0xff]
    %v2470 = vld [vmem:[#allocation11 + $0x5c0] sm:$0xff]
    %v2471 = vld [vmem:[#allocation11 + $0x5c8] sm:$0xff]
    %v2472 = vld [vmem:[#allocation11 + $0x5d0] sm:$0xff]
    %v2473 = vld [vmem:[#allocation11 + $0x5d8] sm:$0xff]
    %v2474 = vld [vmem:[#allocation11 + $0x5e0] sm:$0xff]
    %v2475 = vld [vmem:[#allocation11 + $0x5e8] sm:$0xff]
    %v2476 = vld [vmem:[#allocation11 + $0x5f0] sm:$0xff]
    %v2477 = vld [vmem:[#allocation11 + $0x5f8] sm:$0xff]
    %v2478 = vld [vmem:[#allocation11 + $0x600] sm:$0xff]
    %v2479 = vld [vmem:[#allocation11 + $0x608] sm:$0xff]
    %v2480 = vld [vmem:[#allocation11 + $0x610] sm:$0xff]
    %v2481 = vld [vmem:[#allocation11 + $0x618] sm:$0xff]
    %v2482 = vld [vmem:[#allocation11 + $0x620] sm:$0xff]
    %v2483 = vld [vmem:[#allocation11 + $0x628] sm:$0xff]
    %v2484 = vld [vmem:[#allocation11 + $0x630] sm:$0xff]
    %v2485 = vld [vmem:[#allocation11 + $0x638] sm:$0xff]
    %v2486 = vld [vmem:[#allocation11 + $0x640] sm:$0xff]
    %v2487 = vld [vmem:[#allocation11 + $0x648] sm:$0xff]
    %v2488 = vld [vmem:[#allocation11 + $0x650] sm:$0xff]
    %v2489 = vld [vmem:[#allocation11 + $0x658] sm:$0xff]
    %v2490 = vld [vmem:[#allocation11 + $0x660] sm:$0xff]
    %v2491 = vld [vmem:[#allocation11 + $0x668] sm:$0xff]
    %v2492 = vld [vmem:[#allocation11 + $0x670] sm:$0xff]
    %v2493 = vld [vmem:[#allocation11 + $0x678] sm:$0xff]
    %v2494 = vld [vmem:[#allocation11 + $0x680] sm:$0xff]
    %v2495 = vld [vmem:[#allocation11 + $0x688] sm:$0xff]
    %v2496 = vld [vmem:[#allocation11 + $0x690] sm:$0xff]
    %v2497 = vld [vmem:[#allocation11 + $0x698] sm:$0xff]
    %v2498 = vld [vmem:[#allocation11 + $0x6a0] sm:$0xff]
    %v2499 = vld [vmem:[#allocation11 + $0x6a8] sm:$0xff]
    %v2500 = vld [vmem:[#allocation11 + $0x6b0] sm:$0xff]
    %v2501 = vld [vmem:[#allocation11 + $0x6b8] sm:$0xff]
    %v2502 = vld [vmem:[#allocation11 + $0x6c0] sm:$0xff]
    %v2503 = vld [vmem:[#allocation11 + $0x6c8] sm:$0xff]
    %v2504 = vld [vmem:[#allocation11 + $0x6d0] sm:$0xff]
    %v2505 = vld [vmem:[#allocation11 + $0x6d8] sm:$0xff]
    %v2506 = vld [vmem:[#allocation11 + $0x6e0] sm:$0xff]
    %v2507 = vld [vmem:[#allocation11 + $0x6e8] sm:$0xff]
    %v2508 = vld [vmem:[#allocation11 + $0x6f0] sm:$0xff]
    %v2509 = vld [vmem:[#allocation11 + $0x6f8] sm:$0xff]
    %v2510 = vld [vmem:[#allocation11 + $0x700] sm:$0xff]
    %v2511 = vld [vmem:[#allocation11 + $0x708] sm:$0xff]
    %v2512 = vld [vmem:[#allocation11 + $0x710] sm:$0xff]
    %v2513 = vld [vmem:[#allocation11 + $0x718] sm:$0xff]
    %v2514 = vld [vmem:[#allocation11 + $0x720] sm:$0xff]
    %v2515 = vld [vmem:[#allocation11 + $0x728] sm:$0xff]
    %v2516 = vld [vmem:[#allocation11 + $0x730] sm:$0xff]
    %v2517 = vld [vmem:[#allocation11 + $0x738] sm:$0xff]
    %v2518 = vld [vmem:[#allocation11 + $0x740] sm:$0xff]
    %v2519 = vld [vmem:[#allocation11 + $0x748] sm:$0xff]
    %v2520 = vld [vmem:[#allocation11 + $0x750] sm:$0xff]
    %v2521 = vld [vmem:[#allocation11 + $0x758] sm:$0xff]
    %v2522 = vld [vmem:[#allocation11 + $0x760] sm:$0xff]
    %v2523 = vld [vmem:[#allocation11 + $0x768] sm:$0xff]
    %v2524 = vld [vmem:[#allocation11 + $0x770] sm:$0xff]
    %v2525 = vld [vmem:[#allocation11 + $0x778] sm:$0xff]
    %v2526 = vld [vmem:[#allocation11 + $0x780] sm:$0xff]
    %v2527 = vld [vmem:[#allocation11 + $0x788] sm:$0xff]
    %v2528 = vld [vmem:[#allocation11 + $0x790] sm:$0xff]
    %v2529 = vld [vmem:[#allocation11 + $0x798] sm:$0xff]
    %v2530 = vld [vmem:[#allocation11 + $0x7a0] sm:$0xff]
    %v2531 = vld [vmem:[#allocation11 + $0x7a8] sm:$0xff]
    %v2532 = vld [vmem:[#allocation11 + $0x7b0] sm:$0xff]
    %v2533 = vld [vmem:[#allocation11 + $0x7b8] sm:$0xff]
    %v2534 = vld [vmem:[#allocation11 + $0x7c0] sm:$0xff]
    %v2535 = vld [vmem:[#allocation11 + $0x7c8] sm:$0xff]
    %v2536 = vld [vmem:[#allocation11 + $0x7d0] sm:$0xff]
    %v2537 = vld [vmem:[#allocation11 + $0x7d8] sm:$0xff]
    %v2538 = vld [vmem:[#allocation11 + $0x7e0] sm:$0xff]
    %v2539 = vld [vmem:[#allocation11 + $0x7e8] sm:$0xff]
    %v2540 = vld [vmem:[#allocation11 + $0x7f0] sm:$0xff]
    %v2541 = vld [vmem:[#allocation11 + $0x7f8] sm:$0xff]
    %v2542 = vld [vmem:[#allocation11 + $0x800] sm:$0xff]
    %v2543 = vld [vmem:[#allocation11 + $0x808] sm:$0xff]
    %v2544 = vld [vmem:[#allocation11 + $0x810] sm:$0xff]
    %v2545 = vld [vmem:[#allocation11 + $0x818] sm:$0xff]
    %v2546 = vld [vmem:[#allocation11 + $0x820] sm:$0xff]
    %v2547 = vld [vmem:[#allocation11 + $0x828] sm:$0xff]
    %v2548 = vld [vmem:[#allocation11 + $0x830] sm:$0xff]
    %v2549 = vld [vmem:[#allocation11 + $0x838] sm:$0xff]
    %v2550 = vld [vmem:[#allocation11 + $0x840] sm:$0xff]
    %v2551 = vld [vmem:[#allocation11 + $0x848] sm:$0xff]
    %v2552 = vld [vmem:[#allocation11 + $0x850] sm:$0xff]
    %v2553 = vld [vmem:[#allocation11 + $0x858] sm:$0xff]
    %v2554 = vld [vmem:[#allocation11 + $0x860] sm:$0xff]
    %v2555 = vld [vmem:[#allocation11 + $0x868] sm:$0xff]
    %v2556 = vld [vmem:[#allocation11 + $0x870] sm:$0xff]
    %v2557 = vld [vmem:[#allocation11 + $0x878] sm:$0xff]
    %v2558 = vld [vmem:[#allocation11 + $0x880] sm:$0xff]
    %v2559 = vld [vmem:[#allocation11 + $0x888] sm:$0xff]
    %v2560 = vld [vmem:[#allocation11 + $0x890] sm:$0xff]
    %v2561 = vld [vmem:[#allocation11 + $0x898] sm:$0xff]
    %v2562 = vld [vmem:[#allocation11 + $0x8a0] sm:$0xff]
    %v2563 = vld [vmem:[#allocation11 + $0x8a8] sm:$0xff]
    %v2564 = vld [vmem:[#allocation11 + $0x8b0] sm:$0xff]
    %v2565 = vld [vmem:[#allocation11 + $0x8b8] sm:$0xff]
    %v2566 = vld [vmem:[#allocation11 + $0x8c0] sm:$0xff]
    %v2567 = vld [vmem:[#allocation11 + $0x8c8] sm:$0xff]
    %v2568 = vld [vmem:[#allocation11 + $0x8d0] sm:$0xff]
    %v2569 = vld [vmem:[#allocation11 + $0x8d8] sm:$0xff]
    %v2570 = vld [vmem:[#allocation11 + $0x8e0] sm:$0xff]
    %v2571 = vld [vmem:[#allocation11 + $0x8e8] sm:$0xff]
    %v2572 = vld [vmem:[#allocation11 + $0x8f0] sm:$0xff]
    %v2573 = vld [vmem:[#allocation11 + $0x8f8] sm:$0xff]
    %v2574 = vld [vmem:[#allocation11 + $0x900] sm:$0xff]
    %v2575 = vld [vmem:[#allocation11 + $0x908] sm:$0xff]
    %v2576 = vld [vmem:[#allocation11 + $0x910] sm:$0xff]
    %v2577 = vld [vmem:[#allocation11 + $0x918] sm:$0xff]
    %v2578 = vld [vmem:[#allocation11 + $0x920] sm:$0xff]
    %v2579 = vld [vmem:[#allocation11 + $0x928] sm:$0xff]
    %v2580 = vld [vmem:[#allocation11 + $0x930] sm:$0xff]
    %v2581 = vld [vmem:[#allocation11 + $0x938] sm:$0xff]
    %v2582 = vld [vmem:[#allocation11 + $0x940] sm:$0xff]
    %v2583 = vld [vmem:[#allocation11 + $0x948] sm:$0xff]
    %v2584 = vld [vmem:[#allocation11 + $0x950] sm:$0xff]
    %v2585 = vld [vmem:[#allocation11 + $0x958] sm:$0xff]
    %v2586 = vld [vmem:[#allocation11 + $0x960] sm:$0xff]
    %v2587 = vld [vmem:[#allocation11 + $0x968] sm:$0xff]
    %v2588 = vld [vmem:[#allocation11 + $0x970] sm:$0xff]
    %v2589 = vld [vmem:[#allocation11 + $0x978] sm:$0xff]
    %v2590 = vld [vmem:[#allocation11 + $0x980] sm:$0xff]
    %v2591 = vld [vmem:[#allocation11 + $0x988] sm:$0xff]
    %v2592 = vld [vmem:[#allocation11 + $0x990] sm:$0xff]
    %v2593 = vld [vmem:[#allocation11 + $0x998] sm:$0xff]
    %v2594 = vld [vmem:[#allocation11 + $0x9a0] sm:$0xff]
    %v2595 = vld [vmem:[#allocation11 + $0x9a8] sm:$0xff]
    %v2596 = vld [vmem:[#allocation11 + $0x9b0] sm:$0xff]
    %v2597 = vld [vmem:[#allocation11 + $0x9b8] sm:$0xff]
    %v2598 = vld [vmem:[#allocation11 + $0x9c0] sm:$0xff]
    %v2599 = vld [vmem:[#allocation11 + $0x9c8] sm:$0xff]
    %v2600 = vld [vmem:[#allocation11 + $0x9d0] sm:$0xff]
    %v2601 = vld [vmem:[#allocation11 + $0x9d8] sm:$0xff]
    %v2602 = vld [vmem:[#allocation11 + $0x9e0] sm:$0xff]
    %v2603 = vld [vmem:[#allocation11 + $0x9e8] sm:$0xff]
    %v2604 = vld [vmem:[#allocation11 + $0x9f0] sm:$0xff]
    %v2605 = vld [vmem:[#allocation11 + $0x9f8] sm:$0xff]
    %v2606 = vld [vmem:[#allocation11 + $0xa00] sm:$0xff]
    %v2607 = vld [vmem:[#allocation11 + $0xa08] sm:$0xff]
    %v2608 = vld [vmem:[#allocation11 + $0xa10] sm:$0xff]
    %v2609 = vld [vmem:[#allocation11 + $0xa18] sm:$0xff]
    %v2610 = vld [vmem:[#allocation11 + $0xa20] sm:$0xff]
    %v2611 = vld [vmem:[#allocation11 + $0xa28] sm:$0xff]
    %v2612 = vld [vmem:[#allocation11 + $0xa30] sm:$0xff]
    %v2613 = vld [vmem:[#allocation11 + $0xa38] sm:$0xff]
    %v2614 = vld [vmem:[#allocation11 + $0xa40] sm:$0xff]
    %v2615 = vld [vmem:[#allocation11 + $0xa48] sm:$0xff]
    %v2616 = vld [vmem:[#allocation11 + $0xa50] sm:$0xff]
    %v2617 = vld [vmem:[#allocation11 + $0xa58] sm:$0xff]
    %v2618 = vld [vmem:[#allocation11 + $0xa60] sm:$0xff]
    %v2619 = vld [vmem:[#allocation11 + $0xa68] sm:$0xff]
    %v2620 = vld [vmem:[#allocation11 + $0xa70] sm:$0xff]
    %v2621 = vld [vmem:[#allocation11 + $0xa78] sm:$0xff]
    %v2622 = vld [vmem:[#allocation11 + $0xa80] sm:$0xff]
    %v2623 = vld [vmem:[#allocation11 + $0xa88] sm:$0xff]
    %v2624 = vld [vmem:[#allocation11 + $0xa90] sm:$0xff]
    %v2625 = vld [vmem:[#allocation11 + $0xa98] sm:$0xff]
    %v2626 = vld [vmem:[#allocation11 + $0xaa0] sm:$0xff]
    %v2627 = vld [vmem:[#allocation11 + $0xaa8] sm:$0xff]
    %v2628 = vld [vmem:[#allocation11 + $0xab0] sm:$0xff]
    %v2629 = vld [vmem:[#allocation11 + $0xab8] sm:$0xff]
    %v2630 = vld [vmem:[#allocation11 + $0xac0] sm:$0xff]
    %v2631 = vld [vmem:[#allocation11 + $0xac8] sm:$0xff]
    %v2632 = vld [vmem:[#allocation11 + $0xad0] sm:$0xff]
    %v2633 = vld [vmem:[#allocation11 + $0xad8] sm:$0xff]
    %v2634 = vld [vmem:[#allocation11 + $0xae0] sm:$0xff]
    %v2635 = vld [vmem:[#allocation11 + $0xae8] sm:$0xff]
    %v2636 = vld [vmem:[#allocation11 + $0xaf0] sm:$0xff]
    %v2637 = vld [vmem:[#allocation11 + $0xaf8] sm:$0xff]
    %v2638 = vld [vmem:[#allocation11 + $0xb00] sm:$0xff]
    %v2639 = vld [vmem:[#allocation11 + $0xb08] sm:$0xff]
    %v2640 = vld [vmem:[#allocation11 + $0xb10] sm:$0xff]
    %v2641 = vld [vmem:[#allocation11 + $0xb18] sm:$0xff]
    %v2642 = vld [vmem:[#allocation11 + $0xb20] sm:$0xff]
    %v2643 = vld [vmem:[#allocation11 + $0xb28] sm:$0xff]
    %v2644 = vld [vmem:[#allocation11 + $0xb30] sm:$0xff]
    %v2645 = vld [vmem:[#allocation11 + $0xb38] sm:$0xff]
    %v2646 = vld [vmem:[#allocation11 + $0xb40] sm:$0xff]
    %v2647 = vld [vmem:[#allocation11 + $0xb48] sm:$0xff]
    %v2648 = vld [vmem:[#allocation11 + $0xb50] sm:$0xff]
    %v2649 = vld [vmem:[#allocation11 + $0xb58] sm:$0xff]
    %v2650 = vld [vmem:[#allocation11 + $0xb60] sm:$0xff]
    %v2651 = vld [vmem:[#allocation11 + $0xb68] sm:$0xff]
    %v2652 = vld [vmem:[#allocation11 + $0xb70] sm:$0xff]
    %v2653 = vld [vmem:[#allocation11 + $0xb78] sm:$0xff]
    %v2654 = vld [vmem:[#allocation11 + $0xb80] sm:$0xff]
    %v2655 = vld [vmem:[#allocation11 + $0xb88] sm:$0xff]
    %v2656 = vld [vmem:[#allocation11 + $0xb90] sm:$0xff]
    %v2657 = vld [vmem:[#allocation11 + $0xb98] sm:$0xff]
    %v2658 = vld [vmem:[#allocation11 + $0xba0] sm:$0xff]
    %v2659 = vld [vmem:[#allocation11 + $0xba8] sm:$0xff]
    %v2660 = vld [vmem:[#allocation11 + $0xbb0] sm:$0xff]
    %v2661 = vld [vmem:[#allocation11 + $0xbb8] sm:$0xff]
    %v2662 = vld [vmem:[#allocation11 + $0xbc0] sm:$0xff]
    %v2663 = vld [vmem:[#allocation11 + $0xbc8] sm:$0xff]
    %v2664 = vld [vmem:[#allocation11 + $0xbd0] sm:$0xff]
    %v2665 = vld [vmem:[#allocation11 + $0xbd8] sm:$0xff]
    %v2666 = vld [vmem:[#allocation11 + $0xbe0] sm:$0xff]
    %v2667 = vld [vmem:[#allocation11 + $0xbe8] sm:$0xff]
    %v2668 = vld [vmem:[#allocation11 + $0xbf0] sm:$0xff]
    %v2669 = vld [vmem:[#allocation11 + $0xbf8] sm:$0xff]
    %v2670 = vld [vmem:[#allocation11 + $0xc00] sm:$0xff]
    %v2671 = vld [vmem:[#allocation11 + $0xc08] sm:$0xff]
    %v2672 = vld [vmem:[#allocation11 + $0xc10] sm:$0xff]
    %v2673 = vld [vmem:[#allocation11 + $0xc18] sm:$0xff]
    %v2674 = vld [vmem:[#allocation11 + $0xc20] sm:$0xff]
    %v2675 = vld [vmem:[#allocation11 + $0xc28] sm:$0xff]
    %v2676 = vld [vmem:[#allocation11 + $0xc30] sm:$0xff]
    %v2677 = vld [vmem:[#allocation11 + $0xc38] sm:$0xff]
    %v2678 = vld [vmem:[#allocation11 + $0xc40] sm:$0xff]
    %v2679 = vld [vmem:[#allocation11 + $0xc48] sm:$0xff]
    %v2680 = vld [vmem:[#allocation11 + $0xc50] sm:$0xff]
    %v2681 = vld [vmem:[#allocation11 + $0xc58] sm:$0xff]
    %v2682 = vld [vmem:[#allocation11 + $0xc60] sm:$0xff]
    %v2683 = vld [vmem:[#allocation11 + $0xc68] sm:$0xff]
    %v2684 = vld [vmem:[#allocation11 + $0xc70] sm:$0xff]
    %v2685 = vld [vmem:[#allocation11 + $0xc78] sm:$0xff]
    %v2686 = vld [vmem:[#allocation11 + $0xc80] sm:$0xff]
    %v2687 = vld [vmem:[#allocation11 + $0xc88] sm:$0xff]
    %v2688 = vld [vmem:[#allocation11 + $0xc90] sm:$0xff]
    %v2689 = vld [vmem:[#allocation11 + $0xc98] sm:$0xff]
    %v2690 = vld [vmem:[#allocation11 + $0xca0] sm:$0xff]
    %v2691 = vld [vmem:[#allocation11 + $0xca8] sm:$0xff]
    %v2692 = vld [vmem:[#allocation11 + $0xcb0] sm:$0xff]
    %v2693 = vld [vmem:[#allocation11 + $0xcb8] sm:$0xff]
    %v2694 = vld [vmem:[#allocation11 + $0xcc0] sm:$0xff]
    %v2695 = vld [vmem:[#allocation11 + $0xcc8] sm:$0xff]
    %v2696 = vld [vmem:[#allocation11 + $0xcd0] sm:$0xff]
    %v2697 = vld [vmem:[#allocation11 + $0xcd8] sm:$0xff]
    %v2698 = vld [vmem:[#allocation11 + $0xce0] sm:$0xff]
    %v2699 = vld [vmem:[#allocation11 + $0xce8] sm:$0xff]
    %v2700 = vld [vmem:[#allocation11 + $0xcf0] sm:$0xff]
    %v2701 = vld [vmem:[#allocation11 + $0xcf8] sm:$0xff]
    %v2702 = vld [vmem:[#allocation11 + $0xd00] sm:$0xff]
    %v2703 = vld [vmem:[#allocation11 + $0xd08] sm:$0xff]
    %v2704 = vld [vmem:[#allocation11 + $0xd10] sm:$0xff]
    %v2705 = vld [vmem:[#allocation11 + $0xd18] sm:$0xff]
    %v2706 = vld [vmem:[#allocation11 + $0xd20] sm:$0xff]
    %v2707 = vld [vmem:[#allocation11 + $0xd28] sm:$0xff]
    %v2708 = vld [vmem:[#allocation11 + $0xd30] sm:$0xff]
    %v2709 = vld [vmem:[#allocation11 + $0xd38] sm:$0xff]
    %v2710 = vld [vmem:[#allocation11 + $0xd40] sm:$0xff]
    %v2711 = vld [vmem:[#allocation11 + $0xd48] sm:$0xff]
    %v2712 = vld [vmem:[#allocation11 + $0xd50] sm:$0xff]
    %v2713 = vld [vmem:[#allocation11 + $0xd58] sm:$0xff]
    %v2714 = vld [vmem:[#allocation11 + $0xd60] sm:$0xff]
    %v2715 = vld [vmem:[#allocation11 + $0xd68] sm:$0xff]
    %v2716 = vld [vmem:[#allocation11 + $0xd70] sm:$0xff]
    %v2717 = vld [vmem:[#allocation11 + $0xd78] sm:$0xff]
    %v2718 = vld [vmem:[#allocation11 + $0xd80] sm:$0xff]
    %v2719 = vld [vmem:[#allocation11 + $0xd88] sm:$0xff]
    %v2720 = vld [vmem:[#allocation11 + $0xd90] sm:$0xff]
    %v2721 = vld [vmem:[#allocation11 + $0xd98] sm:$0xff]
    %v2722 = vld [vmem:[#allocation11 + $0xda0] sm:$0xff]
    %v2723 = vld [vmem:[#allocation11 + $0xda8] sm:$0xff]
    %v2724 = vld [vmem:[#allocation11 + $0xdb0] sm:$0xff]
    %v2725 = vld [vmem:[#allocation11 + $0xdb8] sm:$0xff]
    %v2726 = vld [vmem:[#allocation11 + $0xdc0] sm:$0xff]
    %v2727 = vld [vmem:[#allocation11 + $0xdc8] sm:$0xff]
    %v2728 = vld [vmem:[#allocation11 + $0xdd0] sm:$0xff]
    %v2729 = vld [vmem:[#allocation11 + $0xdd8] sm:$0xff]
    %v2730 = vld [vmem:[#allocation11 + $0xde0] sm:$0xff]
    %v2731 = vld [vmem:[#allocation11 + $0xde8] sm:$0xff]
    %v2732 = vld [vmem:[#allocation11 + $0xdf0] sm:$0xff]
    %v2733 = vld [vmem:[#allocation11 + $0xdf8] sm:$0xff]
    %v2734 = vld [vmem:[#allocation13] sm:$0xf]
    %v2736 = vlaneseq
    %v2737 = vshrl.u32 %v2736, 7
    %v2738 = vsub.s32 0, %v2737
    %v2739 = vrot.slane %v2734, %v2738
    %v2740 = vlaneseq
    %v2741 = vshrl.u32 %v2740, 7
    %v2742 = vsub.s32 1, %v2741
    %v2743 = vrot.slane %v2734, %v2742
    %v2744 = vlaneseq
    %v2745 = vshrl.u32 %v2744, 7
    %v2746 = vsub.s32 2, %v2745
    %v2747 = vrot.slane %v2734, %v2746
    %v2748 = vlaneseq
    %v2749 = vshrl.u32 %v2748, 7
    %v2750 = vsub.s32 3, %v2749
    %v2751 = vrot.slane %v2734, %v2750
    %2756 = vmatprep.subr.mxu0 %v2287
    %2757 = vmatpush1.msra.mxu0 %v2286
    %2758 = vmatprep.subr.mxu0 %v2291
    %2759 = vmatpush1.msra.mxu0 %v2290
    %2760 = vmatprep.subr.mxu0 %v2295
    %2761 = vmatpush1.msra.mxu0 %v2294
    %2762 = vmatprep.subr.mxu0 %v2299
    %2763 = vmatpush1.msra.mxu0 %v2298
    %2764 = vmatprep.subr.mxu0 %v2303
    %2765 = vmatpush1.msra.mxu0 %v2302
    %2766 = vmatprep.subr.mxu0 %v2307
    %2767 = vmatpush1.msra.mxu0 %v2306
    %2768 = vmatprep.subr.mxu0 %v2311
    %2769 = vmatpush1.msra.mxu0 %v2310
    %2770 = vmatprep.subr.mxu0 %v2315
    %2771 = vmatpush1.msra.mxu0 %v2314
    %2772 = vmatprep.subr.mxu0 %v2319
    %2773 = vmatpush1.msra.mxu0 %v2318
    %2774 = vmatprep.subr.mxu0 %v2323
    %2775 = vmatpush1.msra.mxu0 %v2322
    %2776 = vmatprep.subr.mxu0 %v2327
    %2777 = vmatpush1.msra.mxu0 %v2326
    %2778 = vmatprep.subr.mxu0 %v2331
    %2779 = vmatpush1.msra.mxu0 %v2330
    %2780 = vmatprep.subr.mxu0 %v2335
    %2781 = vmatpush1.msra.mxu0 %v2334
    %2782 = vmatprep.subr.mxu0 %v2339
    %2783 = vmatpush1.msra.mxu0 %v2338
    %2784 = vmatprep.subr.mxu0 %v2343
    %2785 = vmatpush1.msra.mxu0 %v2342
    %2786 = vmatprep.subr.mxu0 %v2347
    %2787 = vmatpush1.msra.mxu0 %v2346
    %2788 = vmatprep.subr.mxu0 %v2351
    %2789 = vmatpush1.msra.mxu0 %v2350
    %2790 = vmatprep.subr.mxu0 %v2355
    %2791 = vmatpush1.msra.mxu0 %v2354
    %2792 = vmatprep.subr.mxu0 %v2359
    %2793 = vmatpush1.msra.mxu0 %v2358
    %2794 = vmatprep.subr.mxu0 %v2363
    %2795 = vmatpush1.msra.mxu0 %v2362
    %2796 = vmatprep.subr.mxu0 %v2367
    %2797 = vmatpush1.msra.mxu0 %v2366
    %2798 = vmatprep.subr.mxu0 %v2371
    %2799 = vmatpush1.msra.mxu0 %v2370
    %2800 = vmatprep.subr.mxu0 %v2375
    %2801 = vmatpush1.msra.mxu0 %v2374
    %2802 = vmatprep.subr.mxu0 %v2379
    %2803 = vmatpush1.msra.mxu0 %v2378
    %2804 = vmatprep.subr.mxu0 %v2383
    %2805 = vmatpush1.msra.mxu0 %v2382
    %2806 = vmatprep.subr.mxu0 %v2387
    %2807 = vmatpush1.msra.mxu0 %v2386
    %2808 = vmatprep.subr.mxu0 %v2391
    %2809 = vmatpush1.msra.mxu0 %v2390
    %2810 = vmatprep.subr.mxu0 %v2395
    %2811 = vmatpush1.msra.mxu0 %v2394
    %2812 = vmatprep.subr.mxu0 %v2399
    %2813 = vmatpush1.msra.mxu0 %v2398
    %2814 = vmatprep.subr.mxu0 %v2403
    %2815 = vmatpush1.msra.mxu0 %v2402
    %2816 = vmatprep.subr.mxu0 %v2407
    %2817 = vmatpush1.msra.mxu0 %v2406
    %2818 = vmatprep.subr.mxu0 %v2411
    %2819 = vmatpush1.msra.mxu0 %v2410
    %2820 = vmatprep.mubr.f32.mxu0 %v2280
    %2821 = vmatmul.mubr.f32.gmra.mrb[0].mxu0 %v2279
    %v2822 = vpop.f32.mrb[0].mxu0
    %v2823 = vadd.f32 %v2739, %v2822
    %v2824 = vpop.f32.mrb[0].mxu0
    %v2825 = vadd.f32 %v2743, %v2824
    %2826 = vdwg.mxu0
    %2827 = vmatprep.subr.mxu0 %v2415
    %2828 = vmatpush1.msra.mxu0 %v2414
    %2829 = vmatprep.subr.mxu0 %v2419
    %2830 = vmatpush1.msra.mxu0 %v2418
    %2831 = vmatprep.subr.mxu0 %v2423
    %2832 = vmatpush1.msra.mxu0 %v2422
    %2833 = vmatprep.subr.mxu0 %v2427
    %2834 = vmatpush1.msra.mxu0 %v2426
    %2835 = vmatprep.subr.mxu0 %v2431
    %2836 = vmatpush1.msra.mxu0 %v2430
    %2837 = vmatprep.subr.mxu0 %v2435
    %2838 = vmatpush1.msra.mxu0 %v2434
    %2839 = vmatprep.subr.mxu0 %v2439
    %2840 = vmatpush1.msra.mxu0 %v2438
    %2841 = vmatprep.subr.mxu0 %v2443
    %2842 = vmatpush1.msra.mxu0 %v2442
    %2843 = vmatprep.subr.mxu0 %v2447
    %2844 = vmatpush1.msra.mxu0 %v2446
    %2845 = vmatprep.subr.mxu0 %v2451
    %2846 = vmatpush1.msra.mxu0 %v2450
    %2847 = vmatprep.subr.mxu0 %v2455
    %2848 = vmatpush1.msra.mxu0 %v2454
    %2849 = vmatprep.subr.mxu0 %v2459
    %2850 = vmatpush1.msra.mxu0 %v2458
    %2851 = vmatprep.subr.mxu0 %v2463
    %2852 = vmatpush1.msra.mxu0 %v2462
    %2853 = vmatprep.subr.mxu0 %v2467
    %2854 = vmatpush1.msra.mxu0 %v2466
    %2855 = vmatprep.subr.mxu0 %v2471
    %2856 = vmatpush1.msra.mxu0 %v2470
    %2857 = vmatprep.subr.mxu0 %v2475
    %2858 = vmatpush1.msra.mxu0 %v2474
    %2859 = vmatprep.subr.mxu0 %v2479
    %2860 = vmatpush1.msra.mxu0 %v2478
    %2861 = vmatprep.subr.mxu0 %v2483
    %2862 = vmatpush1.msra.mxu0 %v2482
    %2863 = vmatprep.subr.mxu0 %v2487
    %2864 = vmatpush1.msra.mxu0 %v2486
    %2865 = vmatprep.subr.mxu0 %v2491
    %2866 = vmatpush1.msra.mxu0 %v2490
    %2867 = vmatprep.subr.mxu0 %v2495
    %2868 = vmatpush1.msra.mxu0 %v2494
    %2869 = vmatprep.subr.mxu0 %v2499
    %2870 = vmatpush1.msra.mxu0 %v2498
    %2871 = vmatprep.subr.mxu0 %v2503
    %2872 = vmatpush1.msra.mxu0 %v2502
    %2873 = vmatprep.subr.mxu0 %v2507
    %2874 = vmatpush1.msra.mxu0 %v2506
    %2875 = vmatprep.subr.mxu0 %v2511
    %2876 = vmatpush1.msra.mxu0 %v2510
    %2877 = vmatprep.subr.mxu0 %v2515
    %2878 = vmatpush1.msra.mxu0 %v2514
    %2879 = vmatprep.subr.mxu0 %v2519
    %2880 = vmatpush1.msra.mxu0 %v2518
    %2881 = vmatprep.subr.mxu0 %v2523
    %2882 = vmatpush1.msra.mxu0 %v2522
    %2883 = vmatprep.subr.mxu0 %v2527
    %2884 = vmatpush1.msra.mxu0 %v2526
    %2885 = vmatprep.subr.mxu0 %v2531
    %2886 = vmatpush1.msra.mxu0 %v2530
    %2887 = vmatprep.subr.mxu0 %v2535
    %2888 = vmatpush1.msra.mxu0 %v2534
    %2889 = vmatprep.subr.mxu0 %v2539
    %2890 = vmatpush1.msra.mxu0 %v2538
    %2891 = vmatprep.mubr.f32.mxu0 %v2282
    %2892 = vmatmul.mubr.f32.gmra.mrb[0].mxu0 %v2281
    %v2893 = vpop.f32.mrb[0].mxu0
    %v2894 = vadd.f32 %v2823, %v2893
    %v2895 = vpop.f32.mrb[0].mxu0
    %v2896 = vadd.f32 %v2825, %v2895
    %2897 = vdwg.mxu0
    %2898 = vmatprep.subr.mxu0 %v2543
    %2899 = vmatpush1.msra.mxu0 %v2542
    %2900 = vmatprep.subr.mxu0 %v2547
    %2901 = vmatpush1.msra.mxu0 %v2546
    %2902 = vmatprep.subr.mxu0 %v2551
    %2903 = vmatpush1.msra.mxu0 %v2550
    %2904 = vmatprep.subr.mxu0 %v2555
    %2905 = vmatpush1.msra.mxu0 %v2554
    %2906 = vmatprep.subr.mxu0 %v2559
    %2907 = vmatpush1.msra.mxu0 %v2558
    %2908 = vmatprep.subr.mxu0 %v2563
    %2909 = vmatpush1.msra.mxu0 %v2562
    %2910 = vmatprep.subr.mxu0 %v2567
    %2911 = vmatpush1.msra.mxu0 %v2566
    %2912 = vmatprep.subr.mxu0 %v2571
    %2913 = vmatpush1.msra.mxu0 %v2570
    %2914 = vmatprep.subr.mxu0 %v2575
    %2915 = vmatpush1.msra.mxu0 %v2574
    %2916 = vmatprep.subr.mxu0 %v2579
    %2917 = vmatpush1.msra.mxu0 %v2578
    %2918 = vmatprep.subr.mxu0 %v2583
    %2919 = vmatpush1.msra.mxu0 %v2582
    %2920 = vmatprep.subr.mxu0 %v2587
    %2921 = vmatpush1.msra.mxu0 %v2586
    %2922 = vmatprep.subr.mxu0 %v2591
    %2923 = vmatpush1.msra.mxu0 %v2590
    %2924 = vmatprep.subr.mxu0 %v2595
    %2925 = vmatpush1.msra.mxu0 %v2594
    %2926 = vmatprep.subr.mxu0 %v2599
    %2927 = vmatpush1.msra.mxu0 %v2598
    %2928 = vmatprep.subr.mxu0 %v2603
    %2929 = vmatpush1.msra.mxu0 %v2602
    %2930 = vmatprep.subr.mxu0 %v2607
    %2931 = vmatpush1.msra.mxu0 %v2606
    %2932 = vmatprep.subr.mxu0 %v2611
    %2933 = vmatpush1.msra.mxu0 %v2610
    %2934 = vmatprep.subr.mxu0 %v2615
    %2935 = vmatpush1.msra.mxu0 %v2614
    %2936 = vmatprep.subr.mxu0 %v2619
    %2937 = vmatpush1.msra.mxu0 %v2618
    %2938 = vmatprep.subr.mxu0 %v2623
    %2939 = vmatpush1.msra.mxu0 %v2622
    %2940 = vmatprep.subr.mxu0 %v2627
    %2941 = vmatpush1.msra.mxu0 %v2626
    %2942 = vmatprep.subr.mxu0 %v2631
    %2943 = vmatpush1.msra.mxu0 %v2630
    %2944 = vmatprep.subr.mxu0 %v2635
    %2945 = vmatpush1.msra.mxu0 %v2634
    %2946 = vmatprep.subr.mxu0 %v2639
    %2947 = vmatpush1.msra.mxu0 %v2638
    %2948 = vmatprep.subr.mxu0 %v2643
    %2949 = vmatpush1.msra.mxu0 %v2642
    %2950 = vmatprep.subr.mxu0 %v2647
    %2951 = vmatpush1.msra.mxu0 %v2646
    %2952 = vmatprep.subr.mxu0 %v2651
    %2953 = vmatpush1.msra.mxu0 %v2650
    %2954 = vmatprep.subr.mxu0 %v2655
    %2955 = vmatpush1.msra.mxu0 %v2654
    %2956 = vmatprep.subr.mxu0 %v2659
    %2957 = vmatpush1.msra.mxu0 %v2658
    %2958 = vmatprep.subr.mxu0 %v2663
    %2959 = vmatpush1.msra.mxu0 %v2662
    %2960 = vmatprep.subr.mxu0 %v2667
    %2961 = vmatpush1.msra.mxu0 %v2666
    %2962 = vmatprep.mubr.f32.mxu0 %v2284
    %2963 = vmatmul.mubr.f32.gmra.mrb[0].mxu0 %v2283
    %v2964 = vpop.f32.mrb[0].mxu0
    %v2965 = vadd.f32 %v2894, %v2964
    %v2966 = vpop.f32.mrb[0].mxu0
    %v2967 = vadd.f32 %v2896, %v2966
    %2968 = vdwg.mxu0
    %2969 = vmatprep.subr.mxu0 %v2671
    %2970 = vmatpush1.msra.mxu0 %v2670
    %2971 = vmatprep.subr.mxu0 %v2675
    %2972 = vmatpush1.msra.mxu0 %v2674
    %2973 = vmatprep.subr.mxu0 %v2679
    %2974 = vmatpush1.msra.mxu0 %v2678
    %2975 = vmatprep.subr.mxu0 %v2683
    %2976 = vmatpush1.msra.mxu0 %v2682
    %2977 = vmatprep.subr.mxu0 %v2687
    %2978 = vmatpush1.msra.mxu0 %v2686
    %2979 = vmatprep.subr.mxu0 %v2691
    %2980 = vmatpush1.msra.mxu0 %v2690
    %2981 = vmatprep.subr.mxu0 %v2695
    %2982 = vmatpush1.msra.mxu0 %v2694
    %2983 = vmatprep.subr.mxu0 %v2699
    %2984 = vmatpush1.msra.mxu0 %v2698
    %2985 = vmatprep.subr.mxu0 %v2703
    %2986 = vmatpush1.msra.mxu0 %v2702
    %2987 = vmatprep.subr.mxu0 %v2707
    %2988 = vmatpush1.msra.mxu0 %v2706
    %2989 = vmatprep.subr.mxu0 %v2711
    %2990 = vmatpush1.msra.mxu0 %v2710
    %2991 = vmatprep.subr.mxu0 %v2715
    %2992 = vmatpush1.msra.mxu0 %v2714
    %2993 = vmatprep.subr.mxu0 %v2719
    %2994 = vmatpush1.msra.mxu0 %v2718
    %2995 = vmatprep.subr.mxu0 %v2723
    %2996 = vmatpush1.msra.mxu0 %v2722
    %2997 = vmatprep.subr.mxu0 %v2727
    %2998 = vmatpush1.msra.mxu0 %v2726
    %2999 = vmatprep.subr.mxu0 %v2731
    %3000 = vmatpush1.msra.mxu0 %v2730
    %3001 = vmatprep.subr.mxu0 0.0
    %3002 = vmatpush1.msra.mxu0 0.0
    %3003 = vmatprep.subr.mxu0 0.0
    %3004 = vmatpush1.msra.mxu0 0.0
    %3005 = vmatprep.subr.mxu0 0.0
    %3006 = vmatpush1.msra.mxu0 0.0
    %3007 = vmatprep.subr.mxu0 0.0
    %3008 = vmatpush1.msra.mxu0 0.0
    %3009 = vmatprep.subr.mxu0 0.0
    %3010 = vmatpush1.msra.mxu0 0.0
    %3011 = vmatprep.subr.mxu0 0.0
    %3012 = vmatpush1.msra.mxu0 0.0
    %3013 = vmatprep.subr.mxu0 0.0
    %3014 = vmatpush1.msra.mxu0 0.0
    %3015 = vmatprep.subr.mxu0 0.0
    %3016 = vmatpush1.msra.mxu0 0.0
    %3017 = vmatprep.subr.mxu0 0.0
    %3018 = vmatpush1.msra.mxu0 0.0
    %3019 = vmatprep.subr.mxu0 0.0
    %3020 = vmatpush1.msra.mxu0 0.0
    %3021 = vmatprep.subr.mxu0 0.0
    %3022 = vmatpush1.msra.mxu0 0.0
    %3023 = vmatprep.subr.mxu0 0.0
    %3024 = vmatpush1.msra.mxu0 0.0
    %3025 = vmatprep.subr.mxu0 0.0
    %3026 = vmatpush1.msra.mxu0 0.0
    %3027 = vmatprep.subr.mxu0 0.0
    %3028 = vmatpush1.msra.mxu0 0.0
    %3029 = vmatprep.subr.mxu0 0.0
    %3030 = vmatpush1.msra.mxu0 0.0
    %3031 = vmatprep.subr.mxu0 0.0
    %3032 = vmatpush1.msra.mxu0 0.0
    %3033 = vmatprep.mubr.f32.mxu0 0.0
    %3034 = vmatmul.mubr.f32.gmra.mrb[0].mxu0 %v2285
    %v3035 = vpop.f32.mrb[0].mxu0
    %v3036 = vadd.f32 %v2965, %v3035
    %v3037 = vpop.f32.mrb[0].mxu0
    %v3038 = vadd.f32 %v2967, %v3037
    %3039 = vdwg.mxu0
    %3040 = vmatprep.subr.mxu0 %v2289
    %3041 = vmatpush1.msra.mxu0 %v2288
    %3042 = vmatprep.subr.mxu0 %v2293
    %3043 = vmatpush1.msra.mxu0 %v2292
    %3044 = vmatprep.subr.mxu0 %v2297
    %3045 = vmatpush1.msra.mxu0 %v2296
    %3046 = vmatprep.subr.mxu0 %v2301
    %3047 = vmatpush1.msra.mxu0 %v2300
    %3048 = vmatprep.subr.mxu0 %v2305
    %3049 = vmatpush1.msra.mxu0 %v2304
    %3050 = vmatprep.subr.mxu0 %v2309
    %3051 = vmatpush1.msra.mxu0 %v2308
    %3052 = vmatprep.subr.mxu0 %v2313
    %3053 = vmatpush1.msra.mxu0 %v2312
    %3054 = vmatprep.subr.mxu0 %v2317
    %3055 = vmatpush1.msra.mxu0 %v2316
    %3056 = vmatprep.subr.mxu0 %v2321
    %3057 = vmatpush1.msra.mxu0 %v2320
    %3058 = vmatprep.subr.mxu0 %v2325
    %3059 = vmatpush1.msra.mxu0 %v2324
    %3060 = vmatprep.subr.mxu0 %v2329
    %3061 = vmatpush1.msra.mxu0 %v2328
    %3062 = vmatprep.subr.mxu0 %v2333
    %3063 = vmatpush1.msra.mxu0 %v2332
    %3064 = vmatprep.subr.mxu0 %v2337
    %3065 = vmatpush1.msra.mxu0 %v2336
    %3066 = vmatprep.subr.mxu0 %v2341
    %3067 = vmatpush1.msra.mxu0 %v2340
    %3068 = vmatprep.subr.mxu0 %v2345
    %3069 = vmatpush1.msra.mxu0 %v2344
    %3070 = vmatprep.subr.mxu0 %v2349
    %3071 = vmatpush1.msra.mxu0 %v2348
    %3072 = vmatprep.subr.mxu0 %v2353
    %3073 = vmatpush1.msra.mxu0 %v2352
    %3074 = vmatprep.subr.mxu0 %v2357
    %3075 = vmatpush1.msra.mxu0 %v2356
    %3076 = vmatprep.subr.mxu0 %v2361
    %3077 = vmatpush1.msra.mxu0 %v2360
    %3078 = vmatprep.subr.mxu0 %v2365
    %3079 = vmatpush1.msra.mxu0 %v2364
    %3080 = vmatprep.subr.mxu0 %v2369
    %3081 = vmatpush1.msra.mxu0 %v2368
    %3082 = vmatprep.subr.mxu0 %v2373
    %3083 = vmatpush1.msra.mxu0 %v2372
    %3084 = vmatprep.subr.mxu0 %v2377
    %3085 = vmatpush1.msra.mxu0 %v2376
    %3086 = vmatprep.subr.mxu0 %v2381
    %3087 = vmatpush1.msra.mxu0 %v2380
    %3088 = vmatprep.subr.mxu0 %v2385
    %3089 = vmatpush1.msra.mxu0 %v2384
    %3090 = vmatprep.subr.mxu0 %v2389
    %3091 = vmatpush1.msra.mxu0 %v2388
    %3092 = vmatprep.subr.mxu0 %v2393
    %3093 = vmatpush1.msra.mxu0 %v2392
    %3094 = vmatprep.subr.mxu0 %v2397
    %3095 = vmatpush1.msra.mxu0 %v2396
    %3096 = vmatprep.subr.mxu0 %v2401
    %3097 = vmatpush1.msra.mxu0 %v2400
    %3098 = vmatprep.subr.mxu0 %v2405
    %3099 = vmatpush1.msra.mxu0 %v2404
    %3100 = vmatprep.subr.mxu0 %v2409
    %3101 = vmatpush1.msra.mxu0 %v2408
    %3102 = vmatprep.subr.mxu0 %v2413
    %3103 = vmatpush1.msra.mxu0 %v2412
    %3104 = vmatprep.mubr.f32.mxu0 %v2280
    %3105 = vmatmul.mubr.f32.gmra.mrb[0].mxu0 %v2279
    %v3106 = vpop.f32.mrb[0].mxu0
    %v3107 = vadd.f32 %v2747, %v3106
    %v3108 = vpop.f32.mrb[0].mxu0
    %v3109 = vadd.f32 %v2751, %v3108
    %3110 = vdwg.mxu0
    %3111 = vmatprep.subr.mxu0 %v2417
    %3112 = vmatpush1.msra.mxu0 %v2416
    %3113 = vmatprep.subr.mxu0 %v2421
    %3114 = vmatpush1.msra.mxu0 %v2420
    %3115 = vmatprep.subr.mxu0 %v2425
    %3116 = vmatpush1.msra.mxu0 %v2424
    %3117 = vmatprep.subr.mxu0 %v2429
    %3118 = vmatpush1.msra.mxu0 %v2428
    %3119 = vmatprep.subr.mxu0 %v2433
    %3120 = vmatpush1.msra.mxu0 %v2432
    %3121 = vmatprep.subr.mxu0 %v2437
    %3122 = vmatpush1.msra.mxu0 %v2436
    %3123 = vmatprep.subr.mxu0 %v2441
    %3124 = vmatpush1.msra.mxu0 %v2440
    %3125 = vmatprep.subr.mxu0 %v2445
    %3126 = vmatpush1.msra.mxu0 %v2444
    %3127 = vmatprep.subr.mxu0 %v2449
    %3128 = vmatpush1.msra.mxu0 %v2448
    %3129 = vmatprep.subr.mxu0 %v2453
    %3130 = vmatpush1.msra.mxu0 %v2452
    %3131 = vmatprep.subr.mxu0 %v2457
    %3132 = vmatpush1.msra.mxu0 %v2456
    %3133 = vmatprep.subr.mxu0 %v2461
    %3134 = vmatpush1.msra.mxu0 %v2460
    %3135 = vmatprep.subr.mxu0 %v2465
    %3136 = vmatpush1.msra.mxu0 %v2464
    %3137 = vmatprep.subr.mxu0 %v2469
    %3138 = vmatpush1.msra.mxu0 %v2468
    %3139 = vmatprep.subr.mxu0 %v2473
    %3140 = vmatpush1.msra.mxu0 %v2472
    %3141 = vmatprep.subr.mxu0 %v2477
    %3142 = vmatpush1.msra.mxu0 %v2476
    %3143 = vmatprep.subr.mxu0 %v2481
    %3144 = vmatpush1.msra.mxu0 %v2480
    %3145 = vmatprep.subr.mxu0 %v2485
    %3146 = vmatpush1.msra.mxu0 %v2484
    %3147 = vmatprep.subr.mxu0 %v2489
    %3148 = vmatpush1.msra.mxu0 %v2488
    %3149 = vmatprep.subr.mxu0 %v2493
    %3150 = vmatpush1.msra.mxu0 %v2492
    %3151 = vmatprep.subr.mxu0 %v2497
    %3152 = vmatpush1.msra.mxu0 %v2496
    %3153 = vmatprep.subr.mxu0 %v2501
    %3154 = vmatpush1.msra.mxu0 %v2500
    %3155 = vmatprep.subr.mxu0 %v2505
    %3156 = vmatpush1.msra.mxu0 %v2504
    %3157 = vmatprep.subr.mxu0 %v2509
    %3158 = vmatpush1.msra.mxu0 %v2508
    %3159 = vmatprep.subr.mxu0 %v2513
    %3160 = vmatpush1.msra.mxu0 %v2512
    %3161 = vmatprep.subr.mxu0 %v2517
    %3162 = vmatpush1.msra.mxu0 %v2516
    %3163 = vmatprep.subr.mxu0 %v2521
    %3164 = vmatpush1.msra.mxu0 %v2520
    %3165 = vmatprep.subr.mxu0 %v2525
    %3166 = vmatpush1.msra.mxu0 %v2524
    %3167 = vmatprep.subr.mxu0 %v2529
    %3168 = vmatpush1.msra.mxu0 %v2528
    %3169 = vmatprep.subr.mxu0 %v2533
    %3170 = vmatpush1.msra.mxu0 %v2532
    %3171 = vmatprep.subr.mxu0 %v2537
    %3172 = vmatpush1.msra.mxu0 %v2536
    %3173 = vmatprep.subr.mxu0 %v2541
    %3174 = vmatpush1.msra.mxu0 %v2540
    %3175 = vmatprep.mubr.f32.mxu0 %v2282
    %3176 = vmatmul.mubr.f32.gmra.mrb[0].mxu0 %v2281
    %v3177 = vpop.f32.mrb[0].mxu0
    %v3178 = vadd.f32 %v3107, %v3177
    %v3179 = vpop.f32.mrb[0].mxu0
    %v3180 = vadd.f32 %v3109, %v3179
    %3181 = vdwg.mxu0
    %3182 = vmatprep.subr.mxu0 %v2545
    %3183 = vmatpush1.msra.mxu0 %v2544
    %3184 = vmatprep.subr.mxu0 %v2549
    %3185 = vmatpush1.msra.mxu0 %v2548
    %3186 = vmatprep.subr.mxu0 %v2553
    %3187 = vmatpush1.msra.mxu0 %v2552
    %3188 = vmatprep.subr.mxu0 %v2557
    %3189 = vmatpush1.msra.mxu0 %v2556
    %3190 = vmatprep.subr.mxu0 %v2561
    %3191 = vmatpush1.msra.mxu0 %v2560
    %3192 = vmatprep.subr.mxu0 %v2565
    %3193 = vmatpush1.msra.mxu0 %v2564
    %3194 = vmatprep.subr.mxu0 %v2569
    %3195 = vmatpush1.msra.mxu0 %v2568
    %3196 = vmatprep.subr.mxu0 %v2573
    %3197 = vmatpush1.msra.mxu0 %v2572
    %3198 = vmatprep.subr.mxu0 %v2577
    %3199 = vmatpush1.msra.mxu0 %v2576
    %3200 = vmatprep.subr.mxu0 %v2581
    %3201 = vmatpush1.msra.mxu0 %v2580
    %3202 = vmatprep.subr.mxu0 %v2585
    %3203 = vmatpush1.msra.mxu0 %v2584
    %3204 = vmatprep.subr.mxu0 %v2589
    %3205 = vmatpush1.msra.mxu0 %v2588
    %3206 = vmatprep.subr.mxu0 %v2593
    %3207 = vmatpush1.msra.mxu0 %v2592
    %3208 = vmatprep.subr.mxu0 %v2597
    %3209 = vmatpush1.msra.mxu0 %v2596
    %3210 = vmatprep.subr.mxu0 %v2601
    %3211 = vmatpush1.msra.mxu0 %v2600
    %3212 = vmatprep.subr.mxu0 %v2605
    %3213 = vmatpush1.msra.mxu0 %v2604
    %3214 = vmatprep.subr.mxu0 %v2609
    %3215 = vmatpush1.msra.mxu0 %v2608
    %3216 = vmatprep.subr.mxu0 %v2613
    %3217 = vmatpush1.msra.mxu0 %v2612
    %3218 = vmatprep.subr.mxu0 %v2617
    %3219 = vmatpush1.msra.mxu0 %v2616
    %3220 = vmatprep.subr.mxu0 %v2621
    %3221 = vmatpush1.msra.mxu0 %v2620
    %3222 = vmatprep.subr.mxu0 %v2625
    %3223 = vmatpush1.msra.mxu0 %v2624
    %3224 = vmatprep.subr.mxu0 %v2629
    %3225 = vmatpush1.msra.mxu0 %v2628
    %3226 = vmatprep.subr.mxu0 %v2633
    %3227 = vmatpush1.msra.mxu0 %v2632
    %3228 = vmatprep.subr.mxu0 %v2637
    %3229 = vmatpush1.msra.mxu0 %v2636
    %3230 = vmatprep.subr.mxu0 %v2641
    %3231 = vmatpush1.msra.mxu0 %v2640
    %3232 = vmatprep.subr.mxu0 %v2645
    %3233 = vmatpush1.msra.mxu0 %v2644
    %3234 = vmatprep.subr.mxu0 %v2649
    %3235 = vmatpush1.msra.mxu0 %v2648
    %3236 = vmatprep.subr.mxu0 %v2653
    %3237 = vmatpush1.msra.mxu0 %v2652
    %3238 = vmatprep.subr.mxu0 %v2657
    %3239 = vmatpush1.msra.mxu0 %v2656
    %3240 = vmatprep.subr.mxu0 %v2661
    %3241 = vmatpush1.msra.mxu0 %v2660
    %3242 = vmatprep.subr.mxu0 %v2665
    %3243 = vmatpush1.msra.mxu0 %v2664
    %3244 = vmatprep.subr.mxu0 %v2669
    %3245 = vmatpush1.msra.mxu0 %v2668
    %3246 = vmatprep.mubr.f32.mxu0 %v2284
    %3247 = vmatmul.mubr.f32.gmra.mrb[0].mxu0 %v2283
    %v3248 = vpop.f32.mrb[0].mxu0
    %v3249 = vadd.f32 %v3178, %v3248
    %v3250 = vpop.f32.mrb[0].mxu0
    %v3251 = vadd.f32 %v3180, %v3250
    %3252 = vdwg.mxu0
    %3253 = vmatprep.subr.mxu0 %v2673
    %3254 = vmatpush1.msra.mxu0 %v2672
    %3255 = vmatprep.subr.mxu0 %v2677
    %3256 = vmatpush1.msra.mxu0 %v2676
    %3257 = vmatprep.subr.mxu0 %v2681
    %3258 = vmatpush1.msra.mxu0 %v2680
    %3259 = vmatprep.subr.mxu0 %v2685
    %3260 = vmatpush1.msra.mxu0 %v2684
    %3261 = vmatprep.subr.mxu0 %v2689
    %3262 = vmatpush1.msra.mxu0 %v2688
    %3263 = vmatprep.subr.mxu0 %v2693
    %3264 = vmatpush1.msra.mxu0 %v2692
    %3265 = vmatprep.subr.mxu0 %v2697
    %3266 = vmatpush1.msra.mxu0 %v2696
    %3267 = vmatprep.subr.mxu0 %v2701
    %3268 = vmatpush1.msra.mxu0 %v2700
    %3269 = vmatprep.subr.mxu0 %v2705
    %3270 = vmatpush1.msra.mxu0 %v2704
    %3271 = vmatprep.subr.mxu0 %v2709
    %3272 = vmatpush1.msra.mxu0 %v2708
    %3273 = vmatprep.subr.mxu0 %v2713
    %3274 = vmatpush1.msra.mxu0 %v2712
    %3275 = vmatprep.subr.mxu0 %v2717
    %3276 = vmatpush1.msra.mxu0 %v2716
    %3277 = vmatprep.subr.mxu0 %v2721
    %3278 = vmatpush1.msra.mxu0 %v2720
    %3279 = vmatprep.subr.mxu0 %v2725
    %3280 = vmatpush1.msra.mxu0 %v2724
    %3281 = vmatprep.subr.mxu0 %v2729
    %3282 = vmatpush1.msra.mxu0 %v2728
    %3283 = vmatprep.subr.mxu0 %v2733
    %3284 = vmatpush1.msra.mxu0 %v2732
    %3285 = vmatprep.subr.mxu0 0.0
    %3286 = vmatpush1.msra.mxu0 0.0
    %3287 = vmatprep.subr.mxu0 0.0
    %3288 = vmatpush1.msra.mxu0 0.0
    %3289 = vmatprep.subr.mxu0 0.0
    %3290 = vmatpush1.msra.mxu0 0.0
    %3291 = vmatprep.subr.mxu0 0.0
    %3292 = vmatpush1.msra.mxu0 0.0
    %3293 = vmatprep.subr.mxu0 0.0
    %3294 = vmatpush1.msra.mxu0 0.0
    %3295 = vmatprep.subr.mxu0 0.0
    %3296 = vmatpush1.msra.mxu0 0.0
    %3297 = vmatprep.subr.mxu0 0.0
    %3298 = vmatpush1.msra.mxu0 0.0
    %3299 = vmatprep.subr.mxu0 0.0
    %3300 = vmatpush1.msra.mxu0 0.0
    %3301 = vmatprep.subr.mxu0 0.0
    %3302 = vmatpush1.msra.mxu0 0.0
    %3303 = vmatprep.subr.mxu0 0.0
    %3304 = vmatpush1.msra.mxu0 0.0
    %3305 = vmatprep.subr.mxu0 0.0
    %3306 = vmatpush1.msra.mxu0 0.0
    %3307 = vmatprep.subr.mxu0 0.0
    %3308 = vmatpush1.msra.mxu0 0.0
    %3309 = vmatprep.subr.mxu0 0.0
    %3310 = vmatpush1.msra.mxu0 0.0
    %3311 = vmatprep.subr.mxu0 0.0
    %3312 = vmatpush1.msra.mxu0 0.0
    %3313 = vmatprep.subr.mxu0 0.0
    %3314 = vmatpush1.msra.mxu0 0.0
    %3315 = vmatprep.subr.mxu0 0.0
    %3316 = vmatpush1.msra.mxu0 0.0
    %3317 = vmatprep.mubr.f32.mxu0 0.0
    %3318 = vmatmul.mubr.f32.gmra.mrb[0].mxu0 %v2285
    %v3319 = vpop.f32.mrb[0].mxu0
    %v3320 = vadd.f32 %v3249, %v3319
    %v3321 = vpop.f32.mrb[0].mxu0
    %v3322 = vadd.f32 %v3251, %v3321
    %3323 = vdwg.mxu0
    %3324 = vst [vmem:[#allocation14] sm:$0xff] %v3036
    %3325 = vst [vmem:[#allocation14 + $0x8] sm:$0xff] %v3038
    %3326 = vst [vmem:[#allocation14 + $0x10] sm:$0xff] %v3320
    %3327 = vst [vmem:[#allocation14 + $0x18] sm:$0xff] %v3322
    // Predicated region
    $region58: #{tpu_custom_call.1} parent=1 // pred_check
      _
    $region59: #{tpu_custom_call.1} parent=1 // pred_check_branch
      %3329 = sbr.rel (0) target = $region61
    $region60: #{tpu_custom_call.1} parent=1 // pred_region
      %s3331 = ssub.s32 512, 512
      %3332 = vsyncadd [#allocation4], %s3331
      %s3334 = sshll.u32 [#allocation14], 4
      %s3335 = int_to_ptr.vmem [resolvable:$true] %s3334
      %3337 = dma.vmem_to_hbm [thread:$0]  %s3335, 512, %s7, [#allocation4]
    $region61: #{tpu_custom_call.1} parent=1 // pred_fallthru
      _
    // Predicated region
    $region62: #{tpu_custom_call.1} parent=1 // pred_check
      _
    $region63: #{tpu_custom_call.1} parent=1 // pred_check_branch
      %3339 = sbr.rel (0) target = $region65
    $region64: #{tpu_custom_call.1} parent=1 // pred_region
      %3340 = dma.done [#allocation4], 512
    $region65: #{tpu_custom_call.1} parent=1 // pred_fallthru
      _
    %3341 = vsyncpa [#allocation3], 1
    %3342 = vsyncpa [#allocation6], 1
    %3343 = vsyncpa [#allocation9], 1
    %3344 = vsyncpa [#allocation12], 1
    %3345 = vsyncpa [#allocation4], 1

</llo_original>
